<compile_context>
chip_gen: v6e
topology: v6e:2x2x1
jax: 0.10.0
libtpu: 0.0.40
codegen_flags: <defaults>
</compile_context>

<pallas_src>
import jax
import jax.numpy as jnp
from jax.experimental import pallas as pl
from jax.experimental.pallas import tpu as pltpu

NUM_CLASSES = 50
PAD_CLASSES = 128          # lane-dense padded output width (>= NUM_CLASSES)
BN_EPS = 1e-5
LRELU_SLOPE = 0.2

D_IN = 32 * 32
DIMS = (1024, 512, 256, 128)           # hidden widths of fc1..fc4

# Packed-vector layout (all offsets are multiples of 128 lanes):
#   [gamma1|gamma2|gamma3|gamma4 | beta1|beta2|beta3|beta4 | b5(padded to 128)]
G_OFF = (0, 1024, 1536, 1792)          # gamma1..4 starts
B_OFF = (1920, 2944, 3456, 3712)       # beta1..4 starts
B5_OFF = 3840
VEC_LEN = 3968                         # = 2*1920 + 128  (31 * 128)


# ---------------------------------------------------------------------------
# Kernel
# ---------------------------------------------------------------------------
def mlp_kernel(x_ref, w1_ref, w2_ref, w3_ref, w4_ref, w5_ref, vec_ref, out_ref):
    g, bsz, _ = x_ref.shape            # static block shape: (G, bsz, D_IN)
    m = g * bsz                        # MXU M dimension for all matmuls

    def bn_lrelu(h, li):
        # h: (m, d) f32 pre-activation. Training-mode BatchNorm1d per group
        # (group == one logical batch) folded into scale/shift, then LeakyReLU.
        d = DIMS[li]
        gamma = vec_ref[:, G_OFF[li]:G_OFF[li] + d]        # (1, d) static slice
        beta = vec_ref[:, B_OFF[li]:B_OFF[li] + d]         # (1, d) static slice
        hg = h.reshape(g, bsz, d)                          # layout-free (bsz % 8 == 0)
        mean = jnp.mean(hg, axis=1, keepdims=True)                         # (g,1,d)
        var = jnp.mean(jnp.square(hg - mean), axis=1, keepdims=True)       # (g,1,d)
        scale = gamma[None, :, :] * jax.lax.rsqrt(var + BN_EPS)            # (g,1,d)
        shift = beta[None, :, :] - mean * scale                            # (g,1,d)
        hn = hg * scale + shift
        hn = jnp.maximum(hn, LRELU_SLOPE * hn)             # LeakyReLU(0.2)
        return hn.reshape(m, d)

    # All matmuls: bf16 operands, f32 MXU accumulation. BN math stays f32.
    h = x_ref[...].reshape(m, D_IN).astype(jnp.bfloat16)
    h = bn_lrelu(jnp.dot(h, w1_ref[...], preferred_element_type=jnp.float32), 0)
    h = bn_lrelu(jnp.dot(h.astype(jnp.bfloat16), w2_ref[...],
                         preferred_element_type=jnp.float32), 1)
    h = bn_lrelu(jnp.dot(h.astype(jnp.bfloat16), w3_ref[...],
                         preferred_element_type=jnp.float32), 2)
    h = bn_lrelu(jnp.dot(h.astype(jnp.bfloat16), w4_ref[...],
                         preferred_element_type=jnp.float32), 3)

    b5 = vec_ref[:, B5_OFF:B5_OFF + PAD_CLASSES]           # (1, 128) static slice
    logits = jnp.dot(h.astype(jnp.bfloat16), w5_ref[...],
                     preferred_element_type=jnp.float32) + b5
    out_ref[...] = logits.reshape(g, bsz, PAD_CLASSES)


# ---------------------------------------------------------------------------
# Parameters
# ---------------------------------------------------------------------------
def init_params(key):
    """Synthetic f32 parameters mirroring the torch module (weights stored
    (in, out) = transpose of torch Linear.weight)."""
    layer_dims = [(D_IN, 1024), (1024, 512), (512, 256), (256, 128),
                  (128, NUM_CLASSES)]
    raw = {}
    keys = jax.random.split(key, 2 * len(layer_dims))
    for i, (din, dout) in enumerate(layer_dims):
        kw, kb = keys[2 * i], keys[2 * i + 1]
        raw[f"w{i+1}"] = jax.random.normal(kw, (din, dout), jnp.float32) / jnp.sqrt(din)
        raw[f"b{i+1}"] = jax.random.uniform(kb, (1, dout), jnp.float32, -0.05, 0.05)
        if i < 4:  # BN params only for fc1..fc4 (torch default init)
            raw[f"gamma{i+1}"] = jnp.ones((1, dout), jnp.float32)
            raw[f"beta{i+1}"] = jnp.zeros((1, dout), jnp.float32)
    return raw


def prepare_kernel_params(raw):
    """Kernel-ready params: bf16 weights, padded W5/b5, one packed f32 vector.
    b1..b4 are intentionally dropped — exactly cancelled by the subsequent
    training-mode BatchNorm."""
    w1 = raw["w1"].astype(jnp.bfloat16)
    w2 = raw["w2"].astype(jnp.bfloat16)
    w3 = raw["w3"].astype(jnp.bfloat16)
    w4 = raw["w4"].astype(jnp.bfloat16)
    # Pad the final layer to a lane-dense width of 128.
    w5 = jnp.zeros((128, PAD_CLASSES), jnp.float32).at[:, :NUM_CLASSES].set(raw["w5"])
    w5 = w5.astype(jnp.bfloat16)
    b5 = jnp.zeros((1, PAD_CLASSES), jnp.float32).at[:, :NUM_CLASSES].set(raw["b5"])

    vec = jnp.concatenate(
        [raw["gamma1"], raw["gamma2"], raw["gamma3"], raw["gamma4"],
         raw["beta1"], raw["beta2"], raw["beta3"], raw["beta4"], b5],
        axis=1).astype(jnp.float32)
    assert vec.shape == (1, VEC_LEN)
    return (w1, w2, w3, w4, w5, vec)


# ---------------------------------------------------------------------------
# Wrappers
# ---------------------------------------------------------------------------
def _choose_groups(n_batches, bsz, target_rows):
    """Pick G (logical batches per grid step) so G*bsz ~ target_rows, G | n.
    If bsz is not a multiple of 8, fall back to G=1 so in-kernel reshapes stay
    layout-free (correctness is unaffected either way)."""
    if bsz % 8 != 0:
        return 1
    g = max(1, min(n_batches, max(1, target_rows // bsz)))
    while n_batches % g != 0:
        g -= 1
    return g


def net_forward_batched(xb, kparams, *, target_rows=256):
    """xb: (N, B, 1024) f32 — N independent logical batches of size B.
    Each logical batch is normalized independently (BN training-mode
    semantics).  G batches are packed per grid step (M = G*B MXU rows);
    weights are DMA'd once and stay VMEM-resident across the grid."""
    n, bsz, din = xb.shape
    assert din == D_IN
    assert bsz >= 2, "training-mode BatchNorm1d needs batch size >= 2"
    g = _choose_groups(n, bsz, target_rows)
    w1, w2, w3, w4, w5, vec = kparams

    out = pl.pallas_call(
        mlp_kernel,
        out_shape=jax.ShapeDtypeStruct((n, bsz, PAD_CLASSES), jnp.float32),
        grid=(n // g,),
        in_specs=[
            pl.BlockSpec((g, bsz, D_IN), lambda i: (i, 0, 0)),
            pl.BlockSpec(w1.shape, lambda i: (0, 0)),   # constant -> resident
            pl.BlockSpec(w2.shape, lambda i: (0, 0)),
            pl.BlockSpec(w3.shape, lambda i: (0, 0)),
            pl.BlockSpec(w4.shape, lambda i: (0, 0)),
            pl.BlockSpec(w5.shape, lambda i: (0, 0)),
            pl.BlockSpec(vec.shape, lambda i: (0, 0)),
        ],
        out_specs=pl.BlockSpec((g, bsz, PAD_CLASSES), lambda i: (i, 0, 0)),
        compiler_params=pltpu.CompilerParams(
            # Steps are independent (no cross-step accumulator, output block
            # changes every step) -> shard across v7x's 2 TensorCores.
            dimension_semantics=("parallel",),
            vmem_limit_bytes=32 * 1024 * 1024,
        ),
    )(xb, w1, w2, w3, w4, w5, vec)
    return out[..., :NUM_CLASSES]


def net_forward(x, kparams):
    """x: (B, 1, 32, 32) NCHW, as in the torch module."""
    bsz = x.shape[0]
    xf = x.reshape(bsz, -1).astype(jnp.float32)          # == x.view(x.size(0), -1)
    return net_forward_batched(xf[None], kparams)[0]


def net_forward_reference(xflat, kparams):
    """Pure-JAX reference with identical math (bf16 weights, f32 accum),
    one logical batch: xflat is (B, 1024)."""
    w1, w2, w3, w4, w5, vec = kparams
    h = xflat.astype(jnp.float32)

    def bn_lrelu(h, li):
        d = DIMS[li]
        gamma = vec[:, G_OFF[li]:G_OFF[li] + d]
        beta = vec[:, B_OFF[li]:B_OFF[li] + d]
        mean = jnp.mean(h, axis=0, keepdims=True)
        var = jnp.mean(jnp.square(h - mean), axis=0, keepdims=True)
        hn = (h - mean) * jax.lax.rsqrt(var + BN_EPS) * gamma + beta
        return jnp.where(hn >= 0, hn, LRELU_SLOPE * hn)

    h = bn_lrelu(jnp.dot(h.astype(jnp.bfloat16), w1,
                         preferred_element_type=jnp.float32), 0)
    h = bn_lrelu(jnp.dot(h.astype(jnp.bfloat16), w2,
                         preferred_element_type=jnp.float32), 1)
    h = bn_lrelu(jnp.dot(h.astype(jnp.bfloat16), w3,
                         preferred_element_type=jnp.float32), 2)
    h = bn_lrelu(jnp.dot(h.astype(jnp.bfloat16), w4,
                         preferred_element_type=jnp.float32), 3)
    out = jnp.dot(h.astype(jnp.bfloat16), w5,
                  preferred_element_type=jnp.float32) + vec[:, B5_OFF:B5_OFF + PAD_CLASSES]
    return out[:, :NUM_CLASSES]


if __name__ == "__main__":
    key = jax.random.PRNGKey(0)
    k_x, k_xb, k_p = jax.random.split(key, 3)

    raw_params = init_params(k_p)
    kparams = prepare_kernel_params(raw_params)

    # --- 1) single logical batch, NCHW input as in the torch module ---------
    batch = 8
    x = jax.random.normal(k_x, (batch, 1, 32, 32), jnp.float32)
    out = jax.block_until_ready(net_forward(x, kparams))
    assert out.shape == (batch, NUM_CLASSES)
    assert out.dtype == jnp.float32
    assert bool(jnp.all(jnp.isfinite(out)))
    ref = jax.block_until_ready(net_forward_reference(x.reshape(batch, -1), kparams))
    assert bool(jnp.allclose(out, ref, atol=1e-2, rtol=1e-2))

    # --- 2) many logical batches, several groups packed per grid step -------
    n_batches, bsz = 6, 8
    xb = jax.random.normal(k_xb, (n_batches, bsz, D_IN), jnp.float32)
    # target_rows=16 -> G=2 groups/step, 3 grid steps (exercises grouping path;
    # production default target_rows=256 fills the MXU on v6e/v7x).
    outb = jax.block_until_ready(net_forward_batched(xb, kparams, target_rows=16))
    assert outb.shape == (n_batches, bsz, NUM_CLASSES)
    assert bool(jnp.all(jnp.isfinite(outb)))
    refb = jnp.stack([net_forward_reference(xb[i], kparams)
                      for i in range(n_batches)])
    refb = jax.block_until_ready(refb)
    assert bool(jnp.allclose(outb, refb, atol=1e-2, rtol=1e-2))

    print("KERNEL_OK")
</pallas_src>

<mosaic_0001>
module attributes {stable_mosaic.version = 11 : i64} {
  func.func @mlp_kernel(%arg0: i32, %arg1: memref<1x8x1024xf32, #tpu.memory_space<vmem>>, %arg2: memref<1024x1024xbf16, #tpu.memory_space<vmem>>, %arg3: memref<1024x512xbf16, #tpu.memory_space<vmem>>, %arg4: memref<512x256xbf16, #tpu.memory_space<vmem>>, %arg5: memref<256x128xbf16, #tpu.memory_space<vmem>>, %arg6: memref<128x128xbf16, #tpu.memory_space<vmem>>, %arg7: memref<1x3968xf32, #tpu.memory_space<vmem>>, %arg8: memref<1x8x128xf32, #tpu.memory_space<vmem>>) attributes {dimension_semantics = [#tpu.dimension_semantics<parallel>], iteration_bounds = array<i64: 1>, scalar_prefetch = 0 : i64, scratch_operands = 0 : i64, tpu.core_type = #tpu.core_type<tc>, window_params = [{transform_indices = @transform_0, window_bounds = array<i64: 1, 8, 1024>}, {pipeline_mode = #tpu.pipeline_mode<synchronous>, transform_indices = @transform_1, window_bounds = array<i64: 1024, 1024>}, {pipeline_mode = #tpu.pipeline_mode<synchronous>, transform_indices = @transform_2, window_bounds = array<i64: 1024, 512>}, {pipeline_mode = #tpu.pipeline_mode<synchronous>, transform_indices = @transform_3, window_bounds = array<i64: 512, 256>}, {pipeline_mode = #tpu.pipeline_mode<synchronous>, transform_indices = @transform_4, window_bounds = array<i64: 256, 128>}, {pipeline_mode = #tpu.pipeline_mode<synchronous>, transform_indices = @transform_5, window_bounds = array<i64: 128, 128>}, {pipeline_mode = #tpu.pipeline_mode<synchronous>, transform_indices = @transform_6, window_bounds = array<i64: 1, 3968>}, {transform_indices = @transform_7, window_bounds = array<i64: 1, 8, 128>}]} {
    %c0 = arith.constant 0 : index
    %c0_0 = arith.constant 0 : index
    %c0_1 = arith.constant 0 : index
    %0 = vector.load %arg1[%c0, %c0_0, %c0_1] : memref<1x8x1024xf32, #tpu.memory_space<vmem>>, vector<1x8x1024xf32>
    %1 = vector.shape_cast %0 : vector<1x8x1024xf32> to vector<8x1024xf32>
    %2 = arith.truncf %1 : vector<8x1024xf32> to vector<8x1024xbf16>
    %c0_2 = arith.constant 0 : index
    %c0_3 = arith.constant 0 : index
    %3 = vector.load %arg2[%c0_2, %c0_3] : memref<1024x1024xbf16, #tpu.memory_space<vmem>>, vector<1024x1024xbf16>
    %cst = arith.constant dense<0.000000e+00> : vector<8x1024xf32>
    %4 = tpu.matmul %2, %3, %cst {dimension_numbers = #tpu.dot_dimension_numbers<[1], [0], [0], [1], [0, 0, 1, 1], [], []>} : vector<8x1024xbf16>, vector<1024x1024xbf16>, vector<8x1024xf32> -> vector<8x1024xf32>
    %c0_4 = arith.constant 0 : index
    %c0_5 = arith.constant 0 : index
    %5 = vector.load %arg7[%c0_4, %c0_5] : memref<1x3968xf32, #tpu.memory_space<vmem>>, vector<1x1024xf32>
    %c0_6 = arith.constant 0 : index
    %c1920 = arith.constant 1920 : index
    %6 = vector.load %arg7[%c0_6, %c1920] : memref<1x3968xf32, #tpu.memory_space<vmem>>, vector<1x1024xf32>
    %7 = vector.shape_cast %4 : vector<8x1024xf32> to vector<1x8x1024xf32>
    %cst_7 = arith.constant dense<0.000000e+00> : vector<1x1024xf32>
    %8 = vector.multi_reduction <add>, %7, %cst_7 [1] : vector<1x8x1024xf32> to vector<1x1024xf32>
    %9 = vector.shape_cast %8 : vector<1x1024xf32> to vector<1x1x1024xf32>
    %cst_8 = arith.constant 8.000000e+00 : f32
    %10 = vector.broadcast %cst_8 : f32 to vector<1x1x1024xf32>
    %11 = arith.divf %9, %10 : vector<1x1x1024xf32>
    %12 = vector.broadcast %11 : vector<1x1x1024xf32> to vector<1x8x1024xf32>
    %13 = arith.subf %7, %12 : vector<1x8x1024xf32>
    %14 = arith.mulf %13, %13 : vector<1x8x1024xf32>
    %cst_9 = arith.constant dense<0.000000e+00> : vector<1x1024xf32>
    %15 = vector.multi_reduction <add>, %14, %cst_9 [1] : vector<1x8x1024xf32> to vector<1x1024xf32>
    %16 = vector.shape_cast %15 : vector<1x1024xf32> to vector<1x1x1024xf32>
    %cst_10 = arith.constant 8.000000e+00 : f32
    %17 = vector.broadcast %cst_10 : f32 to vector<1x1x1024xf32>
    %18 = arith.divf %16, %17 : vector<1x1x1024xf32>
    %19 = vector.shape_cast %5 : vector<1x1024xf32> to vector<1x1x1024xf32>
    %cst_11 = arith.constant 9.99999974E-6 : f32
    %20 = vector.broadcast %cst_11 : f32 to vector<1x1x1024xf32>
    %21 = arith.addf %18, %20 : vector<1x1x1024xf32>
    %22 = math.rsqrt %21 : vector<1x1x1024xf32>
    %23 = arith.mulf %19, %22 : vector<1x1x1024xf32>
    %24 = vector.shape_cast %6 : vector<1x1024xf32> to vector<1x1x1024xf32>
    %25 = arith.mulf %11, %23 : vector<1x1x1024xf32>
    %26 = arith.subf %24, %25 : vector<1x1x1024xf32>
    %27 = vector.broadcast %23 : vector<1x1x1024xf32> to vector<1x8x1024xf32>
    %28 = arith.mulf %7, %27 : vector<1x8x1024xf32>
    %29 = vector.broadcast %26 : vector<1x1x1024xf32> to vector<1x8x1024xf32>
    %30 = arith.addf %28, %29 : vector<1x8x1024xf32>
    %cst_12 = arith.constant 2.000000e-01 : f32
    %31 = vector.broadcast %cst_12 : f32 to vector<1x8x1024xf32>
    %32 = arith.mulf %31, %30 : vector<1x8x1024xf32>
    %33 = arith.maximumf %30, %32 : vector<1x8x1024xf32>
    %34 = vector.shape_cast %33 : vector<1x8x1024xf32> to vector<8x1024xf32>
    %35 = arith.truncf %34 : vector<8x1024xf32> to vector<8x1024xbf16>
    %c0_13 = arith.constant 0 : index
    %c0_14 = arith.constant 0 : index
    %36 = vector.load %arg3[%c0_13, %c0_14] : memref<1024x512xbf16, #tpu.memory_space<vmem>>, vector<1024x512xbf16>
    %cst_15 = arith.constant dense<0.000000e+00> : vector<8x512xf32>
    %37 = tpu.matmul %35, %36, %cst_15 {dimension_numbers = #tpu.dot_dimension_numbers<[1], [0], [0], [1], [0, 0, 1, 1], [], []>} : vector<8x1024xbf16>, vector<1024x512xbf16>, vector<8x512xf32> -> vector<8x512xf32>
    %c0_16 = arith.constant 0 : index
    %c1024 = arith.constant 1024 : index
    %38 = vector.load %arg7[%c0_16, %c1024] : memref<1x3968xf32, #tpu.memory_space<vmem>>, vector<1x512xf32>
    %c0_17 = arith.constant 0 : index
    %c2944 = arith.constant 2944 : index
    %39 = vector.load %arg7[%c0_17, %c2944] : memref<1x3968xf32, #tpu.memory_space<vmem>>, vector<1x512xf32>
    %40 = vector.shape_cast %37 : vector<8x512xf32> to vector<1x8x512xf32>
    %cst_18 = arith.constant dense<0.000000e+00> : vector<1x512xf32>
    %41 = vector.multi_reduction <add>, %40, %cst_18 [1] : vector<1x8x512xf32> to vector<1x512xf32>
    %42 = vector.shape_cast %41 : vector<1x512xf32> to vector<1x1x512xf32>
    %cst_19 = arith.constant 8.000000e+00 : f32
    %43 = vector.broadcast %cst_19 : f32 to vector<1x1x512xf32>
    %44 = arith.divf %42, %43 : vector<1x1x512xf32>
    %45 = vector.broadcast %44 : vector<1x1x512xf32> to vector<1x8x512xf32>
    %46 = arith.subf %40, %45 : vector<1x8x512xf32>
    %47 = arith.mulf %46, %46 : vector<1x8x512xf32>
    %cst_20 = arith.constant dense<0.000000e+00> : vector<1x512xf32>
    %48 = vector.multi_reduction <add>, %47, %cst_20 [1] : vector<1x8x512xf32> to vector<1x512xf32>
    %49 = vector.shape_cast %48 : vector<1x512xf32> to vector<1x1x512xf32>
    %cst_21 = arith.constant 8.000000e+00 : f32
    %50 = vector.broadcast %cst_21 : f32 to vector<1x1x512xf32>
    %51 = arith.divf %49, %50 : vector<1x1x512xf32>
    %52 = vector.shape_cast %38 : vector<1x512xf32> to vector<1x1x512xf32>
    %cst_22 = arith.constant 9.99999974E-6 : f32
    %53 = vector.broadcast %cst_22 : f32 to vector<1x1x512xf32>
    %54 = arith.addf %51, %53 : vector<1x1x512xf32>
    %55 = math.rsqrt %54 : vector<1x1x512xf32>
    %56 = arith.mulf %52, %55 : vector<1x1x512xf32>
    %57 = vector.shape_cast %39 : vector<1x512xf32> to vector<1x1x512xf32>
    %58 = arith.mulf %44, %56 : vector<1x1x512xf32>
    %59 = arith.subf %57, %58 : vector<1x1x512xf32>
    %60 = vector.broadcast %56 : vector<1x1x512xf32> to vector<1x8x512xf32>
    %61 = arith.mulf %40, %60 : vector<1x8x512xf32>
    %62 = vector.broadcast %59 : vector<1x1x512xf32> to vector<1x8x512xf32>
    %63 = arith.addf %61, %62 : vector<1x8x512xf32>
    %cst_23 = arith.constant 2.000000e-01 : f32
    %64 = vector.broadcast %cst_23 : f32 to vector<1x8x512xf32>
    %65 = arith.mulf %64, %63 : vector<1x8x512xf32>
    %66 = arith.maximumf %63, %65 : vector<1x8x512xf32>
    %67 = vector.shape_cast %66 : vector<1x8x512xf32> to vector<8x512xf32>
    %68 = arith.truncf %67 : vector<8x512xf32> to vector<8x512xbf16>
    %c0_24 = arith.constant 0 : index
    %c0_25 = arith.constant 0 : index
    %69 = vector.load %arg4[%c0_24, %c0_25] : memref<512x256xbf16, #tpu.memory_space<vmem>>, vector<512x256xbf16>
    %cst_26 = arith.constant dense<0.000000e+00> : vector<8x256xf32>
    %70 = tpu.matmul %68, %69, %cst_26 {dimension_numbers = #tpu.dot_dimension_numbers<[1], [0], [0], [1], [0, 0, 1, 1], [], []>} : vector<8x512xbf16>, vector<512x256xbf16>, vector<8x256xf32> -> vector<8x256xf32>
    %c0_27 = arith.constant 0 : index
    %c1536 = arith.constant 1536 : index
    %71 = vector.load %arg7[%c0_27, %c1536] : memref<1x3968xf32, #tpu.memory_space<vmem>>, vector<1x256xf32>
    %c0_28 = arith.constant 0 : index
    %c3456 = arith.constant 3456 : index
    %72 = vector.load %arg7[%c0_28, %c3456] : memref<1x3968xf32, #tpu.memory_space<vmem>>, vector<1x256xf32>
    %73 = vector.shape_cast %70 : vector<8x256xf32> to vector<1x8x256xf32>
    %cst_29 = arith.constant dense<0.000000e+00> : vector<1x256xf32>
    %74 = vector.multi_reduction <add>, %73, %cst_29 [1] : vector<1x8x256xf32> to vector<1x256xf32>
    %75 = vector.shape_cast %74 : vector<1x256xf32> to vector<1x1x256xf32>
    %cst_30 = arith.constant 8.000000e+00 : f32
    %76 = vector.broadcast %cst_30 : f32 to vector<1x1x256xf32>
    %77 = arith.divf %75, %76 : vector<1x1x256xf32>
    %78 = vector.broadcast %77 : vector<1x1x256xf32> to vector<1x8x256xf32>
    %79 = arith.subf %73, %78 : vector<1x8x256xf32>
    %80 = arith.mulf %79, %79 : vector<1x8x256xf32>
    %cst_31 = arith.constant dense<0.000000e+00> : vector<1x256xf32>
    %81 = vector.multi_reduction <add>, %80, %cst_31 [1] : vector<1x8x256xf32> to vector<1x256xf32>
    %82 = vector.shape_cast %81 : vector<1x256xf32> to vector<1x1x256xf32>
    %cst_32 = arith.constant 8.000000e+00 : f32
    %83 = vector.broadcast %cst_32 : f32 to vector<1x1x256xf32>
    %84 = arith.divf %82, %83 : vector<1x1x256xf32>
    %85 = vector.shape_cast %71 : vector<1x256xf32> to vector<1x1x256xf32>
    %cst_33 = arith.constant 9.99999974E-6 : f32
    %86 = vector.broadcast %cst_33 : f32 to vector<1x1x256xf32>
    %87 = arith.addf %84, %86 : vector<1x1x256xf32>
    %88 = math.rsqrt %87 : vector<1x1x256xf32>
    %89 = arith.mulf %85, %88 : vector<1x1x256xf32>
    %90 = vector.shape_cast %72 : vector<1x256xf32> to vector<1x1x256xf32>
    %91 = arith.mulf %77, %89 : vector<1x1x256xf32>
    %92 = arith.subf %90, %91 : vector<1x1x256xf32>
    %93 = vector.broadcast %89 : vector<1x1x256xf32> to vector<1x8x256xf32>
    %94 = arith.mulf %73, %93 : vector<1x8x256xf32>
    %95 = vector.broadcast %92 : vector<1x1x256xf32> to vector<1x8x256xf32>
    %96 = arith.addf %94, %95 : vector<1x8x256xf32>
    %cst_34 = arith.constant 2.000000e-01 : f32
    %97 = vector.broadcast %cst_34 : f32 to vector<1x8x256xf32>
    %98 = arith.mulf %97, %96 : vector<1x8x256xf32>
    %99 = arith.maximumf %96, %98 : vector<1x8x256xf32>
    %100 = vector.shape_cast %99 : vector<1x8x256xf32> to vector<8x256xf32>
    %101 = arith.truncf %100 : vector<8x256xf32> to vector<8x256xbf16>
    %c0_35 = arith.constant 0 : index
    %c0_36 = arith.constant 0 : index
    %102 = vector.load %arg5[%c0_35, %c0_36] : memref<256x128xbf16, #tpu.memory_space<vmem>>, vector<256x128xbf16>
    %cst_37 = arith.constant dense<0.000000e+00> : vector<8x128xf32>
    %103 = tpu.matmul %101, %102, %cst_37 {dimension_numbers = #tpu.dot_dimension_numbers<[1], [0], [0], [1], [0, 0, 1, 1], [], []>} : vector<8x256xbf16>, vector<256x128xbf16>, vector<8x128xf32> -> vector<8x128xf32>
    %c0_38 = arith.constant 0 : index
    %c1792 = arith.constant 1792 : index
    %104 = vector.load %arg7[%c0_38, %c1792] : memref<1x3968xf32, #tpu.memory_space<vmem>>, vector<1x128xf32>
    %c0_39 = arith.constant 0 : index
    %c3712 = arith.constant 3712 : index
    %105 = vector.load %arg7[%c0_39, %c3712] : memref<1x3968xf32, #tpu.memory_space<vmem>>, vector<1x128xf32>
    %106 = vector.shape_cast %103 : vector<8x128xf32> to vector<1x8x128xf32>
    %cst_40 = arith.constant dense<0.000000e+00> : vector<1x128xf32>
    %107 = vector.multi_reduction <add>, %106, %cst_40 [1] : vector<1x8x128xf32> to vector<1x128xf32>
    %108 = vector.shape_cast %107 : vector<1x128xf32> to vector<1x1x128xf32>
    %cst_41 = arith.constant 8.000000e+00 : f32
    %109 = vector.broadcast %cst_41 : f32 to vector<1x1x128xf32>
    %110 = arith.divf %108, %109 : vector<1x1x128xf32>
    %111 = vector.broadcast %110 : vector<1x1x128xf32> to vector<1x8x128xf32>
    %112 = arith.subf %106, %111 : vector<1x8x128xf32>
    %113 = arith.mulf %112, %112 : vector<1x8x128xf32>
    %cst_42 = arith.constant dense<0.000000e+00> : vector<1x128xf32>
    %114 = vector.multi_reduction <add>, %113, %cst_42 [1] : vector<1x8x128xf32> to vector<1x128xf32>
    %115 = vector.shape_cast %114 : vector<1x128xf32> to vector<1x1x128xf32>
    %cst_43 = arith.constant 8.000000e+00 : f32
    %116 = vector.broadcast %cst_43 : f32 to vector<1x1x128xf32>
    %117 = arith.divf %115, %116 : vector<1x1x128xf32>
    %118 = vector.shape_cast %104 : vector<1x128xf32> to vector<1x1x128xf32>
    %cst_44 = arith.constant 9.99999974E-6 : f32
    %119 = vector.broadcast %cst_44 : f32 to vector<1x1x128xf32>
    %120 = arith.addf %117, %119 : vector<1x1x128xf32>
    %121 = math.rsqrt %120 : vector<1x1x128xf32>
    %122 = arith.mulf %118, %121 : vector<1x1x128xf32>
    %123 = vector.shape_cast %105 : vector<1x128xf32> to vector<1x1x128xf32>
    %124 = arith.mulf %110, %122 : vector<1x1x128xf32>
    %125 = arith.subf %123, %124 : vector<1x1x128xf32>
    %126 = vector.broadcast %122 : vector<1x1x128xf32> to vector<1x8x128xf32>
    %127 = arith.mulf %106, %126 : vector<1x8x128xf32>
    %128 = vector.broadcast %125 : vector<1x1x128xf32> to vector<1x8x128xf32>
    %129 = arith.addf %127, %128 : vector<1x8x128xf32>
    %cst_45 = arith.constant 2.000000e-01 : f32
    %130 = vector.broadcast %cst_45 : f32 to vector<1x8x128xf32>
    %131 = arith.mulf %130, %129 : vector<1x8x128xf32>
    %132 = arith.maximumf %129, %131 : vector<1x8x128xf32>
    %133 = vector.shape_cast %132 : vector<1x8x128xf32> to vector<8x128xf32>
    %c0_46 = arith.constant 0 : index
    %c3840 = arith.constant 3840 : index
    %134 = vector.load %arg7[%c0_46, %c3840] : memref<1x3968xf32, #tpu.memory_space<vmem>>, vector<1x128xf32>
    %135 = arith.truncf %133 : vector<8x128xf32> to vector<8x128xbf16>
    %c0_47 = arith.constant 0 : index
    %c0_48 = arith.constant 0 : index
    %136 = vector.load %arg6[%c0_47, %c0_48] : memref<128x128xbf16, #tpu.memory_space<vmem>>, vector<128x128xbf16>
    %cst_49 = arith.constant dense<0.000000e+00> : vector<8x128xf32>
    %137 = tpu.matmul %135, %136, %cst_49 {dimension_numbers = #tpu.dot_dimension_numbers<[1], [0], [0], [1], [0, 0, 1, 1], [], []>} : vector<8x128xbf16>, vector<128x128xbf16>, vector<8x128xf32> -> vector<8x128xf32>
    %138 = vector.broadcast %134 : vector<1x128xf32> to vector<8x128xf32>
    %139 = arith.addf %137, %138 : vector<8x128xf32>
    %140 = vector.shape_cast %139 : vector<8x128xf32> to vector<1x8x128xf32>
    %c0_50 = arith.constant 0 : index
    %c0_51 = arith.constant 0 : index
    %c0_52 = arith.constant 0 : index
    %141 = vector.load %arg8[%c0_50, %c0_51, %c0_52] : memref<1x8x128xf32, #tpu.memory_space<vmem>>, vector<1x8x128xf32>
    tpu.vector_store %arg8[%c0_50, %c0_51, %c0_52], %140 {strides = array<i32>} : memref<1x8x128xf32, #tpu.memory_space<vmem>>, vector<1x8x128xf32>,
    return
  }
  func.func @transform_0(%arg0: i32) -> (i32, i32, i32) {
    %c0_i32 = arith.constant 0 : i32
    %c0_i32_0 = arith.constant 0 : i32
    %c0_i32_1 = arith.constant 0 : i32
    return %arg0, %c0_i32, %c0_i32_0 : i32, i32, i32
  }
  func.func @transform_1(%arg0: i32) -> (i32, i32) {
    %c0_i32 = arith.constant 0 : i32
    %c0_i32_0 = arith.constant 0 : i32
    %c0_i32_1 = arith.constant 0 : i32
    return %c0_i32, %c0_i32_0 : i32, i32
  }
  func.func @transform_2(%arg0: i32) -> (i32, i32) {
    %c0_i32 = arith.constant 0 : i32
    %c0_i32_0 = arith.constant 0 : i32
    %c0_i32_1 = arith.constant 0 : i32
    return %c0_i32, %c0_i32_0 : i32, i32
  }
  func.func @transform_3(%arg0: i32) -> (i32, i32) {
    %c0_i32 = arith.constant 0 : i32
    %c0_i32_0 = arith.constant 0 : i32
    %c0_i32_1 = arith.constant 0 : i32
    return %c0_i32, %c0_i32_0 : i32, i32
  }
  func.func @transform_4(%arg0: i32) -> (i32, i32) {
    %c0_i32 = arith.constant 0 : i32
    %c0_i32_0 = arith.constant 0 : i32
    %c0_i32_1 = arith.constant 0 : i32
    return %c0_i32, %c0_i32_0 : i32, i32
  }
  func.func @transform_5(%arg0: i32) -> (i32, i32) {
    %c0_i32 = arith.constant 0 : i32
    %c0_i32_0 = arith.constant 0 : i32
    %c0_i32_1 = arith.constant 0 : i32
    return %c0_i32, %c0_i32_0 : i32, i32
  }
  func.func @transform_6(%arg0: i32) -> (i32, i32) {
    %c0_i32 = arith.constant 0 : i32
    %c0_i32_0 = arith.constant 0 : i32
    %c0_i32_1 = arith.constant 0 : i32
    return %c0_i32, %c0_i32_0 : i32, i32
  }
  func.func @transform_7(%arg0: i32) -> (i32, i32, i32) {
    %c0_i32 = arith.constant 0 : i32
    %c0_i32_0 = arith.constant 0 : i32
    %c0_i32_1 = arith.constant 0 : i32
    return %arg0, %c0_i32, %c0_i32_0 : i32, i32, i32
  }
}

</mosaic_0001>

<llo_original>
// kernel: tpu_custom_call.1
$region0: #{tpu_custom_call.1}
  #allocation0 [shape = 'u32[]', space=smem, size = 0x4, offset = 0x4, fixed_abs, tag = 'smem constant byte address 0x4 - core index']
  #allocation1 [shape = 'u32[144,128]{1,0:T(1,128)}', space=vmem, size = 0x12000, scoped, tag = 'internal scratch']
  %s0 = inlined_call_operand.hbm [shape: f32[1,8,1024], index: 0, kind: input, shape index: {}]
  %s1 = inlined_call_operand.hbm [shape: bf16[1024,1024], index: 1, kind: input, shape index: {}]
  %s2 = inlined_call_operand.hbm [shape: bf16[1024,512], index: 2, kind: input, shape index: {}]
  %s3 = inlined_call_operand.hbm [shape: bf16[512,256], index: 3, kind: input, shape index: {}]
  %s4 = inlined_call_operand.hbm [shape: bf16[256,128], index: 4, kind: input, shape index: {}]
  %s5 = inlined_call_operand.hbm [shape: bf16[128,128], index: 5, kind: input, shape index: {}]
  %s6 = inlined_call_operand.hbm [shape: f32[1,3968], index: 6, kind: input, shape index: {}]
  %s7 = inlined_call_operand.hbm [shape: f32[1,8,128], index: 7, kind: output, shape index: {}]
  %s8 = sld [smem:[#allocation0]]
  $region66: #{tpu_custom_call.1} parent=0
    _
  %s10 = ssub.s32 1, %s8
  %s11 = scalar_select 0, %s10, %s8
  $region1: #{tpu_custom_call.1} parent=0
    #allocation2 [shape = 'u8[32768]{0}', space=vmem, size = 0x8000, scoped, tag = 'input window, operand 0, single buffered']
    #allocation3 [shape = 's32[1]{0}', space=sflag, size = 0x4, scoped, tag = 'scoped memory for tpu_custom_call.1']
    #allocation4 [shape = 's32[1]{0}', space=sflag, size = 0x4, scoped, tag = 'scoped memory for tpu_custom_call.1']
    #allocation5 [shape = 'u8[2097152]{0}', space=vmem, size = 0x200000, scoped, tag = 'input window, operand 1, single buffered']
    #allocation6 [shape = 's32[1]{0}', space=sflag, size = 0x4, scoped, tag = 'scoped memory for tpu_custom_call.1']
    #allocation7 [shape = 'u8[1048576]{0}', space=vmem, size = 0x100000, scoped, tag = 'input window, operand 2, single buffered']
    #allocation8 [shape = 'u8[262144]{0}', space=vmem, size = 0x40000, scoped, tag = 'input window, operand 3, single buffered']
    #allocation9 [shape = 's32[1]{0}', space=sflag, size = 0x4, scoped, tag = 'scoped memory for tpu_custom_call.1']
    #allocation10 [shape = 'u8[65536]{0}', space=vmem, size = 0x10000, scoped, tag = 'input window, operand 4, single buffered']
    #allocation11 [shape = 'u8[32768]{0}', space=vmem, size = 0x8000, scoped, tag = 'input window, operand 5, single buffered']
    #allocation12 [shape = 's32[1]{0}', space=sflag, size = 0x4, scoped, tag = 'scoped memory for tpu_custom_call.1']
    #allocation13 [shape = 'u8[15872]{0}', space=vmem, size = 0x4000, scoped, tag = 'input window, operand 6, single buffered']
    #allocation14 [shape = 'u8[4096]{0}', space=vmem, size = 0x1000, scoped, tag = 'output window, operand 0, single buffered']
    %12 = vsyncpa [#allocation3], 0
    %13 = vsyncpa [#allocation6], 0
    %14 = vsyncpa [#allocation9], 0
    %15 = vsyncpa [#allocation12], 0
    %16 = vsyncpa [#allocation4], 0
    // Predicated region
    $region2: #{tpu_custom_call.1} parent=1 // pred_check
      _
    $region3: #{tpu_custom_call.1} parent=1 // pred_check_branch
      %18 = sbr.rel (0) target = $region5
    $region4: #{tpu_custom_call.1} parent=1 // pred_region
      %s20 = ssub.s32 1024, 1024
      %21 = vsyncadd [#allocation3], %s20
      %s23 = sshll.u32 [#allocation2], 4
      %s24 = int_to_ptr.vmem [resolvable:$true] %s23
      %26 = dma.hbm_to_vmem [thread:$0]  %s0, 1024, %s24, [#allocation3]
    $region5: #{tpu_custom_call.1} parent=1 // pred_fallthru
      _
    // Predicated region
    $region6: #{tpu_custom_call.1} parent=1 // pred_check
      _
    $region7: #{tpu_custom_call.1} parent=1 // pred_check_branch
      %28 = sbr.rel (0) target = $region9
    $region8: #{tpu_custom_call.1} parent=1 // pred_region
      %s30 = ssub.s32 65536, 65536
      %31 = vsyncadd [#allocation6], %s30
      %s32 = sshll.u32 [#allocation5], 4
      %s33 = int_to_ptr.vmem [resolvable:$true] %s32
      %38 = dma.hbm_to_vmem [thread:$0]  %s1, 65536, %s33, [#allocation6], 512, 512, 32
    $region9: #{tpu_custom_call.1} parent=1 // pred_fallthru
      _
    // Predicated region
    $region10: #{tpu_custom_call.1} parent=1 // pred_check
      _
    $region11: #{tpu_custom_call.1} parent=1 // pred_check_branch
      %40 = sbr.rel (0) target = $region13
    $region12: #{tpu_custom_call.1} parent=1 // pred_region
      %s42 = ssub.s32 32768, 32768
      %43 = vsyncadd [#allocation6], %s42
      %s44 = sshll.u32 [#allocation7], 4
      %s45 = int_to_ptr.vmem [resolvable:$true] %s44
      %50 = dma.hbm_to_vmem [thread:$0]  %s2, 32768, %s45, [#allocation6], 256, 256, 16
    $region13: #{tpu_custom_call.1} parent=1 // pred_fallthru
      _
    // Predicated region
    $region14: #{tpu_custom_call.1} parent=1 // pred_check
      _
    $region15: #{tpu_custom_call.1} parent=1 // pred_check_branch
      %52 = sbr.rel (0) target = $region17
    $region16: #{tpu_custom_call.1} parent=1 // pred_region
      %s54 = ssub.s32 8192, 8192
      %55 = vsyncadd [#allocation9], %s54
      %s56 = sshll.u32 [#allocation8], 4
      %s57 = int_to_ptr.vmem [resolvable:$true] %s56
      %62 = dma.hbm_to_vmem [thread:$0]  %s3, 8192, %s57, [#allocation9], 128, 128, 8
    $region17: #{tpu_custom_call.1} parent=1 // pred_fallthru
      _
    // Predicated region
    $region18: #{tpu_custom_call.1} parent=1 // pred_check
      _
    $region19: #{tpu_custom_call.1} parent=1 // pred_check_branch
      %64 = sbr.rel (0) target = $region21
    $region20: #{tpu_custom_call.1} parent=1 // pred_region
      %s66 = ssub.s32 2048, 2048
      %67 = vsyncadd [#allocation9], %s66
      %s68 = sshll.u32 [#allocation10], 4
      %s69 = int_to_ptr.vmem [resolvable:$true] %s68
      %74 = dma.hbm_to_vmem [thread:$0]  %s4, 2048, %s69, [#allocation9], 64, 64, 4
    $region21: #{tpu_custom_call.1} parent=1 // pred_fallthru
      _
    // Predicated region
    $region22: #{tpu_custom_call.1} parent=1 // pred_check
      _
    $region23: #{tpu_custom_call.1} parent=1 // pred_check_branch
      %76 = sbr.rel (0) target = $region25
    $region24: #{tpu_custom_call.1} parent=1 // pred_region
      %s78 = ssub.s32 1024, 1024
      %79 = vsyncadd [#allocation12], %s78
      %s80 = sshll.u32 [#allocation11], 4
      %s81 = int_to_ptr.vmem [resolvable:$true] %s80
      %86 = dma.hbm_to_vmem [thread:$0]  %s5, 1024, %s81, [#allocation12], 64, 64, 4
    $region25: #{tpu_custom_call.1} parent=1 // pred_fallthru
      _
    // Predicated region
    $region26: #{tpu_custom_call.1} parent=1 // pred_check
      _
    $region27: #{tpu_custom_call.1} parent=1 // pred_check_branch
      %88 = sbr.rel (0) target = $region29
    $region28: #{tpu_custom_call.1} parent=1 // pred_region
      %s90 = ssub.s32 496, 496
      %91 = vsyncadd [#allocation12], %s90
      %s93 = sshll.u32 [#allocation13], 4
      %s94 = int_to_ptr.vmem [resolvable:$true] %s93
      %96 = dma.hbm_to_vmem [thread:$0]  %s6, 496, %s94, [#allocation12]
    $region29: #{tpu_custom_call.1} parent=1 // pred_fallthru
      _
    // Predicated region
    $region30: #{tpu_custom_call.1} parent=1 // pred_check
      _
    $region31: #{tpu_custom_call.1} parent=1 // pred_check_branch
      %98 = sbr.rel (0) target = $region33
    $region32: #{tpu_custom_call.1} parent=1 // pred_region
      %99 = dma.done [#allocation3], 1024
    $region33: #{tpu_custom_call.1} parent=1 // pred_fallthru
      _
    // Predicated region
    $region34: #{tpu_custom_call.1} parent=1 // pred_check
      _
    $region35: #{tpu_custom_call.1} parent=1 // pred_check_branch
      %101 = sbr.rel (0) target = $region37
    $region36: #{tpu_custom_call.1} parent=1 // pred_region
      %102 = dma.done [#allocation6], 65536
    $region37: #{tpu_custom_call.1} parent=1 // pred_fallthru
      _
    // Predicated region
    $region38: #{tpu_custom_call.1} parent=1 // pred_check
      _
    $region39: #{tpu_custom_call.1} parent=1 // pred_check_branch
      %104 = sbr.rel (0) target = $region41
    $region40: #{tpu_custom_call.1} parent=1 // pred_region
      %105 = dma.done [#allocation6], 32768
    $region41: #{tpu_custom_call.1} parent=1 // pred_fallthru
      _
    // Predicated region
    $region42: #{tpu_custom_call.1} parent=1 // pred_check
      _
    $region43: #{tpu_custom_call.1} parent=1 // pred_check_branch
      %107 = sbr.rel (0) target = $region45
    $region44: #{tpu_custom_call.1} parent=1 // pred_region
      %108 = dma.done [#allocation9], 8192
    $region45: #{tpu_custom_call.1} parent=1 // pred_fallthru
      _
    // Predicated region
    $region46: #{tpu_custom_call.1} parent=1 // pred_check
      _
    $region47: #{tpu_custom_call.1} parent=1 // pred_check_branch
      %110 = sbr.rel (0) target = $region49
    $region48: #{tpu_custom_call.1} parent=1 // pred_region
      %111 = dma.done [#allocation9], 2048
    $region49: #{tpu_custom_call.1} parent=1 // pred_fallthru
      _
    // Predicated region
    $region50: #{tpu_custom_call.1} parent=1 // pred_check
      _
    $region51: #{tpu_custom_call.1} parent=1 // pred_check_branch
      %113 = sbr.rel (0) target = $region53
    $region52: #{tpu_custom_call.1} parent=1 // pred_region
      %114 = dma.done [#allocation12], 1024
    $region53: #{tpu_custom_call.1} parent=1 // pred_fallthru
      _
    // Predicated region
    $region54: #{tpu_custom_call.1} parent=1 // pred_check
      _
    $region55: #{tpu_custom_call.1} parent=1 // pred_check_branch
      %116 = sbr.rel (0) target = $region57
    $region56: #{tpu_custom_call.1} parent=1 // pred_region
      %117 = dma.done [#allocation12], 496
    $region57: #{tpu_custom_call.1} parent=1 // pred_fallthru
      _
    %v119 = vld [vmem:[#allocation2] sm:$0xff]
    %v120 = vld [vmem:[#allocation2 + $0x8] sm:$0xff]
    %v121 = vld [vmem:[#allocation2 + $0x10] sm:$0xff]
    %v122 = vld [vmem:[#allocation2 + $0x18] sm:$0xff]
    %v123 = vld [vmem:[#allocation2 + $0x20] sm:$0xff]
    %v124 = vld [vmem:[#allocation2 + $0x28] sm:$0xff]
    %v125 = vld [vmem:[#allocation2 + $0x30] sm:$0xff]
    %v126 = vld [vmem:[#allocation2 + $0x38] sm:$0xff]
    %v127 = vpack.c.bf16 %v119, %v119
    %v128 = vpack.c.bf16 %v120, %v120
    %v129 = vpack.c.bf16 %v121, %v121
    %v130 = vpack.c.bf16 %v122, %v122
    %v131 = vpack.c.bf16 %v123, %v123
    %v132 = vpack.c.bf16 %v124, %v124
    %v133 = vpack.c.bf16 %v125, %v125
    %v134 = vpack.c.bf16 %v126, %v126
    %v135 = vld [vmem:[#allocation5] sm:$0xff]
    %v136 = vld [vmem:[#allocation5 + $0x8] sm:$0xff]
    %v137 = vld [vmem:[#allocation5 + $0x10] sm:$0xff]
    %v138 = vld [vmem:[#allocation5 + $0x18] sm:$0xff]
    %v139 = vld [vmem:[#allocation5 + $0x20] sm:$0xff]
    %v140 = vld [vmem:[#allocation5 + $0x28] sm:$0xff]
    %v141 = vld [vmem:[#allocation5 + $0x30] sm:$0xff]
    %v142 = vld [vmem:[#allocation5 + $0x38] sm:$0xff]
    %v143 = vld [vmem:[#allocation5 + $0x40] sm:$0xff]
    %v144 = vld [vmem:[#allocation5 + $0x48] sm:$0xff]
    %v145 = vld [vmem:[#allocation5 + $0x50] sm:$0xff]
    %v146 = vld [vmem:[#allocation5 + $0x58] sm:$0xff]
    %v147 = vld [vmem:[#allocation5 + $0x60] sm:$0xff]
    %v148 = vld [vmem:[#allocation5 + $0x68] sm:$0xff]
    %v149 = vld [vmem:[#allocation5 + $0x70] sm:$0xff]
    %v150 = vld [vmem:[#allocation5 + $0x78] sm:$0xff]
    %v151 = vld [vmem:[#allocation5 + $0x80] sm:$0xff]
    %v152 = vld [vmem:[#allocation5 + $0x88] sm:$0xff]
    %v153 = vld [vmem:[#allocation5 + $0x90] sm:$0xff]
    %v154 = vld [vmem:[#allocation5 + $0x98] sm:$0xff]
    %v155 = vld [vmem:[#allocation5 + $0xa0] sm:$0xff]
    %v156 = vld [vmem:[#allocation5 + $0xa8] sm:$0xff]
    %v157 = vld [vmem:[#allocation5 + $0xb0] sm:$0xff]
    %v158 = vld [vmem:[#allocation5 + $0xb8] sm:$0xff]
    %v159 = vld [vmem:[#allocation5 + $0xc0] sm:$0xff]
    %v160 = vld [vmem:[#allocation5 + $0xc8] sm:$0xff]
    %v161 = vld [vmem:[#allocation5 + $0xd0] sm:$0xff]
    %v162 = vld [vmem:[#allocation5 + $0xd8] sm:$0xff]
    %v163 = vld [vmem:[#allocation5 + $0xe0] sm:$0xff]
    %v164 = vld [vmem:[#allocation5 + $0xe8] sm:$0xff]
    %v165 = vld [vmem:[#allocation5 + $0xf0] sm:$0xff]
    %v166 = vld [vmem:[#allocation5 + $0xf8] sm:$0xff]
    %v167 = vld [vmem:[#allocation5 + $0x100] sm:$0xff]
    %v168 = vld [vmem:[#allocation5 + $0x108] sm:$0xff]
    %v169 = vld [vmem:[#allocation5 + $0x110] sm:$0xff]
    %v170 = vld [vmem:[#allocation5 + $0x118] sm:$0xff]
    %v171 = vld [vmem:[#allocation5 + $0x120] sm:$0xff]
    %v172 = vld [vmem:[#allocation5 + $0x128] sm:$0xff]
    %v173 = vld [vmem:[#allocation5 + $0x130] sm:$0xff]
    %v174 = vld [vmem:[#allocation5 + $0x138] sm:$0xff]
    %v175 = vld [vmem:[#allocation5 + $0x140] sm:$0xff]
    %v176 = vld [vmem:[#allocation5 + $0x148] sm:$0xff]
    %v177 = vld [vmem:[#allocation5 + $0x150] sm:$0xff]
    %v178 = vld [vmem:[#allocation5 + $0x158] sm:$0xff]
    %v179 = vld [vmem:[#allocation5 + $0x160] sm:$0xff]
    %v180 = vld [vmem:[#allocation5 + $0x168] sm:$0xff]
    %v181 = vld [vmem:[#allocation5 + $0x170] sm:$0xff]
    %v182 = vld [vmem:[#allocation5 + $0x178] sm:$0xff]
    %v183 = vld [vmem:[#allocation5 + $0x180] sm:$0xff]
    %v184 = vld [vmem:[#allocation5 + $0x188] sm:$0xff]
    %v185 = vld [vmem:[#allocation5 + $0x190] sm:$0xff]
    %v186 = vld [vmem:[#allocation5 + $0x198] sm:$0xff]
    %v187 = vld [vmem:[#allocation5 + $0x1a0] sm:$0xff]
    %v188 = vld [vmem:[#allocation5 + $0x1a8] sm:$0xff]
    %v189 = vld [vmem:[#allocation5 + $0x1b0] sm:$0xff]
    %v190 = vld [vmem:[#allocation5 + $0x1b8] sm:$0xff]
    %v191 = vld [vmem:[#allocation5 + $0x1c0] sm:$0xff]
    %v192 = vld [vmem:[#allocation5 + $0x1c8] sm:$0xff]
    %v193 = vld [vmem:[#allocation5 + $0x1d0] sm:$0xff]
    %v194 = vld [vmem:[#allocation5 + $0x1d8] sm:$0xff]
    %v195 = vld [vmem:[#allocation5 + $0x1e0] sm:$0xff]
    %v196 = vld [vmem:[#allocation5 + $0x1e8] sm:$0xff]
    %v197 = vld [vmem:[#allocation5 + $0x1f0] sm:$0xff]
    %v198 = vld [vmem:[#allocation5 + $0x1f8] sm:$0xff]
    %v199 = vld [vmem:[#allocation5 + $0x200] sm:$0xff]
    %v200 = vld [vmem:[#allocation5 + $0x208] sm:$0xff]
    %v201 = vld [vmem:[#allocation5 + $0x210] sm:$0xff]
    %v202 = vld [vmem:[#allocation5 + $0x218] sm:$0xff]
    %v203 = vld [vmem:[#allocation5 + $0x220] sm:$0xff]
    %v204 = vld [vmem:[#allocation5 + $0x228] sm:$0xff]
    %v205 = vld [vmem:[#allocation5 + $0x230] sm:$0xff]
    %v206 = vld [vmem:[#allocation5 + $0x238] sm:$0xff]
    %v207 = vld [vmem:[#allocation5 + $0x240] sm:$0xff]
    %v208 = vld [vmem:[#allocation5 + $0x248] sm:$0xff]
    %v209 = vld [vmem:[#allocation5 + $0x250] sm:$0xff]
    %v210 = vld [vmem:[#allocation5 + $0x258] sm:$0xff]
    %v211 = vld [vmem:[#allocation5 + $0x260] sm:$0xff]
    %v212 = vld [vmem:[#allocation5 + $0x268] sm:$0xff]
    %v213 = vld [vmem:[#allocation5 + $0x270] sm:$0xff]
    %v214 = vld [vmem:[#allocation5 + $0x278] sm:$0xff]
    %v215 = vld [vmem:[#allocation5 + $0x280] sm:$0xff]
    %v216 = vld [vmem:[#allocation5 + $0x288] sm:$0xff]
    %v217 = vld [vmem:[#allocation5 + $0x290] sm:$0xff]
    %v218 = vld [vmem:[#allocation5 + $0x298] sm:$0xff]
    %v219 = vld [vmem:[#allocation5 + $0x2a0] sm:$0xff]
    %v220 = vld [vmem:[#allocation5 + $0x2a8] sm:$0xff]
    %v221 = vld [vmem:[#allocation5 + $0x2b0] sm:$0xff]
    %v222 = vld [vmem:[#allocation5 + $0x2b8] sm:$0xff]
    %v223 = vld [vmem:[#allocation5 + $0x2c0] sm:$0xff]
    %v224 = vld [vmem:[#allocation5 + $0x2c8] sm:$0xff]
    %v225 = vld [vmem:[#allocation5 + $0x2d0] sm:$0xff]
    %v226 = vld [vmem:[#allocation5 + $0x2d8] sm:$0xff]
    %v227 = vld [vmem:[#allocation5 + $0x2e0] sm:$0xff]
    %v228 = vld [vmem:[#allocation5 + $0x2e8] sm:$0xff]
    %v229 = vld [vmem:[#allocation5 + $0x2f0] sm:$0xff]
    %v230 = vld [vmem:[#allocation5 + $0x2f8] sm:$0xff]
    %v231 = vld [vmem:[#allocation5 + $0x300] sm:$0xff]
    %v232 = vld [vmem:[#allocation5 + $0x308] sm:$0xff]
    %v233 = vld [vmem:[#allocation5 + $0x310] sm:$0xff]
    %v234 = vld [vmem:[#allocation5 + $0x318] sm:$0xff]
    %v235 = vld [vmem:[#allocation5 + $0x320] sm:$0xff]
    %v236 = vld [vmem:[#allocation5 + $0x328] sm:$0xff]
    %v237 = vld [vmem:[#allocation5 + $0x330] sm:$0xff]
    %v238 = vld [vmem:[#allocation5 + $0x338] sm:$0xff]
    %v239 = vld [vmem:[#allocation5 + $0x340] sm:$0xff]
    %v240 = vld [vmem:[#allocation5 + $0x348] sm:$0xff]
    %v241 = vld [vmem:[#allocation5 + $0x350] sm:$0xff]
    %v242 = vld [vmem:[#allocation5 + $0x358] sm:$0xff]
    %v243 = vld [vmem:[#allocation5 + $0x360] sm:$0xff]
    %v244 = vld [vmem:[#allocation5 + $0x368] sm:$0xff]
    %v245 = vld [vmem:[#allocation5 + $0x370] sm:$0xff]
    %v246 = vld [vmem:[#allocation5 + $0x378] sm:$0xff]
    %v247 = vld [vmem:[#allocation5 + $0x380] sm:$0xff]
    %v248 = vld [vmem:[#allocation5 + $0x388] sm:$0xff]
    %v249 = vld [vmem:[#allocation5 + $0x390] sm:$0xff]
    %v250 = vld [vmem:[#allocation5 + $0x398] sm:$0xff]
    %v251 = vld [vmem:[#allocation5 + $0x3a0] sm:$0xff]
    %v252 = vld [vmem:[#allocation5 + $0x3a8] sm:$0xff]
    %v253 = vld [vmem:[#allocation5 + $0x3b0] sm:$0xff]
    %v254 = vld [vmem:[#allocation5 + $0x3b8] sm:$0xff]
    %v255 = vld [vmem:[#allocation5 + $0x3c0] sm:$0xff]
    %v256 = vld [vmem:[#allocation5 + $0x3c8] sm:$0xff]
    %v257 = vld [vmem:[#allocation5 + $0x3d0] sm:$0xff]
    %v258 = vld [vmem:[#allocation5 + $0x3d8] sm:$0xff]
    %v259 = vld [vmem:[#allocation5 + $0x3e0] sm:$0xff]
    %v260 = vld [vmem:[#allocation5 + $0x3e8] sm:$0xff]
    %v261 = vld [vmem:[#allocation5 + $0x3f0] sm:$0xff]
    %v262 = vld [vmem:[#allocation5 + $0x3f8] sm:$0xff]
    %v263 = vld [vmem:[#allocation5 + $0x400] sm:$0xff]
    %v264 = vld [vmem:[#allocation5 + $0x408] sm:$0xff]
    %v265 = vld [vmem:[#allocation5 + $0x410] sm:$0xff]
    %v266 = vld [vmem:[#allocation5 + $0x418] sm:$0xff]
    %v267 = vld [vmem:[#allocation5 + $0x420] sm:$0xff]
    %v268 = vld [vmem:[#allocation5 + $0x428] sm:$0xff]
    %v269 = vld [vmem:[#allocation5 + $0x430] sm:$0xff]
    %v270 = vld [vmem:[#allocation5 + $0x438] sm:$0xff]
    %v271 = vld [vmem:[#allocation5 + $0x440] sm:$0xff]
    %v272 = vld [vmem:[#allocation5 + $0x448] sm:$0xff]
    %v273 = vld [vmem:[#allocation5 + $0x450] sm:$0xff]
    %v274 = vld [vmem:[#allocation5 + $0x458] sm:$0xff]
    %v275 = vld [vmem:[#allocation5 + $0x460] sm:$0xff]
    %v276 = vld [vmem:[#allocation5 + $0x468] sm:$0xff]
    %v277 = vld [vmem:[#allocation5 + $0x470] sm:$0xff]
    %v278 = vld [vmem:[#allocation5 + $0x478] sm:$0xff]
    %v279 = vld [vmem:[#allocation5 + $0x480] sm:$0xff]
    %v280 = vld [vmem:[#allocation5 + $0x488] sm:$0xff]
    %v281 = vld [vmem:[#allocation5 + $0x490] sm:$0xff]
    %v282 = vld [vmem:[#allocation5 + $0x498] sm:$0xff]
    %v283 = vld [vmem:[#allocation5 + $0x4a0] sm:$0xff]
    %v284 = vld [vmem:[#allocation5 + $0x4a8] sm:$0xff]
    %v285 = vld [vmem:[#allocation5 + $0x4b0] sm:$0xff]
    %v286 = vld [vmem:[#allocation5 + $0x4b8] sm:$0xff]
    %v287 = vld [vmem:[#allocation5 + $0x4c0] sm:$0xff]
    %v288 = vld [vmem:[#allocation5 + $0x4c8] sm:$0xff]
    %v289 = vld [vmem:[#allocation5 + $0x4d0] sm:$0xff]
    %v290 = vld [vmem:[#allocation5 + $0x4d8] sm:$0xff]
    %v291 = vld [vmem:[#allocation5 + $0x4e0] sm:$0xff]
    %v292 = vld [vmem:[#allocation5 + $0x4e8] sm:$0xff]
    %v293 = vld [vmem:[#allocation5 + $0x4f0] sm:$0xff]
    %v294 = vld [vmem:[#allocation5 + $0x4f8] sm:$0xff]
    %v295 = vld [vmem:[#allocation5 + $0x500] sm:$0xff]
    %v296 = vld [vmem:[#allocation5 + $0x508] sm:$0xff]
    %v297 = vld [vmem:[#allocation5 + $0x510] sm:$0xff]
    %v298 = vld [vmem:[#allocation5 + $0x518] sm:$0xff]
    %v299 = vld [vmem:[#allocation5 + $0x520] sm:$0xff]
    %v300 = vld [vmem:[#allocation5 + $0x528] sm:$0xff]
    %v301 = vld [vmem:[#allocation5 + $0x530] sm:$0xff]
    %v302 = vld [vmem:[#allocation5 + $0x538] sm:$0xff]
    %v303 = vld [vmem:[#allocation5 + $0x540] sm:$0xff]
    %v304 = vld [vmem:[#allocation5 + $0x548] sm:$0xff]
    %v305 = vld [vmem:[#allocation5 + $0x550] sm:$0xff]
    %v306 = vld [vmem:[#allocation5 + $0x558] sm:$0xff]
    %v307 = vld [vmem:[#allocation5 + $0x560] sm:$0xff]
    %v308 = vld [vmem:[#allocation5 + $0x568] sm:$0xff]
    %v309 = vld [vmem:[#allocation5 + $0x570] sm:$0xff]
    %v310 = vld [vmem:[#allocation5 + $0x578] sm:$0xff]
    %v311 = vld [vmem:[#allocation5 + $0x580] sm:$0xff]
    %v312 = vld [vmem:[#allocation5 + $0x588] sm:$0xff]
    %v313 = vld [vmem:[#allocation5 + $0x590] sm:$0xff]
    %v314 = vld [vmem:[#allocation5 + $0x598] sm:$0xff]
    %v315 = vld [vmem:[#allocation5 + $0x5a0] sm:$0xff]
    %v316 = vld [vmem:[#allocation5 + $0x5a8] sm:$0xff]
    %v317 = vld [vmem:[#allocation5 + $0x5b0] sm:$0xff]
    %v318 = vld [vmem:[#allocation5 + $0x5b8] sm:$0xff]
    %v319 = vld [vmem:[#allocation5 + $0x5c0] sm:$0xff]
    %v320 = vld [vmem:[#allocation5 + $0x5c8] sm:$0xff]
    %v321 = vld [vmem:[#allocation5 + $0x5d0] sm:$0xff]
    %v322 = vld [vmem:[#allocation5 + $0x5d8] sm:$0xff]
    %v323 = vld [vmem:[#allocation5 + $0x5e0] sm:$0xff]
    %v324 = vld [vmem:[#allocation5 + $0x5e8] sm:$0xff]
    %v325 = vld [vmem:[#allocation5 + $0x5f0] sm:$0xff]
    %v326 = vld [vmem:[#allocation5 + $0x5f8] sm:$0xff]
    %v327 = vld [vmem:[#allocation5 + $0x600] sm:$0xff]
    %v328 = vld [vmem:[#allocation5 + $0x608] sm:$0xff]
    %v329 = vld [vmem:[#allocation5 + $0x610] sm:$0xff]
    %v330 = vld [vmem:[#allocation5 + $0x618] sm:$0xff]
    %v331 = vld [vmem:[#allocation5 + $0x620] sm:$0xff]
    %v332 = vld [vmem:[#allocation5 + $0x628] sm:$0xff]
    %v333 = vld [vmem:[#allocation5 + $0x630] sm:$0xff]
    %v334 = vld [vmem:[#allocation5 + $0x638] sm:$0xff]
    %v335 = vld [vmem:[#allocation5 + $0x640] sm:$0xff]
    %v336 = vld [vmem:[#allocation5 + $0x648] sm:$0xff]
    %v337 = vld [vmem:[#allocation5 + $0x650] sm:$0xff]
    %v338 = vld [vmem:[#allocation5 + $0x658] sm:$0xff]
    %v339 = vld [vmem:[#allocation5 + $0x660] sm:$0xff]
    %v340 = vld [vmem:[#allocation5 + $0x668] sm:$0xff]
    %v341 = vld [vmem:[#allocation5 + $0x670] sm:$0xff]
    %v342 = vld [vmem:[#allocation5 + $0x678] sm:$0xff]
    %v343 = vld [vmem:[#allocation5 + $0x680] sm:$0xff]
    %v344 = vld [vmem:[#allocation5 + $0x688] sm:$0xff]
    %v345 = vld [vmem:[#allocation5 + $0x690] sm:$0xff]
    %v346 = vld [vmem:[#allocation5 + $0x698] sm:$0xff]
    %v347 = vld [vmem:[#allocation5 + $0x6a0] sm:$0xff]
    %v348 = vld [vmem:[#allocation5 + $0x6a8] sm:$0xff]
    %v349 = vld [vmem:[#allocation5 + $0x6b0] sm:$0xff]
    %v350 = vld [vmem:[#allocation5 + $0x6b8] sm:$0xff]
    %v351 = vld [vmem:[#allocation5 + $0x6c0] sm:$0xff]
    %v352 = vld [vmem:[#allocation5 + $0x6c8] sm:$0xff]
    %v353 = vld [vmem:[#allocation5 + $0x6d0] sm:$0xff]
    %v354 = vld [vmem:[#allocation5 + $0x6d8] sm:$0xff]
    %v355 = vld [vmem:[#allocation5 + $0x6e0] sm:$0xff]
    %v356 = vld [vmem:[#allocation5 + $0x6e8] sm:$0xff]
    %v357 = vld [vmem:[#allocation5 + $0x6f0] sm:$0xff]
    %v358 = vld [vmem:[#allocation5 + $0x6f8] sm:$0xff]
    %v359 = vld [vmem:[#allocation5 + $0x700] sm:$0xff]
    %v360 = vld [vmem:[#allocation5 + $0x708] sm:$0xff]
    %v361 = vld [vmem:[#allocation5 + $0x710] sm:$0xff]
    %v362 = vld [vmem:[#allocation5 + $0x718] sm:$0xff]
    %v363 = vld [vmem:[#allocation5 + $0x720] sm:$0xff]
    %v364 = vld [vmem:[#allocation5 + $0x728] sm:$0xff]
    %v365 = vld [vmem:[#allocation5 + $0x730] sm:$0xff]
    %v366 = vld [vmem:[#allocation5 + $0x738] sm:$0xff]
    %v367 = vld [vmem:[#allocation5 + $0x740] sm:$0xff]
    %v368 = vld [vmem:[#allocation5 + $0x748] sm:$0xff]
    %v369 = vld [vmem:[#allocation5 + $0x750] sm:$0xff]
    %v370 = vld [vmem:[#allocation5 + $0x758] sm:$0xff]
    %v371 = vld [vmem:[#allocation5 + $0x760] sm:$0xff]
    %v372 = vld [vmem:[#allocation5 + $0x768] sm:$0xff]
    %v373 = vld [vmem:[#allocation5 + $0x770] sm:$0xff]
    %v374 = vld [vmem:[#allocation5 + $0x778] sm:$0xff]
    %v375 = vld [vmem:[#allocation5 + $0x780] sm:$0xff]
    %v376 = vld [vmem:[#allocation5 + $0x788] sm:$0xff]
    %v377 = vld [vmem:[#allocation5 + $0x790] sm:$0xff]
    %v378 = vld [vmem:[#allocation5 + $0x798] sm:$0xff]
    %v379 = vld [vmem:[#allocation5 + $0x7a0] sm:$0xff]
    %v380 = vld [vmem:[#allocation5 + $0x7a8] sm:$0xff]
    %v381 = vld [vmem:[#allocation5 + $0x7b0] sm:$0xff]
    %v382 = vld [vmem:[#allocation5 + $0x7b8] sm:$0xff]
    %v383 = vld [vmem:[#allocation5 + $0x7c0] sm:$0xff]
    %v384 = vld [vmem:[#allocation5 + $0x7c8] sm:$0xff]
    %v385 = vld [vmem:[#allocation5 + $0x7d0] sm:$0xff]
    %v386 = vld [vmem:[#allocation5 + $0x7d8] sm:$0xff]
    %v387 = vld [vmem:[#allocation5 + $0x7e0] sm:$0xff]
    %v388 = vld [vmem:[#allocation5 + $0x7e8] sm:$0xff]
    %v389 = vld [vmem:[#allocation5 + $0x7f0] sm:$0xff]
    %v390 = vld [vmem:[#allocation5 + $0x7f8] sm:$0xff]
    %v391 = vld [vmem:[#allocation5 + $0x800] sm:$0xff]
    %v392 = vld [vmem:[#allocation5 + $0x808] sm:$0xff]
    %v393 = vld [vmem:[#allocation5 + $0x810] sm:$0xff]
    %v394 = vld [vmem:[#allocation5 + $0x818] sm:$0xff]
    %v395 = vld [vmem:[#allocation5 + $0x820] sm:$0xff]
    %v396 = vld [vmem:[#allocation5 + $0x828] sm:$0xff]
    %v397 = vld [vmem:[#allocation5 + $0x830] sm:$0xff]
    %v398 = vld [vmem:[#allocation5 + $0x838] sm:$0xff]
    %v399 = vld [vmem:[#allocation5 + $0x840] sm:$0xff]
    %v400 = vld [vmem:[#allocation5 + $0x848] sm:$0xff]
    %v401 = vld [vmem:[#allocation5 + $0x850] sm:$0xff]
    %v402 = vld [vmem:[#allocation5 + $0x858] sm:$0xff]
    %v403 = vld [vmem:[#allocation5 + $0x860] sm:$0xff]
    %v404 = vld [vmem:[#allocation5 + $0x868] sm:$0xff]
    %v405 = vld [vmem:[#allocation5 + $0x870] sm:$0xff]
    %v406 = vld [vmem:[#allocation5 + $0x878] sm:$0xff]
    %v407 = vld [vmem:[#allocation5 + $0x880] sm:$0xff]
    %v408 = vld [vmem:[#allocation5 + $0x888] sm:$0xff]
    %v409 = vld [vmem:[#allocation5 + $0x890] sm:$0xff]
    %v410 = vld [vmem:[#allocation5 + $0x898] sm:$0xff]
    %v411 = vld [vmem:[#allocation5 + $0x8a0] sm:$0xff]
    %v412 = vld [vmem:[#allocation5 + $0x8a8] sm:$0xff]
    %v413 = vld [vmem:[#allocation5 + $0x8b0] sm:$0xff]
    %v414 = vld [vmem:[#allocation5 + $0x8b8] sm:$0xff]
    %v415 = vld [vmem:[#allocation5 + $0x8c0] sm:$0xff]
    %v416 = vld [vmem:[#allocation5 + $0x8c8] sm:$0xff]
    %v417 = vld [vmem:[#allocation5 + $0x8d0] sm:$0xff]
    %v418 = vld [vmem:[#allocation5 + $0x8d8] sm:$0xff]
    %v419 = vld [vmem:[#allocation5 + $0x8e0] sm:$0xff]
    %v420 = vld [vmem:[#allocation5 + $0x8e8] sm:$0xff]
    %v421 = vld [vmem:[#allocation5 + $0x8f0] sm:$0xff]
    %v422 = vld [vmem:[#allocation5 + $0x8f8] sm:$0xff]
    %v423 = vld [vmem:[#allocation5 + $0x900] sm:$0xff]
    %v424 = vld [vmem:[#allocation5 + $0x908] sm:$0xff]
    %v425 = vld [vmem:[#allocation5 + $0x910] sm:$0xff]
    %v426 = vld [vmem:[#allocation5 + $0x918] sm:$0xff]
    %v427 = vld [vmem:[#allocation5 + $0x920] sm:$0xff]
    %v428 = vld [vmem:[#allocation5 + $0x928] sm:$0xff]
    %v429 = vld [vmem:[#allocation5 + $0x930] sm:$0xff]
    %v430 = vld [vmem:[#allocation5 + $0x938] sm:$0xff]
    %v431 = vld [vmem:[#allocation5 + $0x940] sm:$0xff]
    %v432 = vld [vmem:[#allocation5 + $0x948] sm:$0xff]
    %v433 = vld [vmem:[#allocation5 + $0x950] sm:$0xff]
    %v434 = vld [vmem:[#allocation5 + $0x958] sm:$0xff]
    %v435 = vld [vmem:[#allocation5 + $0x960] sm:$0xff]
    %v436 = vld [vmem:[#allocation5 + $0x968] sm:$0xff]
    %v437 = vld [vmem:[#allocation5 + $0x970] sm:$0xff]
    %v438 = vld [vmem:[#allocation5 + $0x978] sm:$0xff]
    %v439 = vld [vmem:[#allocation5 + $0x980] sm:$0xff]
    %v440 = vld [vmem:[#allocation5 + $0x988] sm:$0xff]
    %v441 = vld [vmem:[#allocation5 + $0x990] sm:$0xff]
    %v442 = vld [vmem:[#allocation5 + $0x998] sm:$0xff]
    %v443 = vld [vmem:[#allocation5 + $0x9a0] sm:$0xff]
    %v444 = vld [vmem:[#allocation5 + $0x9a8] sm:$0xff]
    %v445 = vld [vmem:[#allocation5 + $0x9b0] sm:$0xff]
    %v446 = vld [vmem:[#allocation5 + $0x9b8] sm:$0xff]
    %v447 = vld [vmem:[#allocation5 + $0x9c0] sm:$0xff]
    %v448 = vld [vmem:[#allocation5 + $0x9c8] sm:$0xff]
    %v449 = vld [vmem:[#allocation5 + $0x9d0] sm:$0xff]
    %v450 = vld [vmem:[#allocation5 + $0x9d8] sm:$0xff]
    %v451 = vld [vmem:[#allocation5 + $0x9e0] sm:$0xff]
    %v452 = vld [vmem:[#allocation5 + $0x9e8] sm:$0xff]
    %v453 = vld [vmem:[#allocation5 + $0x9f0] sm:$0xff]
    %v454 = vld [vmem:[#allocation5 + $0x9f8] sm:$0xff]
    %v455 = vld [vmem:[#allocation5 + $0xa00] sm:$0xff]
    %v456 = vld [vmem:[#allocation5 + $0xa08] sm:$0xff]
    %v457 = vld [vmem:[#allocation5 + $0xa10] sm:$0xff]
    %v458 = vld [vmem:[#allocation5 + $0xa18] sm:$0xff]
    %v459 = vld [vmem:[#allocation5 + $0xa20] sm:$0xff]
    %v460 = vld [vmem:[#allocation5 + $0xa28] sm:$0xff]
    %v461 = vld [vmem:[#allocation5 + $0xa30] sm:$0xff]
    %v462 = vld [vmem:[#allocation5 + $0xa38] sm:$0xff]
    %v463 = vld [vmem:[#allocation5 + $0xa40] sm:$0xff]
    %v464 = vld [vmem:[#allocation5 + $0xa48] sm:$0xff]
    %v465 = vld [vmem:[#allocation5 + $0xa50] sm:$0xff]
    %v466 = vld [vmem:[#allocation5 + $0xa58] sm:$0xff]
    %v467 = vld [vmem:[#allocation5 + $0xa60] sm:$0xff]
    %v468 = vld [vmem:[#allocation5 + $0xa68] sm:$0xff]
    %v469 = vld [vmem:[#allocation5 + $0xa70] sm:$0xff]
    %v470 = vld [vmem:[#allocation5 + $0xa78] sm:$0xff]
    %v471 = vld [vmem:[#allocation5 + $0xa80] sm:$0xff]
    %v472 = vld [vmem:[#allocation5 + $0xa88] sm:$0xff]
    %v473 = vld [vmem:[#allocation5 + $0xa90] sm:$0xff]
    %v474 = vld [vmem:[#allocation5 + $0xa98] sm:$0xff]
    %v475 = vld [vmem:[#allocation5 + $0xaa0] sm:$0xff]
    %v476 = vld [vmem:[#allocation5 + $0xaa8] sm:$0xff]
    %v477 = vld [vmem:[#allocation5 + $0xab0] sm:$0xff]
    %v478 = vld [vmem:[#allocation5 + $0xab8] sm:$0xff]
    %v479 = vld [vmem:[#allocation5 + $0xac0] sm:$0xff]
    %v480 = vld [vmem:[#allocation5 + $0xac8] sm:$0xff]
    %v481 = vld [vmem:[#allocation5 + $0xad0] sm:$0xff]
    %v482 = vld [vmem:[#allocation5 + $0xad8] sm:$0xff]
    %v483 = vld [vmem:[#allocation5 + $0xae0] sm:$0xff]
    %v484 = vld [vmem:[#allocation5 + $0xae8] sm:$0xff]
    %v485 = vld [vmem:[#allocation5 + $0xaf0] sm:$0xff]
    %v486 = vld [vmem:[#allocation5 + $0xaf8] sm:$0xff]
    %v487 = vld [vmem:[#allocation5 + $0xb00] sm:$0xff]
    %v488 = vld [vmem:[#allocation5 + $0xb08] sm:$0xff]
    %v489 = vld [vmem:[#allocation5 + $0xb10] sm:$0xff]
    %v490 = vld [vmem:[#allocation5 + $0xb18] sm:$0xff]
    %v491 = vld [vmem:[#allocation5 + $0xb20] sm:$0xff]
    %v492 = vld [vmem:[#allocation5 + $0xb28] sm:$0xff]
    %v493 = vld [vmem:[#allocation5 + $0xb30] sm:$0xff]
    %v494 = vld [vmem:[#allocation5 + $0xb38] sm:$0xff]
    %v495 = vld [vmem:[#allocation5 + $0xb40] sm:$0xff]
    %v496 = vld [vmem:[#allocation5 + $0xb48] sm:$0xff]
    %v497 = vld [vmem:[#allocation5 + $0xb50] sm:$0xff]
    %v498 = vld [vmem:[#allocation5 + $0xb58] sm:$0xff]
    %v499 = vld [vmem:[#allocation5 + $0xb60] sm:$0xff]
    %v500 = vld [vmem:[#allocation5 + $0xb68] sm:$0xff]
    %v501 = vld [vmem:[#allocation5 + $0xb70] sm:$0xff]
    %v502 = vld [vmem:[#allocation5 + $0xb78] sm:$0xff]
    %v503 = vld [vmem:[#allocation5 + $0xb80] sm:$0xff]
    %v504 = vld [vmem:[#allocation5 + $0xb88] sm:$0xff]
    %v505 = vld [vmem:[#allocation5 + $0xb90] sm:$0xff]
    %v506 = vld [vmem:[#allocation5 + $0xb98] sm:$0xff]
    %v507 = vld [vmem:[#allocation5 + $0xba0] sm:$0xff]
    %v508 = vld [vmem:[#allocation5 + $0xba8] sm:$0xff]
    %v509 = vld [vmem:[#allocation5 + $0xbb0] sm:$0xff]
    %v510 = vld [vmem:[#allocation5 + $0xbb8] sm:$0xff]
    %v511 = vld [vmem:[#allocation5 + $0xbc0] sm:$0xff]
    %v512 = vld [vmem:[#allocation5 + $0xbc8] sm:$0xff]
    %v513 = vld [vmem:[#allocation5 + $0xbd0] sm:$0xff]
    %v514 = vld [vmem:[#allocation5 + $0xbd8] sm:$0xff]
    %v515 = vld [vmem:[#allocation5 + $0xbe0] sm:$0xff]
    %v516 = vld [vmem:[#allocation5 + $0xbe8] sm:$0xff]
    %v517 = vld [vmem:[#allocation5 + $0xbf0] sm:$0xff]
    %v518 = vld [vmem:[#allocation5 + $0xbf8] sm:$0xff]
    %v519 = vld [vmem:[#allocation5 + $0xc00] sm:$0xff]
    %v520 = vld [vmem:[#allocation5 + $0xc08] sm:$0xff]
    %v521 = vld [vmem:[#allocation5 + $0xc10] sm:$0xff]
    %v522 = vld [vmem:[#allocation5 + $0xc18] sm:$0xff]
    %v523 = vld [vmem:[#allocation5 + $0xc20] sm:$0xff]
    %v524 = vld [vmem:[#allocation5 + $0xc28] sm:$0xff]
    %v525 = vld [vmem:[#allocation5 + $0xc30] sm:$0xff]
    %v526 = vld [vmem:[#allocation5 + $0xc38] sm:$0xff]
    %v527 = vld [vmem:[#allocation5 + $0xc40] sm:$0xff]
    %v528 = vld [vmem:[#allocation5 + $0xc48] sm:$0xff]
    %v529 = vld [vmem:[#allocation5 + $0xc50] sm:$0xff]
    %v530 = vld [vmem:[#allocation5 + $0xc58] sm:$0xff]
    %v531 = vld [vmem:[#allocation5 + $0xc60] sm:$0xff]
    %v532 = vld [vmem:[#allocation5 + $0xc68] sm:$0xff]
    %v533 = vld [vmem:[#allocation5 + $0xc70] sm:$0xff]
    %v534 = vld [vmem:[#allocation5 + $0xc78] sm:$0xff]
    %v535 = vld [vmem:[#allocation5 + $0xc80] sm:$0xff]
    %v536 = vld [vmem:[#allocation5 + $0xc88] sm:$0xff]
    %v537 = vld [vmem:[#allocation5 + $0xc90] sm:$0xff]
    %v538 = vld [vmem:[#allocation5 + $0xc98] sm:$0xff]
    %v539 = vld [vmem:[#allocation5 + $0xca0] sm:$0xff]
    %v540 = vld [vmem:[#allocation5 + $0xca8] sm:$0xff]
    %v541 = vld [vmem:[#allocation5 + $0xcb0] sm:$0xff]
    %v542 = vld [vmem:[#allocation5 + $0xcb8] sm:$0xff]
    %v543 = vld [vmem:[#allocation5 + $0xcc0] sm:$0xff]
    %v544 = vld [vmem:[#allocation5 + $0xcc8] sm:$0xff]
    %v545 = vld [vmem:[#allocation5 + $0xcd0] sm:$0xff]
    %v546 = vld [vmem:[#allocation5 + $0xcd8] sm:$0xff]
    %v547 = vld [vmem:[#allocation5 + $0xce0] sm:$0xff]
    %v548 = vld [vmem:[#allocation5 + $0xce8] sm:$0xff]
    %v549 = vld [vmem:[#allocation5 + $0xcf0] sm:$0xff]
    %v550 = vld [vmem:[#allocation5 + $0xcf8] sm:$0xff]
    %v551 = vld [vmem:[#allocation5 + $0xd00] sm:$0xff]
    %v552 = vld [vmem:[#allocation5 + $0xd08] sm:$0xff]
    %v553 = vld [vmem:[#allocation5 + $0xd10] sm:$0xff]
    %v554 = vld [vmem:[#allocation5 + $0xd18] sm:$0xff]
    %v555 = vld [vmem:[#allocation5 + $0xd20] sm:$0xff]
    %v556 = vld [vmem:[#allocation5 + $0xd28] sm:$0xff]
    %v557 = vld [vmem:[#allocation5 + $0xd30] sm:$0xff]
    %v558 = vld [vmem:[#allocation5 + $0xd38] sm:$0xff]
    %v559 = vld [vmem:[#allocation5 + $0xd40] sm:$0xff]
    %v560 = vld [vmem:[#allocation5 + $0xd48] sm:$0xff]
    %v561 = vld [vmem:[#allocation5 + $0xd50] sm:$0xff]
    %v562 = vld [vmem:[#allocation5 + $0xd58] sm:$0xff]
    %v563 = vld [vmem:[#allocation5 + $0xd60] sm:$0xff]
    %v564 = vld [vmem:[#allocation5 + $0xd68] sm:$0xff]
    %v565 = vld [vmem:[#allocation5 + $0xd70] sm:$0xff]
    %v566 = vld [vmem:[#allocation5 + $0xd78] sm:$0xff]
    %v567 = vld [vmem:[#allocation5 + $0xd80] sm:$0xff]
    %v568 = vld [vmem:[#allocation5 + $0xd88] sm:$0xff]
    %v569 = vld [vmem:[#allocation5 + $0xd90] sm:$0xff]
    %v570 = vld [vmem:[#allocation5 + $0xd98] sm:$0xff]
    %v571 = vld [vmem:[#allocation5 + $0xda0] sm:$0xff]
    %v572 = vld [vmem:[#allocation5 + $0xda8] sm:$0xff]
    %v573 = vld [vmem:[#allocation5 + $0xdb0] sm:$0xff]
    %v574 = vld [vmem:[#allocation5 + $0xdb8] sm:$0xff]
    %v575 = vld [vmem:[#allocation5 + $0xdc0] sm:$0xff]
    %v576 = vld [vmem:[#allocation5 + $0xdc8] sm:$0xff]
    %v577 = vld [vmem:[#allocation5 + $0xdd0] sm:$0xff]
    %v578 = vld [vmem:[#allocation5 + $0xdd8] sm:$0xff]
    %v579 = vld [vmem:[#allocation5 + $0xde0] sm:$0xff]
    %v580 = vld [vmem:[#allocation5 + $0xde8] sm:$0xff]
    %v581 = vld [vmem:[#allocation5 + $0xdf0] sm:$0xff]
    %v582 = vld [vmem:[#allocation5 + $0xdf8] sm:$0xff]
    %v583 = vld [vmem:[#allocation5 + $0xe00] sm:$0xff]
    %v584 = vld [vmem:[#allocation5 + $0xe08] sm:$0xff]
    %v585 = vld [vmem:[#allocation5 + $0xe10] sm:$0xff]
    %v586 = vld [vmem:[#allocation5 + $0xe18] sm:$0xff]
    %v587 = vld [vmem:[#allocation5 + $0xe20] sm:$0xff]
    %v588 = vld [vmem:[#allocation5 + $0xe28] sm:$0xff]
    %v589 = vld [vmem:[#allocation5 + $0xe30] sm:$0xff]
    %v590 = vld [vmem:[#allocation5 + $0xe38] sm:$0xff]
    %v591 = vld [vmem:[#allocation5 + $0xe40] sm:$0xff]
    %v592 = vld [vmem:[#allocation5 + $0xe48] sm:$0xff]
    %v593 = vld [vmem:[#allocation5 + $0xe50] sm:$0xff]
    %v594 = vld [vmem:[#allocation5 + $0xe58] sm:$0xff]
    %v595 = vld [vmem:[#allocation5 + $0xe60] sm:$0xff]
    %v596 = vld [vmem:[#allocation5 + $0xe68] sm:$0xff]
    %v597 = vld [vmem:[#allocation5 + $0xe70] sm:$0xff]
    %v598 = vld [vmem:[#allocation5 + $0xe78] sm:$0xff]
    %v599 = vld [vmem:[#allocation5 + $0xe80] sm:$0xff]
    %v600 = vld [vmem:[#allocation5 + $0xe88] sm:$0xff]
    %v601 = vld [vmem:[#allocation5 + $0xe90] sm:$0xff]
    %v602 = vld [vmem:[#allocation5 + $0xe98] sm:$0xff]
    %v603 = vld [vmem:[#allocation5 + $0xea0] sm:$0xff]
    %v604 = vld [vmem:[#allocation5 + $0xea8] sm:$0xff]
    %v605 = vld [vmem:[#allocation5 + $0xeb0] sm:$0xff]
    %v606 = vld [vmem:[#allocation5 + $0xeb8] sm:$0xff]
    %v607 = vld [vmem:[#allocation5 + $0xec0] sm:$0xff]
    %v608 = vld [vmem:[#allocation5 + $0xec8] sm:$0xff]
    %v609 = vld [vmem:[#allocation5 + $0xed0] sm:$0xff]
    %v610 = vld [vmem:[#allocation5 + $0xed8] sm:$0xff]
    %v611 = vld [vmem:[#allocation5 + $0xee0] sm:$0xff]
    %v612 = vld [vmem:[#allocation5 + $0xee8] sm:$0xff]
    %v613 = vld [vmem:[#allocation5 + $0xef0] sm:$0xff]
    %v614 = vld [vmem:[#allocation5 + $0xef8] sm:$0xff]
    %v615 = vld [vmem:[#allocation5 + $0xf00] sm:$0xff]
    %v616 = vld [vmem:[#allocation5 + $0xf08] sm:$0xff]
    %v617 = vld [vmem:[#allocation5 + $0xf10] sm:$0xff]
    %v618 = vld [vmem:[#allocation5 + $0xf18] sm:$0xff]
    %v619 = vld [vmem:[#allocation5 + $0xf20] sm:$0xff]
    %v620 = vld [vmem:[#allocation5 + $0xf28] sm:$0xff]
    %v621 = vld [vmem:[#allocation5 + $0xf30] sm:$0xff]
    %v622 = vld [vmem:[#allocation5 + $0xf38] sm:$0xff]
    %v623 = vld [vmem:[#allocation5 + $0xf40] sm:$0xff]
    %v624 = vld [vmem:[#allocation5 + $0xf48] sm:$0xff]
    %v625 = vld [vmem:[#allocation5 + $0xf50] sm:$0xff]
    %v626 = vld [vmem:[#allocation5 + $0xf58] sm:$0xff]
    %v627 = vld [vmem:[#allocation5 + $0xf60] sm:$0xff]
    %v628 = vld [vmem:[#allocation5 + $0xf68] sm:$0xff]
    %v629 = vld [vmem:[#allocation5 + $0xf70] sm:$0xff]
    %v630 = vld [vmem:[#allocation5 + $0xf78] sm:$0xff]
    %v631 = vld [vmem:[#allocation5 + $0xf80] sm:$0xff]
    %v632 = vld [vmem:[#allocation5 + $0xf88] sm:$0xff]
    %v633 = vld [vmem:[#allocation5 + $0xf90] sm:$0xff]
    %v634 = vld [vmem:[#allocation5 + $0xf98] sm:$0xff]
    %v635 = vld [vmem:[#allocation5 + $0xfa0] sm:$0xff]
    %v636 = vld [vmem:[#allocation5 + $0xfa8] sm:$0xff]
    %v637 = vld [vmem:[#allocation5 + $0xfb0] sm:$0xff]
    %v638 = vld [vmem:[#allocation5 + $0xfb8] sm:$0xff]
    %v639 = vld [vmem:[#allocation5 + $0xfc0] sm:$0xff]
    %v640 = vld [vmem:[#allocation5 + $0xfc8] sm:$0xff]
    %v641 = vld [vmem:[#allocation5 + $0xfd0] sm:$0xff]
    %v642 = vld [vmem:[#allocation5 + $0xfd8] sm:$0xff]
    %v643 = vld [vmem:[#allocation5 + $0xfe0] sm:$0xff]
    %v644 = vld [vmem:[#allocation5 + $0xfe8] sm:$0xff]
    %v645 = vld [vmem:[#allocation5 + $0xff0] sm:$0xff]
    %v646 = vld [vmem:[#allocation5 + $0xff8] sm:$0xff]
    %v1159 = vunpack.c.l.b16 %v135
    %v1160 = vunpack.c.h.b16 %v135
    %v1161 = vunpack.c.l.b16 %v136
    %v1162 = vunpack.c.h.b16 %v136
    %v1163 = vunpack.c.l.b16 %v137
    %v1164 = vunpack.c.h.b16 %v137
    %v1165 = vunpack.c.l.b16 %v138
    %v1166 = vunpack.c.h.b16 %v138
    %v1167 = vunpack.c.l.b16 %v139
    %v1168 = vunpack.c.h.b16 %v139
    %v1169 = vunpack.c.l.b16 %v140
    %v1170 = vunpack.c.h.b16 %v140
    %v1171 = vunpack.c.l.b16 %v141
    %v1172 = vunpack.c.h.b16 %v141
    %v1173 = vunpack.c.l.b16 %v142
    %v1174 = vunpack.c.h.b16 %v142
    %v1175 = vunpack.c.l.b16 %v143
    %v1176 = vunpack.c.h.b16 %v143
    %v1177 = vunpack.c.l.b16 %v144
    %v1178 = vunpack.c.h.b16 %v144
    %v1179 = vunpack.c.l.b16 %v145
    %v1180 = vunpack.c.h.b16 %v145
    %v1181 = vunpack.c.l.b16 %v146
    %v1182 = vunpack.c.h.b16 %v146
    %v1183 = vunpack.c.l.b16 %v147
    %v1184 = vunpack.c.h.b16 %v147
    %v1185 = vunpack.c.l.b16 %v148
    %v1186 = vunpack.c.h.b16 %v148
    %v1187 = vunpack.c.l.b16 %v149
    %v1188 = vunpack.c.h.b16 %v149
    %v1189 = vunpack.c.l.b16 %v150
    %v1190 = vunpack.c.h.b16 %v150
    %v1191 = vunpack.c.l.b16 %v151
    %v1192 = vunpack.c.h.b16 %v151
    %v1193 = vunpack.c.l.b16 %v152
    %v1194 = vunpack.c.h.b16 %v152
    %v1195 = vunpack.c.l.b16 %v153
    %v1196 = vunpack.c.h.b16 %v153
    %v1197 = vunpack.c.l.b16 %v154
    %v1198 = vunpack.c.h.b16 %v154
    %v1199 = vunpack.c.l.b16 %v155
    %v1200 = vunpack.c.h.b16 %v155
    %v1201 = vunpack.c.l.b16 %v156
    %v1202 = vunpack.c.h.b16 %v156
    %v1203 = vunpack.c.l.b16 %v157
    %v1204 = vunpack.c.h.b16 %v157
    %v1205 = vunpack.c.l.b16 %v158
    %v1206 = vunpack.c.h.b16 %v158
    %v1207 = vunpack.c.l.b16 %v159
    %v1208 = vunpack.c.h.b16 %v159
    %v1209 = vunpack.c.l.b16 %v160
    %v1210 = vunpack.c.h.b16 %v160
    %v1211 = vunpack.c.l.b16 %v161
    %v1212 = vunpack.c.h.b16 %v161
    %v1213 = vunpack.c.l.b16 %v162
    %v1214 = vunpack.c.h.b16 %v162
    %v1215 = vunpack.c.l.b16 %v163
    %v1216 = vunpack.c.h.b16 %v163
    %v1217 = vunpack.c.l.b16 %v164
    %v1218 = vunpack.c.h.b16 %v164
    %v1219 = vunpack.c.l.b16 %v165
    %v1220 = vunpack.c.h.b16 %v165
    %v1221 = vunpack.c.l.b16 %v166
    %v1222 = vunpack.c.h.b16 %v166
    %v1223 = vunpack.c.l.b16 %v167
    %v1224 = vunpack.c.h.b16 %v167
    %v1225 = vunpack.c.l.b16 %v168
    %v1226 = vunpack.c.h.b16 %v168
    %v1227 = vunpack.c.l.b16 %v169
    %v1228 = vunpack.c.h.b16 %v169
    %v1229 = vunpack.c.l.b16 %v170
    %v1230 = vunpack.c.h.b16 %v170
    %v1231 = vunpack.c.l.b16 %v171
    %v1232 = vunpack.c.h.b16 %v171
    %v1233 = vunpack.c.l.b16 %v172
    %v1234 = vunpack.c.h.b16 %v172
    %v1235 = vunpack.c.l.b16 %v173
    %v1236 = vunpack.c.h.b16 %v173
    %v1237 = vunpack.c.l.b16 %v174
    %v1238 = vunpack.c.h.b16 %v174
    %v1239 = vunpack.c.l.b16 %v175
    %v1240 = vunpack.c.h.b16 %v175
    %v1241 = vunpack.c.l.b16 %v176
    %v1242 = vunpack.c.h.b16 %v176
    %v1243 = vunpack.c.l.b16 %v177
    %v1244 = vunpack.c.h.b16 %v177
    %v1245 = vunpack.c.l.b16 %v178
    %v1246 = vunpack.c.h.b16 %v178
    %v1247 = vunpack.c.l.b16 %v179
    %v1248 = vunpack.c.h.b16 %v179
    %v1249 = vunpack.c.l.b16 %v180
    %v1250 = vunpack.c.h.b16 %v180
    %v1251 = vunpack.c.l.b16 %v181
    %v1252 = vunpack.c.h.b16 %v181
    %v1253 = vunpack.c.l.b16 %v182
    %v1254 = vunpack.c.h.b16 %v182
    %v1255 = vunpack.c.l.b16 %v183
    %v1256 = vunpack.c.h.b16 %v183
    %v1257 = vunpack.c.l.b16 %v184
    %v1258 = vunpack.c.h.b16 %v184
    %v1259 = vunpack.c.l.b16 %v185
    %v1260 = vunpack.c.h.b16 %v185
    %v1261 = vunpack.c.l.b16 %v186
    %v1262 = vunpack.c.h.b16 %v186
    %v1263 = vunpack.c.l.b16 %v187
    %v1264 = vunpack.c.h.b16 %v187
    %v1265 = vunpack.c.l.b16 %v188
    %v1266 = vunpack.c.h.b16 %v188
    %v1267 = vunpack.c.l.b16 %v189
    %v1268 = vunpack.c.h.b16 %v189
    %v1269 = vunpack.c.l.b16 %v190
    %v1270 = vunpack.c.h.b16 %v190
    %v1271 = vunpack.c.l.b16 %v191
    %v1272 = vunpack.c.h.b16 %v191
    %v1273 = vunpack.c.l.b16 %v192
    %v1274 = vunpack.c.h.b16 %v192
    %v1275 = vunpack.c.l.b16 %v193
    %v1276 = vunpack.c.h.b16 %v193
    %v1277 = vunpack.c.l.b16 %v194
    %v1278 = vunpack.c.h.b16 %v194
    %v1279 = vunpack.c.l.b16 %v195
    %v1280 = vunpack.c.h.b16 %v195
    %v1281 = vunpack.c.l.b16 %v196
    %v1282 = vunpack.c.h.b16 %v196
    %v1283 = vunpack.c.l.b16 %v197
    %v1284 = vunpack.c.h.b16 %v197
    %v1285 = vunpack.c.l.b16 %v198
    %v1286 = vunpack.c.h.b16 %v198
    %v1287 = vunpack.c.l.b16 %v199
    %v1288 = vunpack.c.h.b16 %v199
    %v1289 = vunpack.c.l.b16 %v200
    %v1290 = vunpack.c.h.b16 %v200
    %v1291 = vunpack.c.l.b16 %v201
    %v1292 = vunpack.c.h.b16 %v201
    %v1293 = vunpack.c.l.b16 %v202
    %v1294 = vunpack.c.h.b16 %v202
    %v1295 = vunpack.c.l.b16 %v203
    %v1296 = vunpack.c.h.b16 %v203
    %v1297 = vunpack.c.l.b16 %v204
    %v1298 = vunpack.c.h.b16 %v204
    %v1299 = vunpack.c.l.b16 %v205
    %v1300 = vunpack.c.h.b16 %v205
    %v1301 = vunpack.c.l.b16 %v206
    %v1302 = vunpack.c.h.b16 %v206
    %v1303 = vunpack.c.l.b16 %v207
    %v1304 = vunpack.c.h.b16 %v207
    %v1305 = vunpack.c.l.b16 %v208
    %v1306 = vunpack.c.h.b16 %v208
    %v1307 = vunpack.c.l.b16 %v209
    %v1308 = vunpack.c.h.b16 %v209
    %v1309 = vunpack.c.l.b16 %v210
    %v1310 = vunpack.c.h.b16 %v210
    %v1311 = vunpack.c.l.b16 %v211
    %v1312 = vunpack.c.h.b16 %v211
    %v1313 = vunpack.c.l.b16 %v212
    %v1314 = vunpack.c.h.b16 %v212
    %v1315 = vunpack.c.l.b16 %v213
    %v1316 = vunpack.c.h.b16 %v213
    %v1317 = vunpack.c.l.b16 %v214
    %v1318 = vunpack.c.h.b16 %v214
    %v1319 = vunpack.c.l.b16 %v215
    %v1320 = vunpack.c.h.b16 %v215
    %v1321 = vunpack.c.l.b16 %v216
    %v1322 = vunpack.c.h.b16 %v216
    %v1323 = vunpack.c.l.b16 %v217
    %v1324 = vunpack.c.h.b16 %v217
    %v1325 = vunpack.c.l.b16 %v218
    %v1326 = vunpack.c.h.b16 %v218
    %v1327 = vunpack.c.l.b16 %v219
    %v1328 = vunpack.c.h.b16 %v219
    %v1329 = vunpack.c.l.b16 %v220
    %v1330 = vunpack.c.h.b16 %v220
    %v1331 = vunpack.c.l.b16 %v221
    %v1332 = vunpack.c.h.b16 %v221
    %v1333 = vunpack.c.l.b16 %v222
    %v1334 = vunpack.c.h.b16 %v222
    %v1335 = vunpack.c.l.b16 %v223
    %v1336 = vunpack.c.h.b16 %v223
    %v1337 = vunpack.c.l.b16 %v224
    %v1338 = vunpack.c.h.b16 %v224
    %v1339 = vunpack.c.l.b16 %v225
    %v1340 = vunpack.c.h.b16 %v225
    %v1341 = vunpack.c.l.b16 %v226
    %v1342 = vunpack.c.h.b16 %v226
    %v1343 = vunpack.c.l.b16 %v227
    %v1344 = vunpack.c.h.b16 %v227
    %v1345 = vunpack.c.l.b16 %v228
    %v1346 = vunpack.c.h.b16 %v228
    %v1347 = vunpack.c.l.b16 %v229
    %v1348 = vunpack.c.h.b16 %v229
    %v1349 = vunpack.c.l.b16 %v230
    %v1350 = vunpack.c.h.b16 %v230
    %v1351 = vunpack.c.l.b16 %v231
    %v1352 = vunpack.c.h.b16 %v231
    %v1353 = vunpack.c.l.b16 %v232
    %v1354 = vunpack.c.h.b16 %v232
    %v1355 = vunpack.c.l.b16 %v233
    %v1356 = vunpack.c.h.b16 %v233
    %v1357 = vunpack.c.l.b16 %v234
    %v1358 = vunpack.c.h.b16 %v234
    %v1359 = vunpack.c.l.b16 %v235
    %v1360 = vunpack.c.h.b16 %v235
    %v1361 = vunpack.c.l.b16 %v236
    %v1362 = vunpack.c.h.b16 %v236
    %v1363 = vunpack.c.l.b16 %v237
    %v1364 = vunpack.c.h.b16 %v237
    %v1365 = vunpack.c.l.b16 %v238
    %v1366 = vunpack.c.h.b16 %v238
    %v1367 = vunpack.c.l.b16 %v239
    %v1368 = vunpack.c.h.b16 %v239
    %v1369 = vunpack.c.l.b16 %v240
    %v1370 = vunpack.c.h.b16 %v240
    %v1371 = vunpack.c.l.b16 %v241
    %v1372 = vunpack.c.h.b16 %v241
    %v1373 = vunpack.c.l.b16 %v242
    %v1374 = vunpack.c.h.b16 %v242
    %v1375 = vunpack.c.l.b16 %v243
    %v1376 = vunpack.c.h.b16 %v243
    %v1377 = vunpack.c.l.b16 %v244
    %v1378 = vunpack.c.h.b16 %v244
    %v1379 = vunpack.c.l.b16 %v245
    %v1380 = vunpack.c.h.b16 %v245
    %v1381 = vunpack.c.l.b16 %v246
    %v1382 = vunpack.c.h.b16 %v246
    %v1383 = vunpack.c.l.b16 %v247
    %v1384 = vunpack.c.h.b16 %v247
    %v1385 = vunpack.c.l.b16 %v248
    %v1386 = vunpack.c.h.b16 %v248
    %v1387 = vunpack.c.l.b16 %v249
    %v1388 = vunpack.c.h.b16 %v249
    %v1389 = vunpack.c.l.b16 %v250
    %v1390 = vunpack.c.h.b16 %v250
    %v1391 = vunpack.c.l.b16 %v251
    %v1392 = vunpack.c.h.b16 %v251
    %v1393 = vunpack.c.l.b16 %v252
    %v1394 = vunpack.c.h.b16 %v252
    %v1395 = vunpack.c.l.b16 %v253
    %v1396 = vunpack.c.h.b16 %v253
    %v1397 = vunpack.c.l.b16 %v254
    %v1398 = vunpack.c.h.b16 %v254
    %v1399 = vunpack.c.l.b16 %v255
    %v1400 = vunpack.c.h.b16 %v255
    %v1401 = vunpack.c.l.b16 %v256
    %v1402 = vunpack.c.h.b16 %v256
    %v1403 = vunpack.c.l.b16 %v257
    %v1404 = vunpack.c.h.b16 %v257
    %v1405 = vunpack.c.l.b16 %v258
    %v1406 = vunpack.c.h.b16 %v258
    %v1407 = vunpack.c.l.b16 %v259
    %v1408 = vunpack.c.h.b16 %v259
    %v1409 = vunpack.c.l.b16 %v260
    %v1410 = vunpack.c.h.b16 %v260
    %v1411 = vunpack.c.l.b16 %v261
    %v1412 = vunpack.c.h.b16 %v261
    %v1413 = vunpack.c.l.b16 %v262
    %v1414 = vunpack.c.h.b16 %v262
    %v1415 = vunpack.c.l.b16 %v263
    %v1416 = vunpack.c.h.b16 %v263
    %v1417 = vunpack.c.l.b16 %v264
    %v1418 = vunpack.c.h.b16 %v264
    %v1419 = vunpack.c.l.b16 %v265
    %v1420 = vunpack.c.h.b16 %v265
    %v1421 = vunpack.c.l.b16 %v266
    %v1422 = vunpack.c.h.b16 %v266
    %v1423 = vunpack.c.l.b16 %v267
    %v1424 = vunpack.c.h.b16 %v267
    %v1425 = vunpack.c.l.b16 %v268
    %v1426 = vunpack.c.h.b16 %v268
    %v1427 = vunpack.c.l.b16 %v269
    %v1428 = vunpack.c.h.b16 %v269
    %v1429 = vunpack.c.l.b16 %v270
    %v1430 = vunpack.c.h.b16 %v270
    %v1431 = vunpack.c.l.b16 %v271
    %v1432 = vunpack.c.h.b16 %v271
    %v1433 = vunpack.c.l.b16 %v272
    %v1434 = vunpack.c.h.b16 %v272
    %v1435 = vunpack.c.l.b16 %v273
    %v1436 = vunpack.c.h.b16 %v273
    %v1437 = vunpack.c.l.b16 %v274
    %v1438 = vunpack.c.h.b16 %v274
    %v1439 = vunpack.c.l.b16 %v275
    %v1440 = vunpack.c.h.b16 %v275
    %v1441 = vunpack.c.l.b16 %v276
    %v1442 = vunpack.c.h.b16 %v276
    %v1443 = vunpack.c.l.b16 %v277
    %v1444 = vunpack.c.h.b16 %v277
    %v1445 = vunpack.c.l.b16 %v278
    %v1446 = vunpack.c.h.b16 %v278
    %v1447 = vunpack.c.l.b16 %v279
    %v1448 = vunpack.c.h.b16 %v279
    %v1449 = vunpack.c.l.b16 %v280
    %v1450 = vunpack.c.h.b16 %v280
    %v1451 = vunpack.c.l.b16 %v281
    %v1452 = vunpack.c.h.b16 %v281
    %v1453 = vunpack.c.l.b16 %v282
    %v1454 = vunpack.c.h.b16 %v282
    %v1455 = vunpack.c.l.b16 %v283
    %v1456 = vunpack.c.h.b16 %v283
    %v1457 = vunpack.c.l.b16 %v284
    %v1458 = vunpack.c.h.b16 %v284
    %v1459 = vunpack.c.l.b16 %v285
    %v1460 = vunpack.c.h.b16 %v285
    %v1461 = vunpack.c.l.b16 %v286
    %v1462 = vunpack.c.h.b16 %v286
    %v1463 = vunpack.c.l.b16 %v287
    %v1464 = vunpack.c.h.b16 %v287
    %v1465 = vunpack.c.l.b16 %v288
    %v1466 = vunpack.c.h.b16 %v288
    %v1467 = vunpack.c.l.b16 %v289
    %v1468 = vunpack.c.h.b16 %v289
    %v1469 = vunpack.c.l.b16 %v290
    %v1470 = vunpack.c.h.b16 %v290
    %v1471 = vunpack.c.l.b16 %v291
    %v1472 = vunpack.c.h.b16 %v291
    %v1473 = vunpack.c.l.b16 %v292
    %v1474 = vunpack.c.h.b16 %v292
    %v1475 = vunpack.c.l.b16 %v293
    %v1476 = vunpack.c.h.b16 %v293
    %v1477 = vunpack.c.l.b16 %v294
    %v1478 = vunpack.c.h.b16 %v294
    %v1479 = vunpack.c.l.b16 %v295
    %v1480 = vunpack.c.h.b16 %v295
    %v1481 = vunpack.c.l.b16 %v296
    %v1482 = vunpack.c.h.b16 %v296
    %v1483 = vunpack.c.l.b16 %v297
    %v1484 = vunpack.c.h.b16 %v297
    %v1485 = vunpack.c.l.b16 %v298
    %v1486 = vunpack.c.h.b16 %v298
    %v1487 = vunpack.c.l.b16 %v299
    %v1488 = vunpack.c.h.b16 %v299
    %v1489 = vunpack.c.l.b16 %v300
    %v1490 = vunpack.c.h.b16 %v300
    %v1491 = vunpack.c.l.b16 %v301
    %v1492 = vunpack.c.h.b16 %v301
    %v1493 = vunpack.c.l.b16 %v302
    %v1494 = vunpack.c.h.b16 %v302
    %v1495 = vunpack.c.l.b16 %v303
    %v1496 = vunpack.c.h.b16 %v303
    %v1497 = vunpack.c.l.b16 %v304
    %v1498 = vunpack.c.h.b16 %v304
    %v1499 = vunpack.c.l.b16 %v305
    %v1500 = vunpack.c.h.b16 %v305
    %v1501 = vunpack.c.l.b16 %v306
    %v1502 = vunpack.c.h.b16 %v306
    %v1503 = vunpack.c.l.b16 %v307
    %v1504 = vunpack.c.h.b16 %v307
    %v1505 = vunpack.c.l.b16 %v308
    %v1506 = vunpack.c.h.b16 %v308
    %v1507 = vunpack.c.l.b16 %v309
    %v1508 = vunpack.c.h.b16 %v309
    %v1509 = vunpack.c.l.b16 %v310
    %v1510 = vunpack.c.h.b16 %v310
    %v1511 = vunpack.c.l.b16 %v311
    %v1512 = vunpack.c.h.b16 %v311
    %v1513 = vunpack.c.l.b16 %v312
    %v1514 = vunpack.c.h.b16 %v312
    %v1515 = vunpack.c.l.b16 %v313
    %v1516 = vunpack.c.h.b16 %v313
    %v1517 = vunpack.c.l.b16 %v314
    %v1518 = vunpack.c.h.b16 %v314
    %v1519 = vunpack.c.l.b16 %v315
    %v1520 = vunpack.c.h.b16 %v315
    %v1521 = vunpack.c.l.b16 %v316
    %v1522 = vunpack.c.h.b16 %v316
    %v1523 = vunpack.c.l.b16 %v317
    %v1524 = vunpack.c.h.b16 %v317
    %v1525 = vunpack.c.l.b16 %v318
    %v1526 = vunpack.c.h.b16 %v318
    %v1527 = vunpack.c.l.b16 %v319
    %v1528 = vunpack.c.h.b16 %v319
    %v1529 = vunpack.c.l.b16 %v320
    %v1530 = vunpack.c.h.b16 %v320
    %v1531 = vunpack.c.l.b16 %v321
    %v1532 = vunpack.c.h.b16 %v321
    %v1533 = vunpack.c.l.b16 %v322
    %v1534 = vunpack.c.h.b16 %v322
    %v1535 = vunpack.c.l.b16 %v323
    %v1536 = vunpack.c.h.b16 %v323
    %v1537 = vunpack.c.l.b16 %v324
    %v1538 = vunpack.c.h.b16 %v324
    %v1539 = vunpack.c.l.b16 %v325
    %v1540 = vunpack.c.h.b16 %v325
    %v1541 = vunpack.c.l.b16 %v326
    %v1542 = vunpack.c.h.b16 %v326
    %v1543 = vunpack.c.l.b16 %v327
    %v1544 = vunpack.c.h.b16 %v327
    %v1545 = vunpack.c.l.b16 %v328
    %v1546 = vunpack.c.h.b16 %v328
    %v1547 = vunpack.c.l.b16 %v329
    %v1548 = vunpack.c.h.b16 %v329
    %v1549 = vunpack.c.l.b16 %v330
    %v1550 = vunpack.c.h.b16 %v330
    %v1551 = vunpack.c.l.b16 %v331
    %v1552 = vunpack.c.h.b16 %v331
    %v1553 = vunpack.c.l.b16 %v332
    %v1554 = vunpack.c.h.b16 %v332
    %v1555 = vunpack.c.l.b16 %v333
    %v1556 = vunpack.c.h.b16 %v333
    %v1557 = vunpack.c.l.b16 %v334
    %v1558 = vunpack.c.h.b16 %v334
    %v1559 = vunpack.c.l.b16 %v335
    %v1560 = vunpack.c.h.b16 %v335
    %v1561 = vunpack.c.l.b16 %v336
    %v1562 = vunpack.c.h.b16 %v336
    %v1563 = vunpack.c.l.b16 %v337
    %v1564 = vunpack.c.h.b16 %v337
    %v1565 = vunpack.c.l.b16 %v338
    %v1566 = vunpack.c.h.b16 %v338
    %v1567 = vunpack.c.l.b16 %v339
    %v1568 = vunpack.c.h.b16 %v339
    %v1569 = vunpack.c.l.b16 %v340
    %v1570 = vunpack.c.h.b16 %v340
    %v1571 = vunpack.c.l.b16 %v341
    %v1572 = vunpack.c.h.b16 %v341
    %v1573 = vunpack.c.l.b16 %v342
    %v1574 = vunpack.c.h.b16 %v342
    %v1575 = vunpack.c.l.b16 %v343
    %v1576 = vunpack.c.h.b16 %v343
    %v1577 = vunpack.c.l.b16 %v344
    %v1578 = vunpack.c.h.b16 %v344
    %v1579 = vunpack.c.l.b16 %v345
    %v1580 = vunpack.c.h.b16 %v345
    %v1581 = vunpack.c.l.b16 %v346
    %v1582 = vunpack.c.h.b16 %v346
    %v1583 = vunpack.c.l.b16 %v347
    %v1584 = vunpack.c.h.b16 %v347
    %v1585 = vunpack.c.l.b16 %v348
    %v1586 = vunpack.c.h.b16 %v348
    %v1587 = vunpack.c.l.b16 %v349
    %v1588 = vunpack.c.h.b16 %v349
    %v1589 = vunpack.c.l.b16 %v350
    %v1590 = vunpack.c.h.b16 %v350
    %v1591 = vunpack.c.l.b16 %v351
    %v1592 = vunpack.c.h.b16 %v351
    %v1593 = vunpack.c.l.b16 %v352
    %v1594 = vunpack.c.h.b16 %v352
    %v1595 = vunpack.c.l.b16 %v353
    %v1596 = vunpack.c.h.b16 %v353
    %v1597 = vunpack.c.l.b16 %v354
    %v1598 = vunpack.c.h.b16 %v354
    %v1599 = vunpack.c.l.b16 %v355
    %v1600 = vunpack.c.h.b16 %v355
    %v1601 = vunpack.c.l.b16 %v356
    %v1602 = vunpack.c.h.b16 %v356
    %v1603 = vunpack.c.l.b16 %v357
    %v1604 = vunpack.c.h.b16 %v357
    %v1605 = vunpack.c.l.b16 %v358
    %v1606 = vunpack.c.h.b16 %v358
    %v1607 = vunpack.c.l.b16 %v359
    %v1608 = vunpack.c.h.b16 %v359
    %v1609 = vunpack.c.l.b16 %v360
    %v1610 = vunpack.c.h.b16 %v360
    %v1611 = vunpack.c.l.b16 %v361
    %v1612 = vunpack.c.h.b16 %v361
    %v1613 = vunpack.c.l.b16 %v362
    %v1614 = vunpack.c.h.b16 %v362
    %v1615 = vunpack.c.l.b16 %v363
    %v1616 = vunpack.c.h.b16 %v363
    %v1617 = vunpack.c.l.b16 %v364
    %v1618 = vunpack.c.h.b16 %v364
    %v1619 = vunpack.c.l.b16 %v365
    %v1620 = vunpack.c.h.b16 %v365
    %v1621 = vunpack.c.l.b16 %v366
    %v1622 = vunpack.c.h.b16 %v366
    %v1623 = vunpack.c.l.b16 %v367
    %v1624 = vunpack.c.h.b16 %v367
    %v1625 = vunpack.c.l.b16 %v368
    %v1626 = vunpack.c.h.b16 %v368
    %v1627 = vunpack.c.l.b16 %v369
    %v1628 = vunpack.c.h.b16 %v369
    %v1629 = vunpack.c.l.b16 %v370
    %v1630 = vunpack.c.h.b16 %v370
    %v1631 = vunpack.c.l.b16 %v371
    %v1632 = vunpack.c.h.b16 %v371
    %v1633 = vunpack.c.l.b16 %v372
    %v1634 = vunpack.c.h.b16 %v372
    %v1635 = vunpack.c.l.b16 %v373
    %v1636 = vunpack.c.h.b16 %v373
    %v1637 = vunpack.c.l.b16 %v374
    %v1638 = vunpack.c.h.b16 %v374
    %v1639 = vunpack.c.l.b16 %v375
    %v1640 = vunpack.c.h.b16 %v375
    %v1641 = vunpack.c.l.b16 %v376
    %v1642 = vunpack.c.h.b16 %v376
    %v1643 = vunpack.c.l.b16 %v377
    %v1644 = vunpack.c.h.b16 %v377
    %v1645 = vunpack.c.l.b16 %v378
    %v1646 = vunpack.c.h.b16 %v378
    %v1647 = vunpack.c.l.b16 %v379
    %v1648 = vunpack.c.h.b16 %v379
    %v1649 = vunpack.c.l.b16 %v380
    %v1650 = vunpack.c.h.b16 %v380
    %v1651 = vunpack.c.l.b16 %v381
    %v1652 = vunpack.c.h.b16 %v381
    %v1653 = vunpack.c.l.b16 %v382
    %v1654 = vunpack.c.h.b16 %v382
    %v1655 = vunpack.c.l.b16 %v383
    %v1656 = vunpack.c.h.b16 %v383
    %v1657 = vunpack.c.l.b16 %v384
    %v1658 = vunpack.c.h.b16 %v384
    %v1659 = vunpack.c.l.b16 %v385
    %v1660 = vunpack.c.h.b16 %v385
    %v1661 = vunpack.c.l.b16 %v386
    %v1662 = vunpack.c.h.b16 %v386
    %v1663 = vunpack.c.l.b16 %v387
    %v1664 = vunpack.c.h.b16 %v387
    %v1665 = vunpack.c.l.b16 %v388
    %v1666 = vunpack.c.h.b16 %v388
    %v1667 = vunpack.c.l.b16 %v389
    %v1668 = vunpack.c.h.b16 %v389
    %v1669 = vunpack.c.l.b16 %v390
    %v1670 = vunpack.c.h.b16 %v390
    %v1671 = vunpack.c.l.b16 %v391
    %v1672 = vunpack.c.h.b16 %v391
    %v1673 = vunpack.c.l.b16 %v392
    %v1674 = vunpack.c.h.b16 %v392
    %v1675 = vunpack.c.l.b16 %v393
    %v1676 = vunpack.c.h.b16 %v393
    %v1677 = vunpack.c.l.b16 %v394
    %v1678 = vunpack.c.h.b16 %v394
    %v1679 = vunpack.c.l.b16 %v395
    %v1680 = vunpack.c.h.b16 %v395
    %v1681 = vunpack.c.l.b16 %v396
    %v1682 = vunpack.c.h.b16 %v396
    %v1683 = vunpack.c.l.b16 %v397
    %v1684 = vunpack.c.h.b16 %v397
    %v1685 = vunpack.c.l.b16 %v398
    %v1686 = vunpack.c.h.b16 %v398
    %v1687 = vunpack.c.l.b16 %v399
    %v1688 = vunpack.c.h.b16 %v399
    %v1689 = vunpack.c.l.b16 %v400
    %v1690 = vunpack.c.h.b16 %v400
    %v1691 = vunpack.c.l.b16 %v401
    %v1692 = vunpack.c.h.b16 %v401
    %v1693 = vunpack.c.l.b16 %v402
    %v1694 = vunpack.c.h.b16 %v402
    %v1695 = vunpack.c.l.b16 %v403
    %v1696 = vunpack.c.h.b16 %v403
    %v1697 = vunpack.c.l.b16 %v404
    %v1698 = vunpack.c.h.b16 %v404
    %v1699 = vunpack.c.l.b16 %v405
    %v1700 = vunpack.c.h.b16 %v405
    %v1701 = vunpack.c.l.b16 %v406
    %v1702 = vunpack.c.h.b16 %v406
    %v1703 = vunpack.c.l.b16 %v407
    %v1704 = vunpack.c.h.b16 %v407
    %v1705 = vunpack.c.l.b16 %v408
    %v1706 = vunpack.c.h.b16 %v408
    %v1707 = vunpack.c.l.b16 %v409
    %v1708 = vunpack.c.h.b16 %v409
    %v1709 = vunpack.c.l.b16 %v410
    %v1710 = vunpack.c.h.b16 %v410
    %v1711 = vunpack.c.l.b16 %v411
    %v1712 = vunpack.c.h.b16 %v411
    %v1713 = vunpack.c.l.b16 %v412
    %v1714 = vunpack.c.h.b16 %v412
    %v1715 = vunpack.c.l.b16 %v413
    %v1716 = vunpack.c.h.b16 %v413
    %v1717 = vunpack.c.l.b16 %v414
    %v1718 = vunpack.c.h.b16 %v414
    %v1719 = vunpack.c.l.b16 %v415
    %v1720 = vunpack.c.h.b16 %v415
    %v1721 = vunpack.c.l.b16 %v416
    %v1722 = vunpack.c.h.b16 %v416
    %v1723 = vunpack.c.l.b16 %v417
    %v1724 = vunpack.c.h.b16 %v417
    %v1725 = vunpack.c.l.b16 %v418
    %v1726 = vunpack.c.h.b16 %v418
    %v1727 = vunpack.c.l.b16 %v419
    %v1728 = vunpack.c.h.b16 %v419
    %v1729 = vunpack.c.l.b16 %v420
    %v1730 = vunpack.c.h.b16 %v420
    %v1731 = vunpack.c.l.b16 %v421
    %v1732 = vunpack.c.h.b16 %v421
    %v1733 = vunpack.c.l.b16 %v422
    %v1734 = vunpack.c.h.b16 %v422
    %v1735 = vunpack.c.l.b16 %v423
    %v1736 = vunpack.c.h.b16 %v423
    %v1737 = vunpack.c.l.b16 %v424
    %v1738 = vunpack.c.h.b16 %v424
    %v1739 = vunpack.c.l.b16 %v425
    %v1740 = vunpack.c.h.b16 %v425
    %v1741 = vunpack.c.l.b16 %v426
    %v1742 = vunpack.c.h.b16 %v426
    %v1743 = vunpack.c.l.b16 %v427
    %v1744 = vunpack.c.h.b16 %v427
    %v1745 = vunpack.c.l.b16 %v428
    %v1746 = vunpack.c.h.b16 %v428
    %v1747 = vunpack.c.l.b16 %v429
    %v1748 = vunpack.c.h.b16 %v429
    %v1749 = vunpack.c.l.b16 %v430
    %v1750 = vunpack.c.h.b16 %v430
    %v1751 = vunpack.c.l.b16 %v431
    %v1752 = vunpack.c.h.b16 %v431
    %v1753 = vunpack.c.l.b16 %v432
    %v1754 = vunpack.c.h.b16 %v432
    %v1755 = vunpack.c.l.b16 %v433
    %v1756 = vunpack.c.h.b16 %v433
    %v1757 = vunpack.c.l.b16 %v434
    %v1758 = vunpack.c.h.b16 %v434
    %v1759 = vunpack.c.l.b16 %v435
    %v1760 = vunpack.c.h.b16 %v435
    %v1761 = vunpack.c.l.b16 %v436
    %v1762 = vunpack.c.h.b16 %v436
    %v1763 = vunpack.c.l.b16 %v437
    %v1764 = vunpack.c.h.b16 %v437
    %v1765 = vunpack.c.l.b16 %v438
    %v1766 = vunpack.c.h.b16 %v438
    %v1767 = vunpack.c.l.b16 %v439
    %v1768 = vunpack.c.h.b16 %v439
    %v1769 = vunpack.c.l.b16 %v440
    %v1770 = vunpack.c.h.b16 %v440
    %v1771 = vunpack.c.l.b16 %v441
    %v1772 = vunpack.c.h.b16 %v441
    %v1773 = vunpack.c.l.b16 %v442
    %v1774 = vunpack.c.h.b16 %v442
    %v1775 = vunpack.c.l.b16 %v443
    %v1776 = vunpack.c.h.b16 %v443
    %v1777 = vunpack.c.l.b16 %v444
    %v1778 = vunpack.c.h.b16 %v444
    %v1779 = vunpack.c.l.b16 %v445
    %v1780 = vunpack.c.h.b16 %v445
    %v1781 = vunpack.c.l.b16 %v446
    %v1782 = vunpack.c.h.b16 %v446
    %v1783 = vunpack.c.l.b16 %v447
    %v1784 = vunpack.c.h.b16 %v447
    %v1785 = vunpack.c.l.b16 %v448
    %v1786 = vunpack.c.h.b16 %v448
    %v1787 = vunpack.c.l.b16 %v449
    %v1788 = vunpack.c.h.b16 %v449
    %v1789 = vunpack.c.l.b16 %v450
    %v1790 = vunpack.c.h.b16 %v450
    %v1791 = vunpack.c.l.b16 %v451
    %v1792 = vunpack.c.h.b16 %v451
    %v1793 = vunpack.c.l.b16 %v452
    %v1794 = vunpack.c.h.b16 %v452
    %v1795 = vunpack.c.l.b16 %v453
    %v1796 = vunpack.c.h.b16 %v453
    %v1797 = vunpack.c.l.b16 %v454
    %v1798 = vunpack.c.h.b16 %v454
    %v1799 = vunpack.c.l.b16 %v455
    %v1800 = vunpack.c.h.b16 %v455
    %v1801 = vunpack.c.l.b16 %v456
    %v1802 = vunpack.c.h.b16 %v456
    %v1803 = vunpack.c.l.b16 %v457
    %v1804 = vunpack.c.h.b16 %v457
    %v1805 = vunpack.c.l.b16 %v458
    %v1806 = vunpack.c.h.b16 %v458
    %v1807 = vunpack.c.l.b16 %v459
    %v1808 = vunpack.c.h.b16 %v459
    %v1809 = vunpack.c.l.b16 %v460
    %v1810 = vunpack.c.h.b16 %v460
    %v1811 = vunpack.c.l.b16 %v461
    %v1812 = vunpack.c.h.b16 %v461
    %v1813 = vunpack.c.l.b16 %v462
    %v1814 = vunpack.c.h.b16 %v462
    %v1815 = vunpack.c.l.b16 %v463
    %v1816 = vunpack.c.h.b16 %v463
    %v1817 = vunpack.c.l.b16 %v464
    %v1818 = vunpack.c.h.b16 %v464
    %v1819 = vunpack.c.l.b16 %v465
    %v1820 = vunpack.c.h.b16 %v465
    %v1821 = vunpack.c.l.b16 %v466
    %v1822 = vunpack.c.h.b16 %v466
    %v1823 = vunpack.c.l.b16 %v467
    %v1824 = vunpack.c.h.b16 %v467
    %v1825 = vunpack.c.l.b16 %v468
    %v1826 = vunpack.c.h.b16 %v468
    %v1827 = vunpack.c.l.b16 %v469
    %v1828 = vunpack.c.h.b16 %v469
    %v1829 = vunpack.c.l.b16 %v470
    %v1830 = vunpack.c.h.b16 %v470
    %v1831 = vunpack.c.l.b16 %v471
    %v1832 = vunpack.c.h.b16 %v471
    %v1833 = vunpack.c.l.b16 %v472
    %v1834 = vunpack.c.h.b16 %v472
    %v1835 = vunpack.c.l.b16 %v473
    %v1836 = vunpack.c.h.b16 %v473
    %v1837 = vunpack.c.l.b16 %v474
    %v1838 = vunpack.c.h.b16 %v474
    %v1839 = vunpack.c.l.b16 %v475
    %v1840 = vunpack.c.h.b16 %v475
    %v1841 = vunpack.c.l.b16 %v476
    %v1842 = vunpack.c.h.b16 %v476
    %v1843 = vunpack.c.l.b16 %v477
    %v1844 = vunpack.c.h.b16 %v477
    %v1845 = vunpack.c.l.b16 %v478
    %v1846 = vunpack.c.h.b16 %v478
    %v1847 = vunpack.c.l.b16 %v479
    %v1848 = vunpack.c.h.b16 %v479
    %v1849 = vunpack.c.l.b16 %v480
    %v1850 = vunpack.c.h.b16 %v480
    %v1851 = vunpack.c.l.b16 %v481
    %v1852 = vunpack.c.h.b16 %v481
    %v1853 = vunpack.c.l.b16 %v482
    %v1854 = vunpack.c.h.b16 %v482
    %v1855 = vunpack.c.l.b16 %v483
    %v1856 = vunpack.c.h.b16 %v483
    %v1857 = vunpack.c.l.b16 %v484
    %v1858 = vunpack.c.h.b16 %v484
    %v1859 = vunpack.c.l.b16 %v485
    %v1860 = vunpack.c.h.b16 %v485
    %v1861 = vunpack.c.l.b16 %v486
    %v1862 = vunpack.c.h.b16 %v486
    %v1863 = vunpack.c.l.b16 %v487
    %v1864 = vunpack.c.h.b16 %v487
    %v1865 = vunpack.c.l.b16 %v488
    %v1866 = vunpack.c.h.b16 %v488
    %v1867 = vunpack.c.l.b16 %v489
    %v1868 = vunpack.c.h.b16 %v489
    %v1869 = vunpack.c.l.b16 %v490
    %v1870 = vunpack.c.h.b16 %v490
    %v1871 = vunpack.c.l.b16 %v491
    %v1872 = vunpack.c.h.b16 %v491
    %v1873 = vunpack.c.l.b16 %v492
    %v1874 = vunpack.c.h.b16 %v492
    %v1875 = vunpack.c.l.b16 %v493
    %v1876 = vunpack.c.h.b16 %v493
    %v1877 = vunpack.c.l.b16 %v494
    %v1878 = vunpack.c.h.b16 %v494
    %v1879 = vunpack.c.l.b16 %v495
    %v1880 = vunpack.c.h.b16 %v495
    %v1881 = vunpack.c.l.b16 %v496
    %v1882 = vunpack.c.h.b16 %v496
    %v1883 = vunpack.c.l.b16 %v497
    %v1884 = vunpack.c.h.b16 %v497
    %v1885 = vunpack.c.l.b16 %v498
    %v1886 = vunpack.c.h.b16 %v498
    %v1887 = vunpack.c.l.b16 %v499
    %v1888 = vunpack.c.h.b16 %v499
    %v1889 = vunpack.c.l.b16 %v500
    %v1890 = vunpack.c.h.b16 %v500
    %v1891 = vunpack.c.l.b16 %v501
    %v1892 = vunpack.c.h.b16 %v501
    %v1893 = vunpack.c.l.b16 %v502
    %v1894 = vunpack.c.h.b16 %v502
    %v1895 = vunpack.c.l.b16 %v503
    %v1896 = vunpack.c.h.b16 %v503
    %v1897 = vunpack.c.l.b16 %v504
    %v1898 = vunpack.c.h.b16 %v504
    %v1899 = vunpack.c.l.b16 %v505
    %v1900 = vunpack.c.h.b16 %v505
    %v1901 = vunpack.c.l.b16 %v506
    %v1902 = vunpack.c.h.b16 %v506
    %v1903 = vunpack.c.l.b16 %v507
    %v1904 = vunpack.c.h.b16 %v507
    %v1905 = vunpack.c.l.b16 %v508
    %v1906 = vunpack.c.h.b16 %v508
    %v1907 = vunpack.c.l.b16 %v509
    %v1908 = vunpack.c.h.b16 %v509
    %v1909 = vunpack.c.l.b16 %v510
    %v1910 = vunpack.c.h.b16 %v510
    %v1911 = vunpack.c.l.b16 %v511
    %v1912 = vunpack.c.h.b16 %v511
    %v1913 = vunpack.c.l.b16 %v512
    %v1914 = vunpack.c.h.b16 %v512
    %v1915 = vunpack.c.l.b16 %v513
    %v1916 = vunpack.c.h.b16 %v513
    %v1917 = vunpack.c.l.b16 %v514
    %v1918 = vunpack.c.h.b16 %v514
    %v1919 = vunpack.c.l.b16 %v515
    %v1920 = vunpack.c.h.b16 %v515
    %v1921 = vunpack.c.l.b16 %v516
    %v1922 = vunpack.c.h.b16 %v516
    %v1923 = vunpack.c.l.b16 %v517
    %v1924 = vunpack.c.h.b16 %v517
    %v1925 = vunpack.c.l.b16 %v518
    %v1926 = vunpack.c.h.b16 %v518
    %v1927 = vunpack.c.l.b16 %v519
    %v1928 = vunpack.c.h.b16 %v519
    %v1929 = vunpack.c.l.b16 %v520
    %v1930 = vunpack.c.h.b16 %v520
    %v1931 = vunpack.c.l.b16 %v521
    %v1932 = vunpack.c.h.b16 %v521
    %v1933 = vunpack.c.l.b16 %v522
    %v1934 = vunpack.c.h.b16 %v522
    %v1935 = vunpack.c.l.b16 %v523
    %v1936 = vunpack.c.h.b16 %v523
    %v1937 = vunpack.c.l.b16 %v524
    %v1938 = vunpack.c.h.b16 %v524
    %v1939 = vunpack.c.l.b16 %v525
    %v1940 = vunpack.c.h.b16 %v525
    %v1941 = vunpack.c.l.b16 %v526
    %v1942 = vunpack.c.h.b16 %v526
    %v1943 = vunpack.c.l.b16 %v527
    %v1944 = vunpack.c.h.b16 %v527
    %v1945 = vunpack.c.l.b16 %v528
    %v1946 = vunpack.c.h.b16 %v528
    %v1947 = vunpack.c.l.b16 %v529
    %v1948 = vunpack.c.h.b16 %v529
    %v1949 = vunpack.c.l.b16 %v530
    %v1950 = vunpack.c.h.b16 %v530
    %v1951 = vunpack.c.l.b16 %v531
    %v1952 = vunpack.c.h.b16 %v531
    %v1953 = vunpack.c.l.b16 %v532
    %v1954 = vunpack.c.h.b16 %v532
    %v1955 = vunpack.c.l.b16 %v533
    %v1956 = vunpack.c.h.b16 %v533
    %v1957 = vunpack.c.l.b16 %v534
    %v1958 = vunpack.c.h.b16 %v534
    %v1959 = vunpack.c.l.b16 %v535
    %v1960 = vunpack.c.h.b16 %v535
    %v1961 = vunpack.c.l.b16 %v536
    %v1962 = vunpack.c.h.b16 %v536
    %v1963 = vunpack.c.l.b16 %v537
    %v1964 = vunpack.c.h.b16 %v537
    %v1965 = vunpack.c.l.b16 %v538
    %v1966 = vunpack.c.h.b16 %v538
    %v1967 = vunpack.c.l.b16 %v539
    %v1968 = vunpack.c.h.b16 %v539
    %v1969 = vunpack.c.l.b16 %v540
    %v1970 = vunpack.c.h.b16 %v540
    %v1971 = vunpack.c.l.b16 %v541
    %v1972 = vunpack.c.h.b16 %v541
    %v1973 = vunpack.c.l.b16 %v542
    %v1974 = vunpack.c.h.b16 %v542
    %v1975 = vunpack.c.l.b16 %v543
    %v1976 = vunpack.c.h.b16 %v543
    %v1977 = vunpack.c.l.b16 %v544
    %v1978 = vunpack.c.h.b16 %v544
    %v1979 = vunpack.c.l.b16 %v545
    %v1980 = vunpack.c.h.b16 %v545
    %v1981 = vunpack.c.l.b16 %v546
    %v1982 = vunpack.c.h.b16 %v546
    %v1983 = vunpack.c.l.b16 %v547
    %v1984 = vunpack.c.h.b16 %v547
    %v1985 = vunpack.c.l.b16 %v548
    %v1986 = vunpack.c.h.b16 %v548
    %v1987 = vunpack.c.l.b16 %v549
    %v1988 = vunpack.c.h.b16 %v549
    %v1989 = vunpack.c.l.b16 %v550
    %v1990 = vunpack.c.h.b16 %v550
    %v1991 = vunpack.c.l.b16 %v551
    %v1992 = vunpack.c.h.b16 %v551
    %v1993 = vunpack.c.l.b16 %v552
    %v1994 = vunpack.c.h.b16 %v552
    %v1995 = vunpack.c.l.b16 %v553
    %v1996 = vunpack.c.h.b16 %v553
    %v1997 = vunpack.c.l.b16 %v554
    %v1998 = vunpack.c.h.b16 %v554
    %v1999 = vunpack.c.l.b16 %v555
    %v2000 = vunpack.c.h.b16 %v555
    %v2001 = vunpack.c.l.b16 %v556
    %v2002 = vunpack.c.h.b16 %v556
    %v2003 = vunpack.c.l.b16 %v557
    %v2004 = vunpack.c.h.b16 %v557
    %v2005 = vunpack.c.l.b16 %v558
    %v2006 = vunpack.c.h.b16 %v558
    %v2007 = vunpack.c.l.b16 %v559
    %v2008 = vunpack.c.h.b16 %v559
    %v2009 = vunpack.c.l.b16 %v560
    %v2010 = vunpack.c.h.b16 %v560
    %v2011 = vunpack.c.l.b16 %v561
    %v2012 = vunpack.c.h.b16 %v561
    %v2013 = vunpack.c.l.b16 %v562
    %v2014 = vunpack.c.h.b16 %v562
    %v2015 = vunpack.c.l.b16 %v563
    %v2016 = vunpack.c.h.b16 %v563
    %v2017 = vunpack.c.l.b16 %v564
    %v2018 = vunpack.c.h.b16 %v564
    %v2019 = vunpack.c.l.b16 %v565
    %v2020 = vunpack.c.h.b16 %v565
    %v2021 = vunpack.c.l.b16 %v566
    %v2022 = vunpack.c.h.b16 %v566
    %v2023 = vunpack.c.l.b16 %v567
    %v2024 = vunpack.c.h.b16 %v567
    %v2025 = vunpack.c.l.b16 %v568
    %v2026 = vunpack.c.h.b16 %v568
    %v2027 = vunpack.c.l.b16 %v569
    %v2028 = vunpack.c.h.b16 %v569
    %v2029 = vunpack.c.l.b16 %v570
    %v2030 = vunpack.c.h.b16 %v570
    %v2031 = vunpack.c.l.b16 %v571
    %v2032 = vunpack.c.h.b16 %v571
    %v2033 = vunpack.c.l.b16 %v572
    %v2034 = vunpack.c.h.b16 %v572
    %v2035 = vunpack.c.l.b16 %v573
    %v2036 = vunpack.c.h.b16 %v573
    %v2037 = vunpack.c.l.b16 %v574
    %v2038 = vunpack.c.h.b16 %v574
    %v2039 = vunpack.c.l.b16 %v575
    %v2040 = vunpack.c.h.b16 %v575
    %v2041 = vunpack.c.l.b16 %v576
    %v2042 = vunpack.c.h.b16 %v576
    %v2043 = vunpack.c.l.b16 %v577
    %v2044 = vunpack.c.h.b16 %v577
    %v2045 = vunpack.c.l.b16 %v578
    %v2046 = vunpack.c.h.b16 %v578
    %v2047 = vunpack.c.l.b16 %v579
    %v2048 = vunpack.c.h.b16 %v579
    %v2049 = vunpack.c.l.b16 %v580
    %v2050 = vunpack.c.h.b16 %v580
    %v2051 = vunpack.c.l.b16 %v581
    %v2052 = vunpack.c.h.b16 %v581
    %v2053 = vunpack.c.l.b16 %v582
    %v2054 = vunpack.c.h.b16 %v582
    %v2055 = vunpack.c.l.b16 %v583
    %v2056 = vunpack.c.h.b16 %v583
    %v2057 = vunpack.c.l.b16 %v584
    %v2058 = vunpack.c.h.b16 %v584
    %v2059 = vunpack.c.l.b16 %v585
    %v2060 = vunpack.c.h.b16 %v585
    %v2061 = vunpack.c.l.b16 %v586
    %v2062 = vunpack.c.h.b16 %v586
    %v2063 = vunpack.c.l.b16 %v587
    %v2064 = vunpack.c.h.b16 %v587
    %v2065 = vunpack.c.l.b16 %v588
    %v2066 = vunpack.c.h.b16 %v588
    %v2067 = vunpack.c.l.b16 %v589
    %v2068 = vunpack.c.h.b16 %v589
    %v2069 = vunpack.c.l.b16 %v590
    %v2070 = vunpack.c.h.b16 %v590
    %v2071 = vunpack.c.l.b16 %v591
    %v2072 = vunpack.c.h.b16 %v591
    %v2073 = vunpack.c.l.b16 %v592
    %v2074 = vunpack.c.h.b16 %v592
    %v2075 = vunpack.c.l.b16 %v593
    %v2076 = vunpack.c.h.b16 %v593
    %v2077 = vunpack.c.l.b16 %v594
    %v2078 = vunpack.c.h.b16 %v594
    %v2079 = vunpack.c.l.b16 %v595
    %v2080 = vunpack.c.h.b16 %v595
    %v2081 = vunpack.c.l.b16 %v596
    %v2082 = vunpack.c.h.b16 %v596
    %v2083 = vunpack.c.l.b16 %v597
    %v2084 = vunpack.c.h.b16 %v597
    %v2085 = vunpack.c.l.b16 %v598
    %v2086 = vunpack.c.h.b16 %v598
    %v2087 = vunpack.c.l.b16 %v599
    %v2088 = vunpack.c.h.b16 %v599
    %v2089 = vunpack.c.l.b16 %v600
    %v2090 = vunpack.c.h.b16 %v600
    %v2091 = vunpack.c.l.b16 %v601
    %v2092 = vunpack.c.h.b16 %v601
    %v2093 = vunpack.c.l.b16 %v602
    %v2094 = vunpack.c.h.b16 %v602
    %v2095 = vunpack.c.l.b16 %v603
    %v2096 = vunpack.c.h.b16 %v603
    %v2097 = vunpack.c.l.b16 %v604
    %v2098 = vunpack.c.h.b16 %v604
    %v2099 = vunpack.c.l.b16 %v605
    %v2100 = vunpack.c.h.b16 %v605
    %v2101 = vunpack.c.l.b16 %v606
    %v2102 = vunpack.c.h.b16 %v606
    %v2103 = vunpack.c.l.b16 %v607
    %v2104 = vunpack.c.h.b16 %v607
    %v2105 = vunpack.c.l.b16 %v608
    %v2106 = vunpack.c.h.b16 %v608
    %v2107 = vunpack.c.l.b16 %v609
    %v2108 = vunpack.c.h.b16 %v609
    %v2109 = vunpack.c.l.b16 %v610
    %v2110 = vunpack.c.h.b16 %v610
    %v2111 = vunpack.c.l.b16 %v611
    %v2112 = vunpack.c.h.b16 %v611
    %v2113 = vunpack.c.l.b16 %v612
    %v2114 = vunpack.c.h.b16 %v612
    %v2115 = vunpack.c.l.b16 %v613
    %v2116 = vunpack.c.h.b16 %v613
    %v2117 = vunpack.c.l.b16 %v614
    %v2118 = vunpack.c.h.b16 %v614
    %v2119 = vunpack.c.l.b16 %v615
    %v2120 = vunpack.c.h.b16 %v615
    %v2121 = vunpack.c.l.b16 %v616
    %v2122 = vunpack.c.h.b16 %v616
    %v2123 = vunpack.c.l.b16 %v617
    %v2124 = vunpack.c.h.b16 %v617
    %v2125 = vunpack.c.l.b16 %v618
    %v2126 = vunpack.c.h.b16 %v618
    %v2127 = vunpack.c.l.b16 %v619
    %v2128 = vunpack.c.h.b16 %v619
    %v2129 = vunpack.c.l.b16 %v620
    %v2130 = vunpack.c.h.b16 %v620
    %v2131 = vunpack.c.l.b16 %v621
    %v2132 = vunpack.c.h.b16 %v621
    %v2133 = vunpack.c.l.b16 %v622
    %v2134 = vunpack.c.h.b16 %v622
    %v2135 = vunpack.c.l.b16 %v623
    %v2136 = vunpack.c.h.b16 %v623
    %v2137 = vunpack.c.l.b16 %v624
    %v2138 = vunpack.c.h.b16 %v624
    %v2139 = vunpack.c.l.b16 %v625
    %v2140 = vunpack.c.h.b16 %v625
    %v2141 = vunpack.c.l.b16 %v626
    %v2142 = vunpack.c.h.b16 %v626
    %v2143 = vunpack.c.l.b16 %v627
    %v2144 = vunpack.c.h.b16 %v627
    %v2145 = vunpack.c.l.b16 %v628
    %v2146 = vunpack.c.h.b16 %v628
    %v2147 = vunpack.c.l.b16 %v629
    %v2148 = vunpack.c.h.b16 %v629
    %v2149 = vunpack.c.l.b16 %v630
    %v2150 = vunpack.c.h.b16 %v630
    %v2151 = vunpack.c.l.b16 %v631
    %v2152 = vunpack.c.h.b16 %v631
    %v2153 = vunpack.c.l.b16 %v632
    %v2154 = vunpack.c.h.b16 %v632
    %v2155 = vunpack.c.l.b16 %v633
    %v2156 = vunpack.c.h.b16 %v633
    %v2157 = vunpack.c.l.b16 %v634
    %v2158 = vunpack.c.h.b16 %v634
    %v2159 = vunpack.c.l.b16 %v635
    %v2160 = vunpack.c.h.b16 %v635
    %v2161 = vunpack.c.l.b16 %v636
    %v2162 = vunpack.c.h.b16 %v636
    %v2163 = vunpack.c.l.b16 %v637
    %v2164 = vunpack.c.h.b16 %v637
    %v2165 = vunpack.c.l.b16 %v638
    %v2166 = vunpack.c.h.b16 %v638
    %v2167 = vunpack.c.l.b16 %v639
    %v2168 = vunpack.c.h.b16 %v639
    %v2169 = vunpack.c.l.b16 %v640
    %v2170 = vunpack.c.h.b16 %v640
    %v2171 = vunpack.c.l.b16 %v641
    %v2172 = vunpack.c.h.b16 %v641
    %v2173 = vunpack.c.l.b16 %v642
    %v2174 = vunpack.c.h.b16 %v642
    %v2175 = vunpack.c.l.b16 %v643
    %v2176 = vunpack.c.h.b16 %v643
    %v2177 = vunpack.c.l.b16 %v644
    %v2178 = vunpack.c.h.b16 %v644
    %v2179 = vunpack.c.l.b16 %v645
    %v2180 = vunpack.c.h.b16 %v645
    %v2181 = vunpack.c.l.b16 %v646
    %v2182 = vunpack.c.h.b16 %v646
    %v2183 = vpack.c.b16 %v1167, %v1159
    %v2184 = vpack.c.b16 %v1168, %v1160
    %v2185 = vpack.c.b16 %v1169, %v1161
    %v2186 = vpack.c.b16 %v1170, %v1162
    %v2187 = vpack.c.b16 %v1171, %v1163
    %v2188 = vpack.c.b16 %v1172, %v1164
    %v2189 = vpack.c.b16 %v1173, %v1165
    %v2190 = vpack.c.b16 %v1174, %v1166
    %v2191 = vpack.c.b16 %v1183, %v1175
    %v2192 = vpack.c.b16 %v1184, %v1176
    %v2193 = vpack.c.b16 %v1185, %v1177
    %v2194 = vpack.c.b16 %v1186, %v1178
    %v2195 = vpack.c.b16 %v1187, %v1179
    %v2196 = vpack.c.b16 %v1188, %v1180
    %v2197 = vpack.c.b16 %v1189, %v1181
    %v2198 = vpack.c.b16 %v1190, %v1182
    %v2199 = vpack.c.b16 %v1199, %v1191
    %v2200 = vpack.c.b16 %v1200, %v1192
    %v2201 = vpack.c.b16 %v1201, %v1193
    %v2202 = vpack.c.b16 %v1202, %v1194
    %v2203 = vpack.c.b16 %v1203, %v1195
    %v2204 = vpack.c.b16 %v1204, %v1196
    %v2205 = vpack.c.b16 %v1205, %v1197
    %v2206 = vpack.c.b16 %v1206, %v1198
    %v2207 = vpack.c.b16 %v1215, %v1207
    %v2208 = vpack.c.b16 %v1216, %v1208
    %v2209 = vpack.c.b16 %v1217, %v1209
    %v2210 = vpack.c.b16 %v1218, %v1210
    %v2211 = vpack.c.b16 %v1219, %v1211
    %v2212 = vpack.c.b16 %v1220, %v1212
    %v2213 = vpack.c.b16 %v1221, %v1213
    %v2214 = vpack.c.b16 %v1222, %v1214
    %v2215 = vpack.c.b16 %v1231, %v1223
    %v2216 = vpack.c.b16 %v1232, %v1224
    %v2217 = vpack.c.b16 %v1233, %v1225
    %v2218 = vpack.c.b16 %v1234, %v1226
    %v2219 = vpack.c.b16 %v1235, %v1227
    %v2220 = vpack.c.b16 %v1236, %v1228
    %v2221 = vpack.c.b16 %v1237, %v1229
    %v2222 = vpack.c.b16 %v1238, %v1230
    %v2223 = vpack.c.b16 %v1247, %v1239
    %v2224 = vpack.c.b16 %v1248, %v1240
    %v2225 = vpack.c.b16 %v1249, %v1241
    %v2226 = vpack.c.b16 %v1250, %v1242
    %v2227 = vpack.c.b16 %v1251, %v1243
    %v2228 = vpack.c.b16 %v1252, %v1244
    %v2229 = vpack.c.b16 %v1253, %v1245
    %v2230 = vpack.c.b16 %v1254, %v1246
    %v2231 = vpack.c.b16 %v1263, %v1255
    %v2232 = vpack.c.b16 %v1264, %v1256
    %v2233 = vpack.c.b16 %v1265, %v1257
    %v2234 = vpack.c.b16 %v1266, %v1258
    %v2235 = vpack.c.b16 %v1267, %v1259
    %v2236 = vpack.c.b16 %v1268, %v1260
    %v2237 = vpack.c.b16 %v1269, %v1261
    %v2238 = vpack.c.b16 %v1270, %v1262
    %v2239 = vpack.c.b16 %v1279, %v1271
    %v2240 = vpack.c.b16 %v1280, %v1272
    %v2241 = vpack.c.b16 %v1281, %v1273
    %v2242 = vpack.c.b16 %v1282, %v1274
    %v2243 = vpack.c.b16 %v1283, %v1275
    %v2244 = vpack.c.b16 %v1284, %v1276
    %v2245 = vpack.c.b16 %v1285, %v1277
    %v2246 = vpack.c.b16 %v1286, %v1278
    %v2247 = vpack.c.b16 %v1295, %v1287
    %v2248 = vpack.c.b16 %v1296, %v1288
    %v2249 = vpack.c.b16 %v1297, %v1289
    %v2250 = vpack.c.b16 %v1298, %v1290
    %v2251 = vpack.c.b16 %v1299, %v1291
    %v2252 = vpack.c.b16 %v1300, %v1292
    %v2253 = vpack.c.b16 %v1301, %v1293
    %v2254 = vpack.c.b16 %v1302, %v1294
    %v2255 = vpack.c.b16 %v1311, %v1303
    %v2256 = vpack.c.b16 %v1312, %v1304
    %v2257 = vpack.c.b16 %v1313, %v1305
    %v2258 = vpack.c.b16 %v1314, %v1306
    %v2259 = vpack.c.b16 %v1315, %v1307
    %v2260 = vpack.c.b16 %v1316, %v1308
    %v2261 = vpack.c.b16 %v1317, %v1309
    %v2262 = vpack.c.b16 %v1318, %v1310
    %v2263 = vpack.c.b16 %v1327, %v1319
    %v2264 = vpack.c.b16 %v1328, %v1320
    %v2265 = vpack.c.b16 %v1329, %v1321
    %v2266 = vpack.c.b16 %v1330, %v1322
    %v2267 = vpack.c.b16 %v1331, %v1323
    %v2268 = vpack.c.b16 %v1332, %v1324
    %v2269 = vpack.c.b16 %v1333, %v1325
    %v2270 = vpack.c.b16 %v1334, %v1326
    %v2271 = vpack.c.b16 %v1343, %v1335
    %v2272 = vpack.c.b16 %v1344, %v1336
    %v2273 = vpack.c.b16 %v1345, %v1337
    %v2274 = vpack.c.b16 %v1346, %v1338
    %v2275 = vpack.c.b16 %v1347, %v1339
    %v2276 = vpack.c.b16 %v1348, %v1340
    %v2277 = vpack.c.b16 %v1349, %v1341
    %v2278 = vpack.c.b16 %v1350, %v1342
    %v2279 = vpack.c.b16 %v1359, %v1351
    %v2280 = vpack.c.b16 %v1360, %v1352
    %v2281 = vpack.c.b16 %v1361, %v1353
    %v2282 = vpack.c.b16 %v1362, %v1354
    %v2283 = vpack.c.b16 %v1363, %v1355
    %v2284 = vpack.c.b16 %v1364, %v1356
    %v2285 = vpack.c.b16 %v1365, %v1357
    %v2286 = vpack.c.b16 %v1366, %v1358
    %v2287 = vpack.c.b16 %v1375, %v1367
    %v2288 = vpack.c.b16 %v1376, %v1368
    %v2289 = vpack.c.b16 %v1377, %v1369
    %v2290 = vpack.c.b16 %v1378, %v1370
    %v2291 = vpack.c.b16 %v1379, %v1371
    %v2292 = vpack.c.b16 %v1380, %v1372
    %v2293 = vpack.c.b16 %v1381, %v1373
    %v2294 = vpack.c.b16 %v1382, %v1374
    %v2295 = vpack.c.b16 %v1391, %v1383
    %v2296 = vpack.c.b16 %v1392, %v1384
    %v2297 = vpack.c.b16 %v1393, %v1385
    %v2298 = vpack.c.b16 %v1394, %v1386
    %v2299 = vpack.c.b16 %v1395, %v1387
    %v2300 = vpack.c.b16 %v1396, %v1388
    %v2301 = vpack.c.b16 %v1397, %v1389
    %v2302 = vpack.c.b16 %v1398, %v1390
    %v2303 = vpack.c.b16 %v1407, %v1399
    %v2304 = vpack.c.b16 %v1408, %v1400
    %v2305 = vpack.c.b16 %v1409, %v1401
    %v2306 = vpack.c.b16 %v1410, %v1402
    %v2307 = vpack.c.b16 %v1411, %v1403
    %v2308 = vpack.c.b16 %v1412, %v1404
    %v2309 = vpack.c.b16 %v1413, %v1405
    %v2310 = vpack.c.b16 %v1414, %v1406
    %v2311 = vpack.c.b16 %v1423, %v1415
    %v2312 = vpack.c.b16 %v1424, %v1416
    %v2313 = vpack.c.b16 %v1425, %v1417
    %v2314 = vpack.c.b16 %v1426, %v1418
    %v2315 = vpack.c.b16 %v1427, %v1419
    %v2316 = vpack.c.b16 %v1428, %v1420
    %v2317 = vpack.c.b16 %v1429, %v1421
    %v2318 = vpack.c.b16 %v1430, %v1422
    %v2319 = vpack.c.b16 %v1439, %v1431
    %v2320 = vpack.c.b16 %v1440, %v1432
    %v2321 = vpack.c.b16 %v1441, %v1433
    %v2322 = vpack.c.b16 %v1442, %v1434
    %v2323 = vpack.c.b16 %v1443, %v1435
    %v2324 = vpack.c.b16 %v1444, %v1436
    %v2325 = vpack.c.b16 %v1445, %v1437
    %v2326 = vpack.c.b16 %v1446, %v1438
    %v2327 = vpack.c.b16 %v1455, %v1447
    %v2328 = vpack.c.b16 %v1456, %v1448
    %v2329 = vpack.c.b16 %v1457, %v1449
    %v2330 = vpack.c.b16 %v1458, %v1450
    %v2331 = vpack.c.b16 %v1459, %v1451
    %v2332 = vpack.c.b16 %v1460, %v1452
    %v2333 = vpack.c.b16 %v1461, %v1453
    %v2334 = vpack.c.b16 %v1462, %v1454
    %v2335 = vpack.c.b16 %v1471, %v1463
    %v2336 = vpack.c.b16 %v1472, %v1464
    %v2337 = vpack.c.b16 %v1473, %v1465
    %v2338 = vpack.c.b16 %v1474, %v1466
    %v2339 = vpack.c.b16 %v1475, %v1467
    %v2340 = vpack.c.b16 %v1476, %v1468
    %v2341 = vpack.c.b16 %v1477, %v1469
    %v2342 = vpack.c.b16 %v1478, %v1470
    %v2343 = vpack.c.b16 %v1487, %v1479
    %v2344 = vpack.c.b16 %v1488, %v1480
    %v2345 = vpack.c.b16 %v1489, %v1481
    %v2346 = vpack.c.b16 %v1490, %v1482
    %v2347 = vpack.c.b16 %v1491, %v1483
    %v2348 = vpack.c.b16 %v1492, %v1484
    %v2349 = vpack.c.b16 %v1493, %v1485
    %v2350 = vpack.c.b16 %v1494, %v1486
    %v2351 = vpack.c.b16 %v1503, %v1495
    %v2352 = vpack.c.b16 %v1504, %v1496
    %v2353 = vpack.c.b16 %v1505, %v1497
    %v2354 = vpack.c.b16 %v1506, %v1498
    %v2355 = vpack.c.b16 %v1507, %v1499
    %v2356 = vpack.c.b16 %v1508, %v1500
    %v2357 = vpack.c.b16 %v1509, %v1501
    %v2358 = vpack.c.b16 %v1510, %v1502
    %v2359 = vpack.c.b16 %v1519, %v1511
    %v2360 = vpack.c.b16 %v1520, %v1512
    %v2361 = vpack.c.b16 %v1521, %v1513
    %v2362 = vpack.c.b16 %v1522, %v1514
    %v2363 = vpack.c.b16 %v1523, %v1515
    %v2364 = vpack.c.b16 %v1524, %v1516
    %v2365 = vpack.c.b16 %v1525, %v1517
    %v2366 = vpack.c.b16 %v1526, %v1518
    %v2367 = vpack.c.b16 %v1535, %v1527
    %v2368 = vpack.c.b16 %v1536, %v1528
    %v2369 = vpack.c.b16 %v1537, %v1529
    %v2370 = vpack.c.b16 %v1538, %v1530
    %v2371 = vpack.c.b16 %v1539, %v1531
    %v2372 = vpack.c.b16 %v1540, %v1532
    %v2373 = vpack.c.b16 %v1541, %v1533
    %v2374 = vpack.c.b16 %v1542, %v1534
    %v2375 = vpack.c.b16 %v1551, %v1543
    %v2376 = vpack.c.b16 %v1552, %v1544
    %v2377 = vpack.c.b16 %v1553, %v1545
    %v2378 = vpack.c.b16 %v1554, %v1546
    %v2379 = vpack.c.b16 %v1555, %v1547
    %v2380 = vpack.c.b16 %v1556, %v1548
    %v2381 = vpack.c.b16 %v1557, %v1549
    %v2382 = vpack.c.b16 %v1558, %v1550
    %v2383 = vpack.c.b16 %v1567, %v1559
    %v2384 = vpack.c.b16 %v1568, %v1560
    %v2385 = vpack.c.b16 %v1569, %v1561
    %v2386 = vpack.c.b16 %v1570, %v1562
    %v2387 = vpack.c.b16 %v1571, %v1563
    %v2388 = vpack.c.b16 %v1572, %v1564
    %v2389 = vpack.c.b16 %v1573, %v1565
    %v2390 = vpack.c.b16 %v1574, %v1566
    %v2391 = vpack.c.b16 %v1583, %v1575
    %v2392 = vpack.c.b16 %v1584, %v1576
    %v2393 = vpack.c.b16 %v1585, %v1577
    %v2394 = vpack.c.b16 %v1586, %v1578
    %v2395 = vpack.c.b16 %v1587, %v1579
    %v2396 = vpack.c.b16 %v1588, %v1580
    %v2397 = vpack.c.b16 %v1589, %v1581
    %v2398 = vpack.c.b16 %v1590, %v1582
    %v2399 = vpack.c.b16 %v1599, %v1591
    %v2400 = vpack.c.b16 %v1600, %v1592
    %v2401 = vpack.c.b16 %v1601, %v1593
    %v2402 = vpack.c.b16 %v1602, %v1594
    %v2403 = vpack.c.b16 %v1603, %v1595
    %v2404 = vpack.c.b16 %v1604, %v1596
    %v2405 = vpack.c.b16 %v1605, %v1597
    %v2406 = vpack.c.b16 %v1606, %v1598
    %v2407 = vpack.c.b16 %v1615, %v1607
    %v2408 = vpack.c.b16 %v1616, %v1608
    %v2409 = vpack.c.b16 %v1617, %v1609
    %v2410 = vpack.c.b16 %v1618, %v1610
    %v2411 = vpack.c.b16 %v1619, %v1611
    %v2412 = vpack.c.b16 %v1620, %v1612
    %v2413 = vpack.c.b16 %v1621, %v1613
    %v2414 = vpack.c.b16 %v1622, %v1614
    %v2415 = vpack.c.b16 %v1631, %v1623
    %v2416 = vpack.c.b16 %v1632, %v1624
    %v2417 = vpack.c.b16 %v1633, %v1625
    %v2418 = vpack.c.b16 %v1634, %v1626
    %v2419 = vpack.c.b16 %v1635, %v1627
    %v2420 = vpack.c.b16 %v1636, %v1628
    %v2421 = vpack.c.b16 %v1637, %v1629
    %v2422 = vpack.c.b16 %v1638, %v1630
    %v2423 = vpack.c.b16 %v1647, %v1639
    %v2424 = vpack.c.b16 %v1648, %v1640
    %v2425 = vpack.c.b16 %v1649, %v1641
    %v2426 = vpack.c.b16 %v1650, %v1642
    %v2427 = vpack.c.b16 %v1651, %v1643
    %v2428 = vpack.c.b16 %v1652, %v1644
    %v2429 = vpack.c.b16 %v1653, %v1645
    %v2430 = vpack.c.b16 %v1654, %v1646
    %v2431 = vpack.c.b16 %v1663, %v1655
    %v2432 = vpack.c.b16 %v1664, %v1656
    %v2433 = vpack.c.b16 %v1665, %v1657
    %v2434 = vpack.c.b16 %v1666, %v1658
    %v2435 = vpack.c.b16 %v1667, %v1659
    %v2436 = vpack.c.b16 %v1668, %v1660
    %v2437 = vpack.c.b16 %v1669, %v1661
    %v2438 = vpack.c.b16 %v1670, %v1662
    %v2439 = vpack.c.b16 %v1679, %v1671
    %v2440 = vpack.c.b16 %v1680, %v1672
    %v2441 = vpack.c.b16 %v1681, %v1673
    %v2442 = vpack.c.b16 %v1682, %v1674
    %v2443 = vpack.c.b16 %v1683, %v1675
    %v2444 = vpack.c.b16 %v1684, %v1676
    %v2445 = vpack.c.b16 %v1685, %v1677
    %v2446 = vpack.c.b16 %v1686, %v1678
    %v2447 = vpack.c.b16 %v1695, %v1687
    %v2448 = vpack.c.b16 %v1696, %v1688
    %v2449 = vpack.c.b16 %v1697, %v1689
    %v2450 = vpack.c.b16 %v1698, %v1690
    %v2451 = vpack.c.b16 %v1699, %v1691
    %v2452 = vpack.c.b16 %v1700, %v1692
    %v2453 = vpack.c.b16 %v1701, %v1693
    %v2454 = vpack.c.b16 %v1702, %v1694
    %v2455 = vpack.c.b16 %v1711, %v1703
    %v2456 = vpack.c.b16 %v1712, %v1704
    %v2457 = vpack.c.b16 %v1713, %v1705
    %v2458 = vpack.c.b16 %v1714, %v1706
    %v2459 = vpack.c.b16 %v1715, %v1707
    %v2460 = vpack.c.b16 %v1716, %v1708
    %v2461 = vpack.c.b16 %v1717, %v1709
    %v2462 = vpack.c.b16 %v1718, %v1710
    %v2463 = vpack.c.b16 %v1727, %v1719
    %v2464 = vpack.c.b16 %v1728, %v1720
    %v2465 = vpack.c.b16 %v1729, %v1721
    %v2466 = vpack.c.b16 %v1730, %v1722
    %v2467 = vpack.c.b16 %v1731, %v1723
    %v2468 = vpack.c.b16 %v1732, %v1724
    %v2469 = vpack.c.b16 %v1733, %v1725
    %v2470 = vpack.c.b16 %v1734, %v1726
    %v2471 = vpack.c.b16 %v1743, %v1735
    %v2472 = vpack.c.b16 %v1744, %v1736
    %v2473 = vpack.c.b16 %v1745, %v1737
    %v2474 = vpack.c.b16 %v1746, %v1738
    %v2475 = vpack.c.b16 %v1747, %v1739
    %v2476 = vpack.c.b16 %v1748, %v1740
    %v2477 = vpack.c.b16 %v1749, %v1741
    %v2478 = vpack.c.b16 %v1750, %v1742
    %v2479 = vpack.c.b16 %v1759, %v1751
    %v2480 = vpack.c.b16 %v1760, %v1752
    %v2481 = vpack.c.b16 %v1761, %v1753
    %v2482 = vpack.c.b16 %v1762, %v1754
    %v2483 = vpack.c.b16 %v1763, %v1755
    %v2484 = vpack.c.b16 %v1764, %v1756
    %v2485 = vpack.c.b16 %v1765, %v1757
    %v2486 = vpack.c.b16 %v1766, %v1758
    %v2487 = vpack.c.b16 %v1775, %v1767
    %v2488 = vpack.c.b16 %v1776, %v1768
    %v2489 = vpack.c.b16 %v1777, %v1769
    %v2490 = vpack.c.b16 %v1778, %v1770
    %v2491 = vpack.c.b16 %v1779, %v1771
    %v2492 = vpack.c.b16 %v1780, %v1772
    %v2493 = vpack.c.b16 %v1781, %v1773
    %v2494 = vpack.c.b16 %v1782, %v1774
    %v2495 = vpack.c.b16 %v1791, %v1783
    %v2496 = vpack.c.b16 %v1792, %v1784
    %v2497 = vpack.c.b16 %v1793, %v1785
    %v2498 = vpack.c.b16 %v1794, %v1786
    %v2499 = vpack.c.b16 %v1795, %v1787
    %v2500 = vpack.c.b16 %v1796, %v1788
    %v2501 = vpack.c.b16 %v1797, %v1789
    %v2502 = vpack.c.b16 %v1798, %v1790
    %v2503 = vpack.c.b16 %v1807, %v1799
    %v2504 = vpack.c.b16 %v1808, %v1800
    %v2505 = vpack.c.b16 %v1809, %v1801
    %v2506 = vpack.c.b16 %v1810, %v1802
    %v2507 = vpack.c.b16 %v1811, %v1803
    %v2508 = vpack.c.b16 %v1812, %v1804
    %v2509 = vpack.c.b16 %v1813, %v1805
    %v2510 = vpack.c.b16 %v1814, %v1806
    %v2511 = vpack.c.b16 %v1823, %v1815
    %v2512 = vpack.c.b16 %v1824, %v1816
    %v2513 = vpack.c.b16 %v1825, %v1817
    %v2514 = vpack.c.b16 %v1826, %v1818
    %v2515 = vpack.c.b16 %v1827, %v1819
    %v2516 = vpack.c.b16 %v1828, %v1820
    %v2517 = vpack.c.b16 %v1829, %v1821
    %v2518 = vpack.c.b16 %v1830, %v1822
    %v2519 = vpack.c.b16 %v1839, %v1831
    %v2520 = vpack.c.b16 %v1840, %v1832
    %v2521 = vpack.c.b16 %v1841, %v1833
    %v2522 = vpack.c.b16 %v1842, %v1834
    %v2523 = vpack.c.b16 %v1843, %v1835
    %v2524 = vpack.c.b16 %v1844, %v1836
    %v2525 = vpack.c.b16 %v1845, %v1837
    %v2526 = vpack.c.b16 %v1846, %v1838
    %v2527 = vpack.c.b16 %v1855, %v1847
    %v2528 = vpack.c.b16 %v1856, %v1848
    %v2529 = vpack.c.b16 %v1857, %v1849
    %v2530 = vpack.c.b16 %v1858, %v1850
    %v2531 = vpack.c.b16 %v1859, %v1851
    %v2532 = vpack.c.b16 %v1860, %v1852
    %v2533 = vpack.c.b16 %v1861, %v1853
    %v2534 = vpack.c.b16 %v1862, %v1854
    %v2535 = vpack.c.b16 %v1871, %v1863
    %v2536 = vpack.c.b16 %v1872, %v1864
    %v2537 = vpack.c.b16 %v1873, %v1865
    %v2538 = vpack.c.b16 %v1874, %v1866
    %v2539 = vpack.c.b16 %v1875, %v1867
    %v2540 = vpack.c.b16 %v1876, %v1868
    %v2541 = vpack.c.b16 %v1877, %v1869
    %v2542 = vpack.c.b16 %v1878, %v1870
    %v2543 = vpack.c.b16 %v1887, %v1879
    %v2544 = vpack.c.b16 %v1888, %v1880
    %v2545 = vpack.c.b16 %v1889, %v1881
    %v2546 = vpack.c.b16 %v1890, %v1882
    %v2547 = vpack.c.b16 %v1891, %v1883
    %v2548 = vpack.c.b16 %v1892, %v1884
    %v2549 = vpack.c.b16 %v1893, %v1885
    %v2550 = vpack.c.b16 %v1894, %v1886
    %v2551 = vpack.c.b16 %v1903, %v1895
    %v2552 = vpack.c.b16 %v1904, %v1896
    %v2553 = vpack.c.b16 %v1905, %v1897
    %v2554 = vpack.c.b16 %v1906, %v1898
    %v2555 = vpack.c.b16 %v1907, %v1899
    %v2556 = vpack.c.b16 %v1908, %v1900
    %v2557 = vpack.c.b16 %v1909, %v1901
    %v2558 = vpack.c.b16 %v1910, %v1902
    %v2559 = vpack.c.b16 %v1919, %v1911
    %v2560 = vpack.c.b16 %v1920, %v1912
    %v2561 = vpack.c.b16 %v1921, %v1913
    %v2562 = vpack.c.b16 %v1922, %v1914
    %v2563 = vpack.c.b16 %v1923, %v1915
    %v2564 = vpack.c.b16 %v1924, %v1916
    %v2565 = vpack.c.b16 %v1925, %v1917
    %v2566 = vpack.c.b16 %v1926, %v1918
    %v2567 = vpack.c.b16 %v1935, %v1927
    %v2568 = vpack.c.b16 %v1936, %v1928
    %v2569 = vpack.c.b16 %v1937, %v1929
    %v2570 = vpack.c.b16 %v1938, %v1930
    %v2571 = vpack.c.b16 %v1939, %v1931
    %v2572 = vpack.c.b16 %v1940, %v1932
    %v2573 = vpack.c.b16 %v1941, %v1933
    %v2574 = vpack.c.b16 %v1942, %v1934
    %v2575 = vpack.c.b16 %v1951, %v1943
    %v2576 = vpack.c.b16 %v1952, %v1944
    %v2577 = vpack.c.b16 %v1953, %v1945
    %v2578 = vpack.c.b16 %v1954, %v1946
    %v2579 = vpack.c.b16 %v1955, %v1947
    %v2580 = vpack.c.b16 %v1956, %v1948
    %v2581 = vpack.c.b16 %v1957, %v1949
    %v2582 = vpack.c.b16 %v1958, %v1950
    %v2583 = vpack.c.b16 %v1967, %v1959
    %v2584 = vpack.c.b16 %v1968, %v1960
    %v2585 = vpack.c.b16 %v1969, %v1961
    %v2586 = vpack.c.b16 %v1970, %v1962
    %v2587 = vpack.c.b16 %v1971, %v1963
    %v2588 = vpack.c.b16 %v1972, %v1964
    %v2589 = vpack.c.b16 %v1973, %v1965
    %v2590 = vpack.c.b16 %v1974, %v1966
    %v2591 = vpack.c.b16 %v1983, %v1975
    %v2592 = vpack.c.b16 %v1984, %v1976
    %v2593 = vpack.c.b16 %v1985, %v1977
    %v2594 = vpack.c.b16 %v1986, %v1978
    %v2595 = vpack.c.b16 %v1987, %v1979
    %v2596 = vpack.c.b16 %v1988, %v1980
    %v2597 = vpack.c.b16 %v1989, %v1981
    %v2598 = vpack.c.b16 %v1990, %v1982
    %v2599 = vpack.c.b16 %v1999, %v1991
    %v2600 = vpack.c.b16 %v2000, %v1992
    %v2601 = vpack.c.b16 %v2001, %v1993
    %v2602 = vpack.c.b16 %v2002, %v1994
    %v2603 = vpack.c.b16 %v2003, %v1995
    %v2604 = vpack.c.b16 %v2004, %v1996
    %v2605 = vpack.c.b16 %v2005, %v1997
    %v2606 = vpack.c.b16 %v2006, %v1998
    %v2607 = vpack.c.b16 %v2015, %v2007
    %v2608 = vpack.c.b16 %v2016, %v2008
    %v2609 = vpack.c.b16 %v2017, %v2009
    %v2610 = vpack.c.b16 %v2018, %v2010
    %v2611 = vpack.c.b16 %v2019, %v2011
    %v2612 = vpack.c.b16 %v2020, %v2012
    %v2613 = vpack.c.b16 %v2021, %v2013
    %v2614 = vpack.c.b16 %v2022, %v2014
    %v2615 = vpack.c.b16 %v2031, %v2023
    %v2616 = vpack.c.b16 %v2032, %v2024
    %v2617 = vpack.c.b16 %v2033, %v2025
    %v2618 = vpack.c.b16 %v2034, %v2026
    %v2619 = vpack.c.b16 %v2035, %v2027
    %v2620 = vpack.c.b16 %v2036, %v2028
    %v2621 = vpack.c.b16 %v2037, %v2029
    %v2622 = vpack.c.b16 %v2038, %v2030
    %v2623 = vpack.c.b16 %v2047, %v2039
    %v2624 = vpack.c.b16 %v2048, %v2040
    %v2625 = vpack.c.b16 %v2049, %v2041
    %v2626 = vpack.c.b16 %v2050, %v2042
    %v2627 = vpack.c.b16 %v2051, %v2043
    %v2628 = vpack.c.b16 %v2052, %v2044
    %v2629 = vpack.c.b16 %v2053, %v2045
    %v2630 = vpack.c.b16 %v2054, %v2046
    %v2631 = vpack.c.b16 %v2063, %v2055
    %v2632 = vpack.c.b16 %v2064, %v2056
    %v2633 = vpack.c.b16 %v2065, %v2057
    %v2634 = vpack.c.b16 %v2066, %v2058
    %v2635 = vpack.c.b16 %v2067, %v2059
    %v2636 = vpack.c.b16 %v2068, %v2060
    %v2637 = vpack.c.b16 %v2069, %v2061
    %v2638 = vpack.c.b16 %v2070, %v2062
    %v2639 = vpack.c.b16 %v2079, %v2071
    %v2640 = vpack.c.b16 %v2080, %v2072
    %v2641 = vpack.c.b16 %v2081, %v2073
    %v2642 = vpack.c.b16 %v2082, %v2074
    %v2643 = vpack.c.b16 %v2083, %v2075
    %v2644 = vpack.c.b16 %v2084, %v2076
    %v2645 = vpack.c.b16 %v2085, %v2077
    %v2646 = vpack.c.b16 %v2086, %v2078
    %v2647 = vpack.c.b16 %v2095, %v2087
    %v2648 = vpack.c.b16 %v2096, %v2088
    %v2649 = vpack.c.b16 %v2097, %v2089
    %v2650 = vpack.c.b16 %v2098, %v2090
    %v2651 = vpack.c.b16 %v2099, %v2091
    %v2652 = vpack.c.b16 %v2100, %v2092
    %v2653 = vpack.c.b16 %v2101, %v2093
    %v2654 = vpack.c.b16 %v2102, %v2094
    %v2655 = vpack.c.b16 %v2111, %v2103
    %v2656 = vpack.c.b16 %v2112, %v2104
    %v2657 = vpack.c.b16 %v2113, %v2105
    %v2658 = vpack.c.b16 %v2114, %v2106
    %v2659 = vpack.c.b16 %v2115, %v2107
    %v2660 = vpack.c.b16 %v2116, %v2108
    %v2661 = vpack.c.b16 %v2117, %v2109
    %v2662 = vpack.c.b16 %v2118, %v2110
    %v2663 = vpack.c.b16 %v2127, %v2119
    %v2664 = vpack.c.b16 %v2128, %v2120
    %v2665 = vpack.c.b16 %v2129, %v2121
    %v2666 = vpack.c.b16 %v2130, %v2122
    %v2667 = vpack.c.b16 %v2131, %v2123
    %v2668 = vpack.c.b16 %v2132, %v2124
    %v2669 = vpack.c.b16 %v2133, %v2125
    %v2670 = vpack.c.b16 %v2134, %v2126
    %v2671 = vpack.c.b16 %v2143, %v2135
    %v2672 = vpack.c.b16 %v2144, %v2136
    %v2673 = vpack.c.b16 %v2145, %v2137
    %v2674 = vpack.c.b16 %v2146, %v2138
    %v2675 = vpack.c.b16 %v2147, %v2139
    %v2676 = vpack.c.b16 %v2148, %v2140
    %v2677 = vpack.c.b16 %v2149, %v2141
    %v2678 = vpack.c.b16 %v2150, %v2142
    %v2679 = vpack.c.b16 %v2159, %v2151
    %v2680 = vpack.c.b16 %v2160, %v2152
    %v2681 = vpack.c.b16 %v2161, %v2153
    %v2682 = vpack.c.b16 %v2162, %v2154
    %v2683 = vpack.c.b16 %v2163, %v2155
    %v2684 = vpack.c.b16 %v2164, %v2156
    %v2685 = vpack.c.b16 %v2165, %v2157
    %v2686 = vpack.c.b16 %v2166, %v2158
    %v2687 = vpack.c.b16 %v2175, %v2167
    %v2688 = vpack.c.b16 %v2176, %v2168
    %v2689 = vpack.c.b16 %v2177, %v2169
    %v2690 = vpack.c.b16 %v2178, %v2170
    %v2691 = vpack.c.b16 %v2179, %v2171
    %v2692 = vpack.c.b16 %v2180, %v2172
    %v2693 = vpack.c.b16 %v2181, %v2173
    %v2694 = vpack.c.b16 %v2182, %v2174
    %3207 = vmatprep.subr.bf16.mxu0 %v2240
    %3208 = vmatpush1.bf16.msra.mxu0 %v2239
    %3209 = vmatprep.subr.bf16.mxu0 %v2232
    %3210 = vmatpush1.bf16.msra.mxu0 %v2231
    %3211 = vmatprep.subr.bf16.mxu0 %v2224
    %3212 = vmatpush1.bf16.msra.mxu0 %v2223
    %3213 = vmatprep.subr.bf16.mxu0 %v2216
    %3214 = vmatpush1.bf16.msra.mxu0 %v2215
    %3215 = vmatprep.subr.bf16.mxu0 %v2208
    %3216 = vmatpush1.bf16.msra.mxu0 %v2207
    %3217 = vmatprep.subr.bf16.mxu0 %v2200
    %3218 = vmatpush1.bf16.msra.mxu0 %v2199
    %3219 = vmatprep.subr.bf16.mxu0 %v2192
    %3220 = vmatpush1.bf16.msra.mxu0 %v2191
    %3221 = vmatprep.subr.bf16.mxu0 %v2184
    %3222 = vmatpush1.bf16.msra.mxu0 %v2183
    %3223 = vmatprep.subr.bf16.mxu0 %v2304
    %3224 = vmatpush2.bf16.msra.mxu0 %v2303
    %3225 = vmatprep.subr.bf16.mxu0 %v2296
    %3226 = vmatpush2.bf16.msra.mxu0 %v2295
    %3227 = vmatprep.subr.bf16.mxu0 %v2288
    %3228 = vmatpush2.bf16.msra.mxu0 %v2287
    %3229 = vmatprep.subr.bf16.mxu0 %v2280
    %3230 = vmatpush2.bf16.msra.mxu0 %v2279
    %3231 = vmatprep.subr.bf16.mxu0 %v2272
    %3232 = vmatpush2.bf16.msra.mxu0 %v2271
    %3233 = vmatprep.subr.bf16.mxu0 %v2264
    %3234 = vmatpush2.bf16.msra.mxu0 %v2263
    %3235 = vmatprep.subr.bf16.mxu0 %v2256
    %3236 = vmatpush2.bf16.msra.mxu0 %v2255
    %3237 = vmatprep.subr.bf16.mxu0 %v2248
    %3238 = vmatpush2.bf16.msra.mxu0 %v2247
    %3239 = vmatprep.mubr.bf16.mxu0 %v128
    %3240 = vmatmul.mubr.bf16.gmra.mxu0 %v127
    %v3241 = vpop.f32.mrf.mxu0
    %v3242 = vadd.f32 0.0, %v3241
    %v3243 = vpop.f32.mrf.mxu0
    %v3244 = vadd.f32 0.0, %v3243
    %v3245 = vpop.f32.mrf.mxu0
    %v3246 = vpop.f32.mrf.mxu0
    %3247 = vdwg.mxu0
    %3248 = vmatprep.subr.bf16.mxu0 %v2368
    %3249 = vmatpush1.bf16.msra.mxu0 %v2367
    %3250 = vmatprep.subr.bf16.mxu0 %v2360
    %3251 = vmatpush1.bf16.msra.mxu0 %v2359
    %3252 = vmatprep.subr.bf16.mxu0 %v2352
    %3253 = vmatpush1.bf16.msra.mxu0 %v2351
    %3254 = vmatprep.subr.bf16.mxu0 %v2344
    %3255 = vmatpush1.bf16.msra.mxu0 %v2343
    %3256 = vmatprep.subr.bf16.mxu0 %v2336
    %3257 = vmatpush1.bf16.msra.mxu0 %v2335
    %3258 = vmatprep.subr.bf16.mxu0 %v2328
    %3259 = vmatpush1.bf16.msra.mxu0 %v2327
    %3260 = vmatprep.subr.bf16.mxu0 %v2320
    %3261 = vmatpush1.bf16.msra.mxu0 %v2319
    %3262 = vmatprep.subr.bf16.mxu0 %v2312
    %3263 = vmatpush1.bf16.msra.mxu0 %v2311
    %3264 = vmatprep.subr.bf16.mxu0 %v2432
    %3265 = vmatpush2.bf16.msra.mxu0 %v2431
    %3266 = vmatprep.subr.bf16.mxu0 %v2424
    %3267 = vmatpush2.bf16.msra.mxu0 %v2423
    %3268 = vmatprep.subr.bf16.mxu0 %v2416
    %3269 = vmatpush2.bf16.msra.mxu0 %v2415
    %3270 = vmatprep.subr.bf16.mxu0 %v2408
    %3271 = vmatpush2.bf16.msra.mxu0 %v2407
    %3272 = vmatprep.subr.bf16.mxu0 %v2400
    %3273 = vmatpush2.bf16.msra.mxu0 %v2399
    %3274 = vmatprep.subr.bf16.mxu0 %v2392
    %3275 = vmatpush2.bf16.msra.mxu0 %v2391
    %3276 = vmatprep.subr.bf16.mxu0 %v2384
    %3277 = vmatpush2.bf16.msra.mxu0 %v2383
    %3278 = vmatprep.subr.bf16.mxu0 %v2376
    %3279 = vmatpush2.bf16.msra.mxu0 %v2375
    %3280 = vmatprep.mubr.bf16.mxu0 %v130
    %3281 = vmatmul.mubr.bf16.gmra.mxu0 %v129
    %v3282 = vpop.f32.mrf.mxu0
    %v3283 = vadd.f32 %v3242, %v3282
    %v3284 = vpop.f32.mrf.mxu0
    %v3285 = vadd.f32 %v3244, %v3284
    %v3286 = vpop.f32.mrf.mxu0
    %v3287 = vpop.f32.mrf.mxu0
    %3288 = vdwg.mxu0
    %3289 = vmatprep.subr.bf16.mxu0 %v2496
    %3290 = vmatpush1.bf16.msra.mxu0 %v2495
    %3291 = vmatprep.subr.bf16.mxu0 %v2488
    %3292 = vmatpush1.bf16.msra.mxu0 %v2487
    %3293 = vmatprep.subr.bf16.mxu0 %v2480
    %3294 = vmatpush1.bf16.msra.mxu0 %v2479
    %3295 = vmatprep.subr.bf16.mxu0 %v2472
    %3296 = vmatpush1.bf16.msra.mxu0 %v2471
    %3297 = vmatprep.subr.bf16.mxu0 %v2464
    %3298 = vmatpush1.bf16.msra.mxu0 %v2463
    %3299 = vmatprep.subr.bf16.mxu0 %v2456
    %3300 = vmatpush1.bf16.msra.mxu0 %v2455
    %3301 = vmatprep.subr.bf16.mxu0 %v2448
    %3302 = vmatpush1.bf16.msra.mxu0 %v2447
    %3303 = vmatprep.subr.bf16.mxu0 %v2440
    %3304 = vmatpush1.bf16.msra.mxu0 %v2439
    %3305 = vmatprep.subr.bf16.mxu0 %v2560
    %3306 = vmatpush2.bf16.msra.mxu0 %v2559
    %3307 = vmatprep.subr.bf16.mxu0 %v2552
    %3308 = vmatpush2.bf16.msra.mxu0 %v2551
    %3309 = vmatprep.subr.bf16.mxu0 %v2544
    %3310 = vmatpush2.bf16.msra.mxu0 %v2543
    %3311 = vmatprep.subr.bf16.mxu0 %v2536
    %3312 = vmatpush2.bf16.msra.mxu0 %v2535
    %3313 = vmatprep.subr.bf16.mxu0 %v2528
    %3314 = vmatpush2.bf16.msra.mxu0 %v2527
    %3315 = vmatprep.subr.bf16.mxu0 %v2520
    %3316 = vmatpush2.bf16.msra.mxu0 %v2519
    %3317 = vmatprep.subr.bf16.mxu0 %v2512
    %3318 = vmatpush2.bf16.msra.mxu0 %v2511
    %3319 = vmatprep.subr.bf16.mxu0 %v2504
    %3320 = vmatpush2.bf16.msra.mxu0 %v2503
    %3321 = vmatprep.mubr.bf16.mxu0 %v132
    %3322 = vmatmul.mubr.bf16.gmra.mxu0 %v131
    %v3323 = vpop.f32.mrf.mxu0
    %v3324 = vadd.f32 %v3283, %v3323
    %v3325 = vpop.f32.mrf.mxu0
    %v3326 = vadd.f32 %v3285, %v3325
    %v3327 = vpop.f32.mrf.mxu0
    %v3328 = vpop.f32.mrf.mxu0
    %3329 = vdwg.mxu0
    %3330 = vmatprep.subr.bf16.mxu0 %v2624
    %3331 = vmatpush1.bf16.msra.mxu0 %v2623
    %3332 = vmatprep.subr.bf16.mxu0 %v2616
    %3333 = vmatpush1.bf16.msra.mxu0 %v2615
    %3334 = vmatprep.subr.bf16.mxu0 %v2608
    %3335 = vmatpush1.bf16.msra.mxu0 %v2607
    %3336 = vmatprep.subr.bf16.mxu0 %v2600
    %3337 = vmatpush1.bf16.msra.mxu0 %v2599
    %3338 = vmatprep.subr.bf16.mxu0 %v2592
    %3339 = vmatpush1.bf16.msra.mxu0 %v2591
    %3340 = vmatprep.subr.bf16.mxu0 %v2584
    %3341 = vmatpush1.bf16.msra.mxu0 %v2583
    %3342 = vmatprep.subr.bf16.mxu0 %v2576
    %3343 = vmatpush1.bf16.msra.mxu0 %v2575
    %3344 = vmatprep.subr.bf16.mxu0 %v2568
    %3345 = vmatpush1.bf16.msra.mxu0 %v2567
    %3346 = vmatprep.subr.bf16.mxu0 %v2688
    %3347 = vmatpush2.bf16.msra.mxu0 %v2687
    %3348 = vmatprep.subr.bf16.mxu0 %v2680
    %3349 = vmatpush2.bf16.msra.mxu0 %v2679
    %3350 = vmatprep.subr.bf16.mxu0 %v2672
    %3351 = vmatpush2.bf16.msra.mxu0 %v2671
    %3352 = vmatprep.subr.bf16.mxu0 %v2664
    %3353 = vmatpush2.bf16.msra.mxu0 %v2663
    %3354 = vmatprep.subr.bf16.mxu0 %v2656
    %3355 = vmatpush2.bf16.msra.mxu0 %v2655
    %3356 = vmatprep.subr.bf16.mxu0 %v2648
    %3357 = vmatpush2.bf16.msra.mxu0 %v2647
    %3358 = vmatprep.subr.bf16.mxu0 %v2640
    %3359 = vmatpush2.bf16.msra.mxu0 %v2639
    %3360 = vmatprep.subr.bf16.mxu0 %v2632
    %3361 = vmatpush2.bf16.msra.mxu0 %v2631
    %3362 = vmatprep.mubr.bf16.mxu0 %v134
    %3363 = vmatmul.mubr.bf16.gmra.mxu0 %v133
    %v3364 = vpop.f32.mrf.mxu0
    %v3365 = vadd.f32 %v3324, %v3364
    %v3366 = vpop.f32.mrf.mxu0
    %v3367 = vadd.f32 %v3326, %v3366
    %v3368 = vpop.f32.mrf.mxu0
    %v3369 = vpop.f32.mrf.mxu0
    %3370 = vdwg.mxu0
    %3371 = vmatprep.subr.bf16.mxu0 %v2242
    %3372 = vmatpush1.bf16.msra.mxu0 %v2241
    %3373 = vmatprep.subr.bf16.mxu0 %v2234
    %3374 = vmatpush1.bf16.msra.mxu0 %v2233
    %3375 = vmatprep.subr.bf16.mxu0 %v2226
    %3376 = vmatpush1.bf16.msra.mxu0 %v2225
    %3377 = vmatprep.subr.bf16.mxu0 %v2218
    %3378 = vmatpush1.bf16.msra.mxu0 %v2217
    %3379 = vmatprep.subr.bf16.mxu0 %v2210
    %3380 = vmatpush1.bf16.msra.mxu0 %v2209
    %3381 = vmatprep.subr.bf16.mxu0 %v2202
    %3382 = vmatpush1.bf16.msra.mxu0 %v2201
    %3383 = vmatprep.subr.bf16.mxu0 %v2194
    %3384 = vmatpush1.bf16.msra.mxu0 %v2193
    %3385 = vmatprep.subr.bf16.mxu0 %v2186
    %3386 = vmatpush1.bf16.msra.mxu0 %v2185
    %3387 = vmatprep.subr.bf16.mxu0 %v2306
    %3388 = vmatpush2.bf16.msra.mxu0 %v2305
    %3389 = vmatprep.subr.bf16.mxu0 %v2298
    %3390 = vmatpush2.bf16.msra.mxu0 %v2297
    %3391 = vmatprep.subr.bf16.mxu0 %v2290
    %3392 = vmatpush2.bf16.msra.mxu0 %v2289
    %3393 = vmatprep.subr.bf16.mxu0 %v2282
    %3394 = vmatpush2.bf16.msra.mxu0 %v2281
    %3395 = vmatprep.subr.bf16.mxu0 %v2274
    %3396 = vmatpush2.bf16.msra.mxu0 %v2273
    %3397 = vmatprep.subr.bf16.mxu0 %v2266
    %3398 = vmatpush2.bf16.msra.mxu0 %v2265
    %3399 = vmatprep.subr.bf16.mxu0 %v2258
    %3400 = vmatpush2.bf16.msra.mxu0 %v2257
    %3401 = vmatprep.subr.bf16.mxu0 %v2250
    %3402 = vmatpush2.bf16.msra.mxu0 %v2249
    %3403 = vmatprep.mubr.bf16.mxu0 %v128
    %3404 = vmatmul.mubr.bf16.gmra.mxu0 %v127
    %v3405 = vpop.f32.mrf.mxu0
    %v3406 = vadd.f32 0.0, %v3405
    %v3407 = vpop.f32.mrf.mxu0
    %v3408 = vadd.f32 0.0, %v3407
    %v3409 = vpop.f32.mrf.mxu0
    %v3410 = vpop.f32.mrf.mxu0
    %3411 = vdwg.mxu0
    %3412 = vmatprep.subr.bf16.mxu0 %v2370
    %3413 = vmatpush1.bf16.msra.mxu0 %v2369
    %3414 = vmatprep.subr.bf16.mxu0 %v2362
    %3415 = vmatpush1.bf16.msra.mxu0 %v2361
    %3416 = vmatprep.subr.bf16.mxu0 %v2354
    %3417 = vmatpush1.bf16.msra.mxu0 %v2353
    %3418 = vmatprep.subr.bf16.mxu0 %v2346
    %3419 = vmatpush1.bf16.msra.mxu0 %v2345
    %3420 = vmatprep.subr.bf16.mxu0 %v2338
    %3421 = vmatpush1.bf16.msra.mxu0 %v2337
    %3422 = vmatprep.subr.bf16.mxu0 %v2330
    %3423 = vmatpush1.bf16.msra.mxu0 %v2329
    %3424 = vmatprep.subr.bf16.mxu0 %v2322
    %3425 = vmatpush1.bf16.msra.mxu0 %v2321
    %3426 = vmatprep.subr.bf16.mxu0 %v2314
    %3427 = vmatpush1.bf16.msra.mxu0 %v2313
    %3428 = vmatprep.subr.bf16.mxu0 %v2434
    %3429 = vmatpush2.bf16.msra.mxu0 %v2433
    %3430 = vmatprep.subr.bf16.mxu0 %v2426
    %3431 = vmatpush2.bf16.msra.mxu0 %v2425
    %3432 = vmatprep.subr.bf16.mxu0 %v2418
    %3433 = vmatpush2.bf16.msra.mxu0 %v2417
    %3434 = vmatprep.subr.bf16.mxu0 %v2410
    %3435 = vmatpush2.bf16.msra.mxu0 %v2409
    %3436 = vmatprep.subr.bf16.mxu0 %v2402
    %3437 = vmatpush2.bf16.msra.mxu0 %v2401
    %3438 = vmatprep.subr.bf16.mxu0 %v2394
    %3439 = vmatpush2.bf16.msra.mxu0 %v2393
    %3440 = vmatprep.subr.bf16.mxu0 %v2386
    %3441 = vmatpush2.bf16.msra.mxu0 %v2385
    %3442 = vmatprep.subr.bf16.mxu0 %v2378
    %3443 = vmatpush2.bf16.msra.mxu0 %v2377
    %3444 = vmatprep.mubr.bf16.mxu0 %v130
    %3445 = vmatmul.mubr.bf16.gmra.mxu0 %v129
    %v3446 = vpop.f32.mrf.mxu0
    %v3447 = vadd.f32 %v3406, %v3446
    %v3448 = vpop.f32.mrf.mxu0
    %v3449 = vadd.f32 %v3408, %v3448
    %v3450 = vpop.f32.mrf.mxu0
    %v3451 = vpop.f32.mrf.mxu0
    %3452 = vdwg.mxu0
    %3453 = vmatprep.subr.bf16.mxu0 %v2498
    %3454 = vmatpush1.bf16.msra.mxu0 %v2497
    %3455 = vmatprep.subr.bf16.mxu0 %v2490
    %3456 = vmatpush1.bf16.msra.mxu0 %v2489
    %3457 = vmatprep.subr.bf16.mxu0 %v2482
    %3458 = vmatpush1.bf16.msra.mxu0 %v2481
    %3459 = vmatprep.subr.bf16.mxu0 %v2474
    %3460 = vmatpush1.bf16.msra.mxu0 %v2473
    %3461 = vmatprep.subr.bf16.mxu0 %v2466
    %3462 = vmatpush1.bf16.msra.mxu0 %v2465
    %3463 = vmatprep.subr.bf16.mxu0 %v2458
    %3464 = vmatpush1.bf16.msra.mxu0 %v2457
    %3465 = vmatprep.subr.bf16.mxu0 %v2450
    %3466 = vmatpush1.bf16.msra.mxu0 %v2449
    %3467 = vmatprep.subr.bf16.mxu0 %v2442
    %3468 = vmatpush1.bf16.msra.mxu0 %v2441
    %3469 = vmatprep.subr.bf16.mxu0 %v2562
    %3470 = vmatpush2.bf16.msra.mxu0 %v2561
    %3471 = vmatprep.subr.bf16.mxu0 %v2554
    %3472 = vmatpush2.bf16.msra.mxu0 %v2553
    %3473 = vmatprep.subr.bf16.mxu0 %v2546
    %3474 = vmatpush2.bf16.msra.mxu0 %v2545
    %3475 = vmatprep.subr.bf16.mxu0 %v2538
    %3476 = vmatpush2.bf16.msra.mxu0 %v2537
    %3477 = vmatprep.subr.bf16.mxu0 %v2530
    %3478 = vmatpush2.bf16.msra.mxu0 %v2529
    %3479 = vmatprep.subr.bf16.mxu0 %v2522
    %3480 = vmatpush2.bf16.msra.mxu0 %v2521
    %3481 = vmatprep.subr.bf16.mxu0 %v2514
    %3482 = vmatpush2.bf16.msra.mxu0 %v2513
    %3483 = vmatprep.subr.bf16.mxu0 %v2506
    %3484 = vmatpush2.bf16.msra.mxu0 %v2505
    %3485 = vmatprep.mubr.bf16.mxu0 %v132
    %3486 = vmatmul.mubr.bf16.gmra.mxu0 %v131
    %v3487 = vpop.f32.mrf.mxu0
    %v3488 = vadd.f32 %v3447, %v3487
    %v3489 = vpop.f32.mrf.mxu0
    %v3490 = vadd.f32 %v3449, %v3489
    %v3491 = vpop.f32.mrf.mxu0
    %v3492 = vpop.f32.mrf.mxu0
    %3493 = vdwg.mxu0
    %3494 = vmatprep.subr.bf16.mxu0 %v2626
    %3495 = vmatpush1.bf16.msra.mxu0 %v2625
    %3496 = vmatprep.subr.bf16.mxu0 %v2618
    %3497 = vmatpush1.bf16.msra.mxu0 %v2617
    %3498 = vmatprep.subr.bf16.mxu0 %v2610
    %3499 = vmatpush1.bf16.msra.mxu0 %v2609
    %3500 = vmatprep.subr.bf16.mxu0 %v2602
    %3501 = vmatpush1.bf16.msra.mxu0 %v2601
    %3502 = vmatprep.subr.bf16.mxu0 %v2594
    %3503 = vmatpush1.bf16.msra.mxu0 %v2593
    %3504 = vmatprep.subr.bf16.mxu0 %v2586
    %3505 = vmatpush1.bf16.msra.mxu0 %v2585
    %3506 = vmatprep.subr.bf16.mxu0 %v2578
    %3507 = vmatpush1.bf16.msra.mxu0 %v2577
    %3508 = vmatprep.subr.bf16.mxu0 %v2570
    %3509 = vmatpush1.bf16.msra.mxu0 %v2569
    %3510 = vmatprep.subr.bf16.mxu0 %v2690
    %3511 = vmatpush2.bf16.msra.mxu0 %v2689
    %3512 = vmatprep.subr.bf16.mxu0 %v2682
    %3513 = vmatpush2.bf16.msra.mxu0 %v2681
    %3514 = vmatprep.subr.bf16.mxu0 %v2674
    %3515 = vmatpush2.bf16.msra.mxu0 %v2673
    %3516 = vmatprep.subr.bf16.mxu0 %v2666
    %3517 = vmatpush2.bf16.msra.mxu0 %v2665
    %3518 = vmatprep.subr.bf16.mxu0 %v2658
    %3519 = vmatpush2.bf16.msra.mxu0 %v2657
    %3520 = vmatprep.subr.bf16.mxu0 %v2650
    %3521 = vmatpush2.bf16.msra.mxu0 %v2649
    %3522 = vmatprep.subr.bf16.mxu0 %v2642
    %3523 = vmatpush2.bf16.msra.mxu0 %v2641
    %3524 = vmatprep.subr.bf16.mxu0 %v2634
    %3525 = vmatpush2.bf16.msra.mxu0 %v2633
    %3526 = vmatprep.mubr.bf16.mxu0 %v134
    %3527 = vmatmul.mubr.bf16.gmra.mxu0 %v133
    %v3528 = vpop.f32.mrf.mxu0
    %v3529 = vadd.f32 %v3488, %v3528
    %v3530 = vpop.f32.mrf.mxu0
    %v3531 = vadd.f32 %v3490, %v3530
    %v3532 = vpop.f32.mrf.mxu0
    %v3533 = vpop.f32.mrf.mxu0
    %3534 = vdwg.mxu0
    %3535 = vmatprep.subr.bf16.mxu0 %v2244
    %3536 = vmatpush1.bf16.msra.mxu0 %v2243
    %3537 = vmatprep.subr.bf16.mxu0 %v2236
    %3538 = vmatpush1.bf16.msra.mxu0 %v2235
    %3539 = vmatprep.subr.bf16.mxu0 %v2228
    %3540 = vmatpush1.bf16.msra.mxu0 %v2227
    %3541 = vmatprep.subr.bf16.mxu0 %v2220
    %3542 = vmatpush1.bf16.msra.mxu0 %v2219
    %3543 = vmatprep.subr.bf16.mxu0 %v2212
    %3544 = vmatpush1.bf16.msra.mxu0 %v2211
    %3545 = vmatprep.subr.bf16.mxu0 %v2204
    %3546 = vmatpush1.bf16.msra.mxu0 %v2203
    %3547 = vmatprep.subr.bf16.mxu0 %v2196
    %3548 = vmatpush1.bf16.msra.mxu0 %v2195
    %3549 = vmatprep.subr.bf16.mxu0 %v2188
    %3550 = vmatpush1.bf16.msra.mxu0 %v2187
    %3551 = vmatprep.subr.bf16.mxu0 %v2308
    %3552 = vmatpush2.bf16.msra.mxu0 %v2307
    %3553 = vmatprep.subr.bf16.mxu0 %v2300
    %3554 = vmatpush2.bf16.msra.mxu0 %v2299
    %3555 = vmatprep.subr.bf16.mxu0 %v2292
    %3556 = vmatpush2.bf16.msra.mxu0 %v2291
    %3557 = vmatprep.subr.bf16.mxu0 %v2284
    %3558 = vmatpush2.bf16.msra.mxu0 %v2283
    %3559 = vmatprep.subr.bf16.mxu0 %v2276
    %3560 = vmatpush2.bf16.msra.mxu0 %v2275
    %3561 = vmatprep.subr.bf16.mxu0 %v2268
    %3562 = vmatpush2.bf16.msra.mxu0 %v2267
    %3563 = vmatprep.subr.bf16.mxu0 %v2260
    %3564 = vmatpush2.bf16.msra.mxu0 %v2259
    %3565 = vmatprep.subr.bf16.mxu0 %v2252
    %3566 = vmatpush2.bf16.msra.mxu0 %v2251
    %3567 = vmatprep.mubr.bf16.mxu0 %v128
    %3568 = vmatmul.mubr.bf16.gmra.mxu0 %v127
    %v3569 = vpop.f32.mrf.mxu0
    %v3570 = vadd.f32 0.0, %v3569
    %v3571 = vpop.f32.mrf.mxu0
    %v3572 = vadd.f32 0.0, %v3571
    %v3573 = vpop.f32.mrf.mxu0
    %v3574 = vpop.f32.mrf.mxu0
    %3575 = vdwg.mxu0
    %3576 = vmatprep.subr.bf16.mxu0 %v2372
    %3577 = vmatpush1.bf16.msra.mxu0 %v2371
    %3578 = vmatprep.subr.bf16.mxu0 %v2364
    %3579 = vmatpush1.bf16.msra.mxu0 %v2363
    %3580 = vmatprep.subr.bf16.mxu0 %v2356
    %3581 = vmatpush1.bf16.msra.mxu0 %v2355
    %3582 = vmatprep.subr.bf16.mxu0 %v2348
    %3583 = vmatpush1.bf16.msra.mxu0 %v2347
    %3584 = vmatprep.subr.bf16.mxu0 %v2340
    %3585 = vmatpush1.bf16.msra.mxu0 %v2339
    %3586 = vmatprep.subr.bf16.mxu0 %v2332
    %3587 = vmatpush1.bf16.msra.mxu0 %v2331
    %3588 = vmatprep.subr.bf16.mxu0 %v2324
    %3589 = vmatpush1.bf16.msra.mxu0 %v2323
    %3590 = vmatprep.subr.bf16.mxu0 %v2316
    %3591 = vmatpush1.bf16.msra.mxu0 %v2315
    %3592 = vmatprep.subr.bf16.mxu0 %v2436
    %3593 = vmatpush2.bf16.msra.mxu0 %v2435
    %3594 = vmatprep.subr.bf16.mxu0 %v2428
    %3595 = vmatpush2.bf16.msra.mxu0 %v2427
    %3596 = vmatprep.subr.bf16.mxu0 %v2420
    %3597 = vmatpush2.bf16.msra.mxu0 %v2419
    %3598 = vmatprep.subr.bf16.mxu0 %v2412
    %3599 = vmatpush2.bf16.msra.mxu0 %v2411
    %3600 = vmatprep.subr.bf16.mxu0 %v2404
    %3601 = vmatpush2.bf16.msra.mxu0 %v2403
    %3602 = vmatprep.subr.bf16.mxu0 %v2396
    %3603 = vmatpush2.bf16.msra.mxu0 %v2395
    %3604 = vmatprep.subr.bf16.mxu0 %v2388
    %3605 = vmatpush2.bf16.msra.mxu0 %v2387
    %3606 = vmatprep.subr.bf16.mxu0 %v2380
    %3607 = vmatpush2.bf16.msra.mxu0 %v2379
    %3608 = vmatprep.mubr.bf16.mxu0 %v130
    %3609 = vmatmul.mubr.bf16.gmra.mxu0 %v129
    %v3610 = vpop.f32.mrf.mxu0
    %v3611 = vadd.f32 %v3570, %v3610
    %v3612 = vpop.f32.mrf.mxu0
    %v3613 = vadd.f32 %v3572, %v3612
    %v3614 = vpop.f32.mrf.mxu0
    %v3615 = vpop.f32.mrf.mxu0
    %3616 = vdwg.mxu0
    %3617 = vmatprep.subr.bf16.mxu0 %v2500
    %3618 = vmatpush1.bf16.msra.mxu0 %v2499
    %3619 = vmatprep.subr.bf16.mxu0 %v2492
    %3620 = vmatpush1.bf16.msra.mxu0 %v2491
    %3621 = vmatprep.subr.bf16.mxu0 %v2484
    %3622 = vmatpush1.bf16.msra.mxu0 %v2483
    %3623 = vmatprep.subr.bf16.mxu0 %v2476
    %3624 = vmatpush1.bf16.msra.mxu0 %v2475
    %3625 = vmatprep.subr.bf16.mxu0 %v2468
    %3626 = vmatpush1.bf16.msra.mxu0 %v2467
    %3627 = vmatprep.subr.bf16.mxu0 %v2460
    %3628 = vmatpush1.bf16.msra.mxu0 %v2459
    %3629 = vmatprep.subr.bf16.mxu0 %v2452
    %3630 = vmatpush1.bf16.msra.mxu0 %v2451
    %3631 = vmatprep.subr.bf16.mxu0 %v2444
    %3632 = vmatpush1.bf16.msra.mxu0 %v2443
    %3633 = vmatprep.subr.bf16.mxu0 %v2564
    %3634 = vmatpush2.bf16.msra.mxu0 %v2563
    %3635 = vmatprep.subr.bf16.mxu0 %v2556
    %3636 = vmatpush2.bf16.msra.mxu0 %v2555
    %3637 = vmatprep.subr.bf16.mxu0 %v2548
    %3638 = vmatpush2.bf16.msra.mxu0 %v2547
    %3639 = vmatprep.subr.bf16.mxu0 %v2540
    %3640 = vmatpush2.bf16.msra.mxu0 %v2539
    %3641 = vmatprep.subr.bf16.mxu0 %v2532
    %3642 = vmatpush2.bf16.msra.mxu0 %v2531
    %3643 = vmatprep.subr.bf16.mxu0 %v2524
    %3644 = vmatpush2.bf16.msra.mxu0 %v2523
    %3645 = vmatprep.subr.bf16.mxu0 %v2516
    %3646 = vmatpush2.bf16.msra.mxu0 %v2515
    %3647 = vmatprep.subr.bf16.mxu0 %v2508
    %3648 = vmatpush2.bf16.msra.mxu0 %v2507
    %3649 = vmatprep.mubr.bf16.mxu0 %v132
    %3650 = vmatmul.mubr.bf16.gmra.mxu0 %v131
    %v3651 = vpop.f32.mrf.mxu0
    %v3652 = vadd.f32 %v3611, %v3651
    %v3653 = vpop.f32.mrf.mxu0
    %v3654 = vadd.f32 %v3613, %v3653
    %v3655 = vpop.f32.mrf.mxu0
    %v3656 = vpop.f32.mrf.mxu0
    %3657 = vdwg.mxu0
    %3658 = vmatprep.subr.bf16.mxu0 %v2628
    %3659 = vmatpush1.bf16.msra.mxu0 %v2627
    %3660 = vmatprep.subr.bf16.mxu0 %v2620
    %3661 = vmatpush1.bf16.msra.mxu0 %v2619
    %3662 = vmatprep.subr.bf16.mxu0 %v2612
    %3663 = vmatpush1.bf16.msra.mxu0 %v2611
    %3664 = vmatprep.subr.bf16.mxu0 %v2604
    %3665 = vmatpush1.bf16.msra.mxu0 %v2603
    %3666 = vmatprep.subr.bf16.mxu0 %v2596
    %3667 = vmatpush1.bf16.msra.mxu0 %v2595
    %3668 = vmatprep.subr.bf16.mxu0 %v2588
    %3669 = vmatpush1.bf16.msra.mxu0 %v2587
    %3670 = vmatprep.subr.bf16.mxu0 %v2580
    %3671 = vmatpush1.bf16.msra.mxu0 %v2579
    %3672 = vmatprep.subr.bf16.mxu0 %v2572
    %3673 = vmatpush1.bf16.msra.mxu0 %v2571
    %3674 = vmatprep.subr.bf16.mxu0 %v2692
    %3675 = vmatpush2.bf16.msra.mxu0 %v2691
    %3676 = vmatprep.subr.bf16.mxu0 %v2684
    %3677 = vmatpush2.bf16.msra.mxu0 %v2683
    %3678 = vmatprep.subr.bf16.mxu0 %v2676
    %3679 = vmatpush2.bf16.msra.mxu0 %v2675
    %3680 = vmatprep.subr.bf16.mxu0 %v2668
    %3681 = vmatpush2.bf16.msra.mxu0 %v2667
    %3682 = vmatprep.subr.bf16.mxu0 %v2660
    %3683 = vmatpush2.bf16.msra.mxu0 %v2659
    %3684 = vmatprep.subr.bf16.mxu0 %v2652
    %3685 = vmatpush2.bf16.msra.mxu0 %v2651
    %3686 = vmatprep.subr.bf16.mxu0 %v2644
    %3687 = vmatpush2.bf16.msra.mxu0 %v2643
    %3688 = vmatprep.subr.bf16.mxu0 %v2636
    %3689 = vmatpush2.bf16.msra.mxu0 %v2635
    %3690 = vmatprep.mubr.bf16.mxu0 %v134
    %3691 = vmatmul.mubr.bf16.gmra.mxu0 %v133
    %v3692 = vpop.f32.mrf.mxu0
    %v3693 = vadd.f32 %v3652, %v3692
    %v3694 = vpop.f32.mrf.mxu0
    %v3695 = vadd.f32 %v3654, %v3694
    %v3696 = vpop.f32.mrf.mxu0
    %v3697 = vpop.f32.mrf.mxu0
    %3698 = vdwg.mxu0
    %3699 = vmatprep.subr.bf16.mxu0 %v2246
    %3700 = vmatpush1.bf16.msra.mxu0 %v2245
    %3701 = vmatprep.subr.bf16.mxu0 %v2238
    %3702 = vmatpush1.bf16.msra.mxu0 %v2237
    %3703 = vmatprep.subr.bf16.mxu0 %v2230
    %3704 = vmatpush1.bf16.msra.mxu0 %v2229
    %3705 = vmatprep.subr.bf16.mxu0 %v2222
    %3706 = vmatpush1.bf16.msra.mxu0 %v2221
    %3707 = vmatprep.subr.bf16.mxu0 %v2214
    %3708 = vmatpush1.bf16.msra.mxu0 %v2213
    %3709 = vmatprep.subr.bf16.mxu0 %v2206
    %3710 = vmatpush1.bf16.msra.mxu0 %v2205
    %3711 = vmatprep.subr.bf16.mxu0 %v2198
    %3712 = vmatpush1.bf16.msra.mxu0 %v2197
    %3713 = vmatprep.subr.bf16.mxu0 %v2190
    %3714 = vmatpush1.bf16.msra.mxu0 %v2189
    %3715 = vmatprep.subr.bf16.mxu0 %v2310
    %3716 = vmatpush2.bf16.msra.mxu0 %v2309
    %3717 = vmatprep.subr.bf16.mxu0 %v2302
    %3718 = vmatpush2.bf16.msra.mxu0 %v2301
    %3719 = vmatprep.subr.bf16.mxu0 %v2294
    %3720 = vmatpush2.bf16.msra.mxu0 %v2293
    %3721 = vmatprep.subr.bf16.mxu0 %v2286
    %3722 = vmatpush2.bf16.msra.mxu0 %v2285
    %3723 = vmatprep.subr.bf16.mxu0 %v2278
    %3724 = vmatpush2.bf16.msra.mxu0 %v2277
    %3725 = vmatprep.subr.bf16.mxu0 %v2270
    %3726 = vmatpush2.bf16.msra.mxu0 %v2269
    %3727 = vmatprep.subr.bf16.mxu0 %v2262
    %3728 = vmatpush2.bf16.msra.mxu0 %v2261
    %3729 = vmatprep.subr.bf16.mxu0 %v2254
    %3730 = vmatpush2.bf16.msra.mxu0 %v2253
    %3731 = vmatprep.mubr.bf16.mxu0 %v128
    %3732 = vmatmul.mubr.bf16.gmra.mxu0 %v127
    %v3733 = vpop.f32.mrf.mxu0
    %v3734 = vadd.f32 0.0, %v3733
    %v3735 = vpop.f32.mrf.mxu0
    %v3736 = vadd.f32 0.0, %v3735
    %v3737 = vpop.f32.mrf.mxu0
    %v3738 = vpop.f32.mrf.mxu0
    %3739 = vdwg.mxu0
    %3740 = vmatprep.subr.bf16.mxu0 %v2374
    %3741 = vmatpush1.bf16.msra.mxu0 %v2373
    %3742 = vmatprep.subr.bf16.mxu0 %v2366
    %3743 = vmatpush1.bf16.msra.mxu0 %v2365
    %3744 = vmatprep.subr.bf16.mxu0 %v2358
    %3745 = vmatpush1.bf16.msra.mxu0 %v2357
    %3746 = vmatprep.subr.bf16.mxu0 %v2350
    %3747 = vmatpush1.bf16.msra.mxu0 %v2349
    %3748 = vmatprep.subr.bf16.mxu0 %v2342
    %3749 = vmatpush1.bf16.msra.mxu0 %v2341
    %3750 = vmatprep.subr.bf16.mxu0 %v2334
    %3751 = vmatpush1.bf16.msra.mxu0 %v2333
    %3752 = vmatprep.subr.bf16.mxu0 %v2326
    %3753 = vmatpush1.bf16.msra.mxu0 %v2325
    %3754 = vmatprep.subr.bf16.mxu0 %v2318
    %3755 = vmatpush1.bf16.msra.mxu0 %v2317
    %3756 = vmatprep.subr.bf16.mxu0 %v2438
    %3757 = vmatpush2.bf16.msra.mxu0 %v2437
    %3758 = vmatprep.subr.bf16.mxu0 %v2430
    %3759 = vmatpush2.bf16.msra.mxu0 %v2429
    %3760 = vmatprep.subr.bf16.mxu0 %v2422
    %3761 = vmatpush2.bf16.msra.mxu0 %v2421
    %3762 = vmatprep.subr.bf16.mxu0 %v2414
    %3763 = vmatpush2.bf16.msra.mxu0 %v2413
    %3764 = vmatprep.subr.bf16.mxu0 %v2406
    %3765 = vmatpush2.bf16.msra.mxu0 %v2405
    %3766 = vmatprep.subr.bf16.mxu0 %v2398
    %3767 = vmatpush2.bf16.msra.mxu0 %v2397
    %3768 = vmatprep.subr.bf16.mxu0 %v2390
    %3769 = vmatpush2.bf16.msra.mxu0 %v2389
    %3770 = vmatprep.subr.bf16.mxu0 %v2382
    %3771 = vmatpush2.bf16.msra.mxu0 %v2381
    %3772 = vmatprep.mubr.bf16.mxu0 %v130
    %3773 = vmatmul.mubr.bf16.gmra.mxu0 %v129
    %v3774 = vpop.f32.mrf.mxu0
    %v3775 = vadd.f32 %v3734, %v3774
    %v3776 = vpop.f32.mrf.mxu0
    %v3777 = vadd.f32 %v3736, %v3776
    %v3778 = vpop.f32.mrf.mxu0
    %v3779 = vpop.f32.mrf.mxu0
    %3780 = vdwg.mxu0
    %3781 = vmatprep.subr.bf16.mxu0 %v2502
    %3782 = vmatpush1.bf16.msra.mxu0 %v2501
    %3783 = vmatprep.subr.bf16.mxu0 %v2494
    %3784 = vmatpush1.bf16.msra.mxu0 %v2493
    %3785 = vmatprep.subr.bf16.mxu0 %v2486
    %3786 = vmatpush1.bf16.msra.mxu0 %v2485
    %3787 = vmatprep.subr.bf16.mxu0 %v2478
    %3788 = vmatpush1.bf16.msra.mxu0 %v2477
    %3789 = vmatprep.subr.bf16.mxu0 %v2470
    %3790 = vmatpush1.bf16.msra.mxu0 %v2469
    %3791 = vmatprep.subr.bf16.mxu0 %v2462
    %3792 = vmatpush1.bf16.msra.mxu0 %v2461
    %3793 = vmatprep.subr.bf16.mxu0 %v2454
    %3794 = vmatpush1.bf16.msra.mxu0 %v2453
    %3795 = vmatprep.subr.bf16.mxu0 %v2446
    %3796 = vmatpush1.bf16.msra.mxu0 %v2445
    %3797 = vmatprep.subr.bf16.mxu0 %v2566
    %3798 = vmatpush2.bf16.msra.mxu0 %v2565
    %3799 = vmatprep.subr.bf16.mxu0 %v2558
    %3800 = vmatpush2.bf16.msra.mxu0 %v2557
    %3801 = vmatprep.subr.bf16.mxu0 %v2550
    %3802 = vmatpush2.bf16.msra.mxu0 %v2549
    %3803 = vmatprep.subr.bf16.mxu0 %v2542
    %3804 = vmatpush2.bf16.msra.mxu0 %v2541
    %3805 = vmatprep.subr.bf16.mxu0 %v2534
    %3806 = vmatpush2.bf16.msra.mxu0 %v2533
    %3807 = vmatprep.subr.bf16.mxu0 %v2526
    %3808 = vmatpush2.bf16.msra.mxu0 %v2525
    %3809 = vmatprep.subr.bf16.mxu0 %v2518
    %3810 = vmatpush2.bf16.msra.mxu0 %v2517
    %3811 = vmatprep.subr.bf16.mxu0 %v2510
    %3812 = vmatpush2.bf16.msra.mxu0 %v2509
    %3813 = vmatprep.mubr.bf16.mxu0 %v132
    %3814 = vmatmul.mubr.bf16.gmra.mxu0 %v131
    %v3815 = vpop.f32.mrf.mxu0
    %v3816 = vadd.f32 %v3775, %v3815
    %v3817 = vpop.f32.mrf.mxu0
    %v3818 = vadd.f32 %v3777, %v3817
    %v3819 = vpop.f32.mrf.mxu0
    %v3820 = vpop.f32.mrf.mxu0
    %3821 = vdwg.mxu0
    %3822 = vmatprep.subr.bf16.mxu0 %v2630
    %3823 = vmatpush1.bf16.msra.mxu0 %v2629
    %3824 = vmatprep.subr.bf16.mxu0 %v2622
    %3825 = vmatpush1.bf16.msra.mxu0 %v2621
    %3826 = vmatprep.subr.bf16.mxu0 %v2614
    %3827 = vmatpush1.bf16.msra.mxu0 %v2613
    %3828 = vmatprep.subr.bf16.mxu0 %v2606
    %3829 = vmatpush1.bf16.msra.mxu0 %v2605
    %3830 = vmatprep.subr.bf16.mxu0 %v2598
    %3831 = vmatpush1.bf16.msra.mxu0 %v2597
    %3832 = vmatprep.subr.bf16.mxu0 %v2590
    %3833 = vmatpush1.bf16.msra.mxu0 %v2589
    %3834 = vmatprep.subr.bf16.mxu0 %v2582
    %3835 = vmatpush1.bf16.msra.mxu0 %v2581
    %3836 = vmatprep.subr.bf16.mxu0 %v2574
    %3837 = vmatpush1.bf16.msra.mxu0 %v2573
    %3838 = vmatprep.subr.bf16.mxu0 %v2694
    %3839 = vmatpush2.bf16.msra.mxu0 %v2693
    %3840 = vmatprep.subr.bf16.mxu0 %v2686
    %3841 = vmatpush2.bf16.msra.mxu0 %v2685
    %3842 = vmatprep.subr.bf16.mxu0 %v2678
    %3843 = vmatpush2.bf16.msra.mxu0 %v2677
    %3844 = vmatprep.subr.bf16.mxu0 %v2670
    %3845 = vmatpush2.bf16.msra.mxu0 %v2669
    %3846 = vmatprep.subr.bf16.mxu0 %v2662
    %3847 = vmatpush2.bf16.msra.mxu0 %v2661
    %3848 = vmatprep.subr.bf16.mxu0 %v2654
    %3849 = vmatpush2.bf16.msra.mxu0 %v2653
    %3850 = vmatprep.subr.bf16.mxu0 %v2646
    %3851 = vmatpush2.bf16.msra.mxu0 %v2645
    %3852 = vmatprep.subr.bf16.mxu0 %v2638
    %3853 = vmatpush2.bf16.msra.mxu0 %v2637
    %3854 = vmatprep.mubr.bf16.mxu0 %v134
    %3855 = vmatmul.mubr.bf16.gmra.mxu0 %v133
    %v3856 = vpop.f32.mrf.mxu0
    %v3857 = vadd.f32 %v3816, %v3856
    %v3858 = vpop.f32.mrf.mxu0
    %v3859 = vadd.f32 %v3818, %v3858
    %v3860 = vpop.f32.mrf.mxu0
    %v3861 = vpop.f32.mrf.mxu0
    %3862 = vdwg.mxu0
    %v3863 = vld [vmem:[#allocation13] sm:$0xff]
    %v3864 = vld [vmem:[#allocation13 + $0xf] sm:$0xff]
    %v3865 = vrot.slane %v3365, 4
    %v3866 = vadd.f32 %v3365, %v3865
    %v3867 = vrot.slane %v3866, 2
    %v3868 = vadd.f32 %v3866, %v3867
    %v3869 = vrot.slane %v3868, 1
    %v3870 = vadd.f32 %v3868, %v3869
    %v3871 = vrot.slane %v3367, 4
    %v3872 = vadd.f32 %v3367, %v3871
    %v3873 = vrot.slane %v3872, 2
    %v3874 = vadd.f32 %v3872, %v3873
    %v3875 = vrot.slane %v3874, 1
    %v3876 = vadd.f32 %v3874, %v3875
    %v3877 = vrot.slane %v3529, 4
    %v3878 = vadd.f32 %v3529, %v3877
    %v3879 = vrot.slane %v3878, 2
    %v3880 = vadd.f32 %v3878, %v3879
    %v3881 = vrot.slane %v3880, 1
    %v3882 = vadd.f32 %v3880, %v3881
    %v3883 = vrot.slane %v3531, 4
    %v3884 = vadd.f32 %v3531, %v3883
    %v3885 = vrot.slane %v3884, 2
    %v3886 = vadd.f32 %v3884, %v3885
    %v3887 = vrot.slane %v3886, 1
    %v3888 = vadd.f32 %v3886, %v3887
    %v3889 = vrot.slane %v3693, 4
    %v3890 = vadd.f32 %v3693, %v3889
    %v3891 = vrot.slane %v3890, 2
    %v3892 = vadd.f32 %v3890, %v3891
    %v3893 = vrot.slane %v3892, 1
    %v3894 = vadd.f32 %v3892, %v3893
    %v3895 = vrot.slane %v3695, 4
    %v3896 = vadd.f32 %v3695, %v3895
    %v3897 = vrot.slane %v3896, 2
    %v3898 = vadd.f32 %v3896, %v3897
    %v3899 = vrot.slane %v3898, 1
    %v3900 = vadd.f32 %v3898, %v3899
    %v3901 = vrot.slane %v3857, 4
    %v3902 = vadd.f32 %v3857, %v3901
    %v3903 = vrot.slane %v3902, 2
    %v3904 = vadd.f32 %v3902, %v3903
    %v3905 = vrot.slane %v3904, 1
    %v3906 = vadd.f32 %v3904, %v3905
    %v3907 = vrot.slane %v3859, 4
    %v3908 = vadd.f32 %v3859, %v3907
    %v3909 = vrot.slane %v3908, 2
    %v3910 = vadd.f32 %v3908, %v3909
    %v3911 = vrot.slane %v3910, 1
    %v3912 = vadd.f32 %v3910, %v3911
    %v3913 = vrcp.pop 8.0
    %v3914 = vmul.f32 %v3870, %v3913
    %v3915 = vmul.f32 %v3876, %v3913
    %v3916 = vmul.f32 %v3882, %v3913
    %v3917 = vmul.f32 %v3888, %v3913
    %v3918 = vmul.f32 %v3894, %v3913
    %v3919 = vmul.f32 %v3900, %v3913
    %v3920 = vmul.f32 %v3906, %v3913
    %v3921 = vmul.f32 %v3912, %v3913
    %v3922 = vsub.f32 %v3365, %v3914
    %v3923 = vsub.f32 %v3367, %v3915
    %v3924 = vsub.f32 %v3529, %v3916
    %v3925 = vsub.f32 %v3531, %v3917
    %v3926 = vsub.f32 %v3693, %v3918
    %v3927 = vsub.f32 %v3695, %v3919
    %v3928 = vsub.f32 %v3857, %v3920
    %v3929 = vsub.f32 %v3859, %v3921
    %v3930 = vmul.f32 %v3922, %v3922
    %v3931 = vmul.f32 %v3923, %v3923
    %v3932 = vmul.f32 %v3924, %v3924
    %v3933 = vmul.f32 %v3925, %v3925
    %v3934 = vmul.f32 %v3926, %v3926
    %v3935 = vmul.f32 %v3927, %v3927
    %v3936 = vmul.f32 %v3928, %v3928
    %v3937 = vmul.f32 %v3929, %v3929
    %v3938 = vrot.slane %v3930, 4
    %v3939 = vadd.f32 %v3930, %v3938
    %v3940 = vrot.slane %v3939, 2
    %v3941 = vadd.f32 %v3939, %v3940
    %v3942 = vrot.slane %v3941, 1
    %v3943 = vadd.f32 %v3941, %v3942
    %v3944 = vrot.slane %v3931, 4
    %v3945 = vadd.f32 %v3931, %v3944
    %v3946 = vrot.slane %v3945, 2
    %v3947 = vadd.f32 %v3945, %v3946
    %v3948 = vrot.slane %v3947, 1
    %v3949 = vadd.f32 %v3947, %v3948
    %v3950 = vrot.slane %v3932, 4
    %v3951 = vadd.f32 %v3932, %v3950
    %v3952 = vrot.slane %v3951, 2
    %v3953 = vadd.f32 %v3951, %v3952
    %v3954 = vrot.slane %v3953, 1
    %v3955 = vadd.f32 %v3953, %v3954
    %v3956 = vrot.slane %v3933, 4
    %v3957 = vadd.f32 %v3933, %v3956
    %v3958 = vrot.slane %v3957, 2
    %v3959 = vadd.f32 %v3957, %v3958
    %v3960 = vrot.slane %v3959, 1
    %v3961 = vadd.f32 %v3959, %v3960
    %v3962 = vrot.slane %v3934, 4
    %v3963 = vadd.f32 %v3934, %v3962
    %v3964 = vrot.slane %v3963, 2
    %v3965 = vadd.f32 %v3963, %v3964
    %v3966 = vrot.slane %v3965, 1
    %v3967 = vadd.f32 %v3965, %v3966
    %v3968 = vrot.slane %v3935, 4
    %v3969 = vadd.f32 %v3935, %v3968
    %v3970 = vrot.slane %v3969, 2
    %v3971 = vadd.f32 %v3969, %v3970
    %v3972 = vrot.slane %v3971, 1
    %v3973 = vadd.f32 %v3971, %v3972
    %v3974 = vrot.slane %v3936, 4
    %v3975 = vadd.f32 %v3936, %v3974
    %v3976 = vrot.slane %v3975, 2
    %v3977 = vadd.f32 %v3975, %v3976
    %v3978 = vrot.slane %v3977, 1
    %v3979 = vadd.f32 %v3977, %v3978
    %v3980 = vrot.slane %v3937, 4
    %v3981 = vadd.f32 %v3937, %v3980
    %v3982 = vrot.slane %v3981, 2
    %v3983 = vadd.f32 %v3981, %v3982
    %v3984 = vrot.slane %v3983, 1
    %v3985 = vadd.f32 %v3983, %v3984
    %v3986 = vmul.f32 %v3943, %v3913
    %v3987 = vmul.f32 %v3949, %v3913
    %v3988 = vmul.f32 %v3955, %v3913
    %v3989 = vmul.f32 %v3961, %v3913
    %v3990 = vmul.f32 %v3967, %v3913
    %v3991 = vmul.f32 %v3973, %v3913
    %v3992 = vmul.f32 %v3979, %v3913
    %v3993 = vmul.f32 %v3985, %v3913
    %v3994 = vadd.f32 %v3986, 1e-05
    %v3995 = vadd.f32 %v3987, 1e-05
    %v3996 = vadd.f32 %v3988, 1e-05
    %v3997 = vadd.f32 %v3989, 1e-05
    %v3998 = vadd.f32 %v3990, 1e-05
    %v3999 = vadd.f32 %v3991, 1e-05
    %v4000 = vadd.f32 %v3992, 1e-05
    %v4001 = vadd.f32 %v3993, 1e-05
    %v4002 = vrsqrt.pop %v3994
    %v4003 = vrsqrt.pop %v3995
    %v4004 = vrsqrt.pop %v3996
    %v4005 = vrsqrt.pop %v3997
    %v4006 = vrsqrt.pop %v3998
    %v4007 = vrsqrt.pop %v3999
    %v4008 = vrsqrt.pop %v4000
    %v4009 = vrsqrt.pop %v4001
    %v4018 = vcombine.low %v4002, %v4003
    %v4019 = vcombine.low %v4004, %v4005
    %v4020 = vcombine.low %v4006, %v4007
    %v4021 = vcombine.low %v4008, %v4009
    %v4023 = vunpack.c.l.s4 1966171168
    %v4024 = vunpack.c.0.s8 %v4023
    %v4025 = vlaneseq
    %v4026 = vshrl.u32 %v4025, 7
    %v4027 = vsub.s32 %v4024, %v4026
    %v4028 = vrot.slane %v4018, %v4027
    %v4030 = vunpack.c.l.s4 1966171168
    %v4031 = vunpack.c.0.s8 %v4030
    %v4032 = vlaneseq
    %v4033 = vshrl.u32 %v4032, 7
    %v4034 = vsub.s32 %v4031, %v4033
    %v4035 = vrot.slane %v4019, %v4034
    %v4037 = vunpack.c.l.s4 1966171168
    %v4038 = vunpack.c.0.s8 %v4037
    %v4039 = vlaneseq
    %v4040 = vshrl.u32 %v4039, 7
    %v4041 = vsub.s32 %v4038, %v4040
    %v4042 = vrot.slane %v4020, %v4041
    %v4044 = vunpack.c.l.s4 1966171168
    %v4045 = vunpack.c.0.s8 %v4044
    %v4046 = vlaneseq
    %v4047 = vshrl.u32 %v4046, 7
    %v4048 = vsub.s32 %v4045, %v4047
    %v4049 = vrot.slane %v4021, %v4048
    %v4050 = vcombine.low %v4028, %v4035
    %v4051 = vcombine.low %v4042, %v4049
    %v4053 = vunpack.c.l.s4 1966171168
    %v4054 = vunpack.c.0.s8 %v4053
    %v4055 = vlaneseq
    %v4056 = vshrl.u32 %v4055, 7
    %v4057 = vsub.s32 %v4054, %v4056
    %v4058 = vrot.slane %v4050, %v4057
    %v4060 = vunpack.c.l.s4 1966171168
    %v4061 = vunpack.c.0.s8 %v4060
    %v4062 = vlaneseq
    %v4063 = vshrl.u32 %v4062, 7
    %v4064 = vsub.s32 %v4061, %v4063
    %v4065 = vrot.slane %v4051, %v4064
    %v4066 = vcombine.low %v4058, %v4065
    %v4068 = vmul.f32 %v3863, %v4066
    %v4070 = vlaneseq
    %v4071 = vshrl.u32 %v4070, 7
    %v4072 = vsub.s32 0, %v4071
    %v4073 = vrot.slane %v4068, %v4072
    %v4074 = vlaneseq
    %v4075 = vshrl.u32 %v4074, 7
    %v4076 = vsub.s32 1, %v4075
    %v4077 = vrot.slane %v4068, %v4076
    %v4078 = vlaneseq
    %v4079 = vshrl.u32 %v4078, 7
    %v4080 = vsub.s32 2, %v4079
    %v4081 = vrot.slane %v4068, %v4080
    %v4082 = vlaneseq
    %v4083 = vshrl.u32 %v4082, 7
    %v4084 = vsub.s32 3, %v4083
    %v4085 = vrot.slane %v4068, %v4084
    %v4086 = vlaneseq
    %v4087 = vshrl.u32 %v4086, 7
    %v4088 = vsub.s32 4, %v4087
    %v4089 = vrot.slane %v4068, %v4088
    %v4090 = vlaneseq
    %v4091 = vshrl.u32 %v4090, 7
    %v4092 = vsub.s32 5, %v4091
    %v4093 = vrot.slane %v4068, %v4092
    %v4094 = vlaneseq
    %v4095 = vshrl.u32 %v4094, 7
    %v4096 = vsub.s32 6, %v4095
    %v4097 = vrot.slane %v4068, %v4096
    %v4098 = vlaneseq
    %v4099 = vshrl.u32 %v4098, 7
    %v4100 = vsub.s32 7, %v4099
    %v4101 = vrot.slane %v4068, %v4100
    %v4110 = vmul.f32 %v3914, %v4073
    %v4111 = vmul.f32 %v3915, %v4077
    %v4112 = vmul.f32 %v3916, %v4081
    %v4113 = vmul.f32 %v3917, %v4085
    %v4114 = vmul.f32 %v3918, %v4089
    %v4115 = vmul.f32 %v3919, %v4093
    %v4116 = vmul.f32 %v3920, %v4097
    %v4117 = vmul.f32 %v3921, %v4101
    %v4126 = vcombine.low %v4110, %v4111
    %v4127 = vcombine.low %v4112, %v4113
    %v4128 = vcombine.low %v4114, %v4115
    %v4129 = vcombine.low %v4116, %v4117
    %v4131 = vunpack.c.l.s4 1966171168
    %v4132 = vunpack.c.0.s8 %v4131
    %v4133 = vlaneseq
    %v4134 = vshrl.u32 %v4133, 7
    %v4135 = vsub.s32 %v4132, %v4134
    %v4136 = vrot.slane %v4126, %v4135
    %v4138 = vunpack.c.l.s4 1966171168
    %v4139 = vunpack.c.0.s8 %v4138
    %v4140 = vlaneseq
    %v4141 = vshrl.u32 %v4140, 7
    %v4142 = vsub.s32 %v4139, %v4141
    %v4143 = vrot.slane %v4127, %v4142
    %v4145 = vunpack.c.l.s4 1966171168
    %v4146 = vunpack.c.0.s8 %v4145
    %v4147 = vlaneseq
    %v4148 = vshrl.u32 %v4147, 7
    %v4149 = vsub.s32 %v4146, %v4148
    %v4150 = vrot.slane %v4128, %v4149
    %v4152 = vunpack.c.l.s4 1966171168
    %v4153 = vunpack.c.0.s8 %v4152
    %v4154 = vlaneseq
    %v4155 = vshrl.u32 %v4154, 7
    %v4156 = vsub.s32 %v4153, %v4155
    %v4157 = vrot.slane %v4129, %v4156
    %v4158 = vcombine.low %v4136, %v4143
    %v4159 = vcombine.low %v4150, %v4157
    %v4161 = vunpack.c.l.s4 1966171168
    %v4162 = vunpack.c.0.s8 %v4161
    %v4163 = vlaneseq
    %v4164 = vshrl.u32 %v4163, 7
    %v4165 = vsub.s32 %v4162, %v4164
    %v4166 = vrot.slane %v4158, %v4165
    %v4168 = vunpack.c.l.s4 1966171168
    %v4169 = vunpack.c.0.s8 %v4168
    %v4170 = vlaneseq
    %v4171 = vshrl.u32 %v4170, 7
    %v4172 = vsub.s32 %v4169, %v4171
    %v4173 = vrot.slane %v4159, %v4172
    %v4174 = vcombine.low %v4166, %v4173
    %v4176 = vsub.f32 %v3864, %v4174
    %v4177 = vmul.f32 %v3365, %v4073
    %v4178 = vmul.f32 %v3367, %v4077
    %v4179 = vmul.f32 %v3529, %v4081
    %v4180 = vmul.f32 %v3531, %v4085
    %v4181 = vmul.f32 %v3693, %v4089
    %v4182 = vmul.f32 %v3695, %v4093
    %v4183 = vmul.f32 %v3857, %v4097
    %v4184 = vmul.f32 %v3859, %v4101
    %v4186 = vlaneseq
    %v4187 = vshrl.u32 %v4186, 7
    %v4188 = vsub.s32 0, %v4187
    %v4189 = vrot.slane %v4176, %v4188
    %v4190 = vlaneseq
    %v4191 = vshrl.u32 %v4190, 7
    %v4192 = vsub.s32 1, %v4191
    %v4193 = vrot.slane %v4176, %v4192
    %v4194 = vlaneseq
    %v4195 = vshrl.u32 %v4194, 7
    %v4196 = vsub.s32 2, %v4195
    %v4197 = vrot.slane %v4176, %v4196
    %v4198 = vlaneseq
    %v4199 = vshrl.u32 %v4198, 7
    %v4200 = vsub.s32 3, %v4199
    %v4201 = vrot.slane %v4176, %v4200
    %v4202 = vlaneseq
    %v4203 = vshrl.u32 %v4202, 7
    %v4204 = vsub.s32 4, %v4203
    %v4205 = vrot.slane %v4176, %v4204
    %v4206 = vlaneseq
    %v4207 = vshrl.u32 %v4206, 7
    %v4208 = vsub.s32 5, %v4207
    %v4209 = vrot.slane %v4176, %v4208
    %v4210 = vlaneseq
    %v4211 = vshrl.u32 %v4210, 7
    %v4212 = vsub.s32 6, %v4211
    %v4213 = vrot.slane %v4176, %v4212
    %v4214 = vlaneseq
    %v4215 = vshrl.u32 %v4214, 7
    %v4216 = vsub.s32 7, %v4215
    %v4217 = vrot.slane %v4176, %v4216
    %v4226 = vadd.f32 %v4177, %v4189
    %v4227 = vadd.f32 %v4178, %v4193
    %v4228 = vadd.f32 %v4179, %v4197
    %v4229 = vadd.f32 %v4180, %v4201
    %v4230 = vadd.f32 %v4181, %v4205
    %v4231 = vadd.f32 %v4182, %v4209
    %v4232 = vadd.f32 %v4183, %v4213
    %v4233 = vadd.f32 %v4184, %v4217
    %v4234 = vmul.f32 %v4226, 0.2
    %v4235 = vmul.f32 %v4227, 0.2
    %v4236 = vmul.f32 %v4228, 0.2
    %v4237 = vmul.f32 %v4229, 0.2
    %v4238 = vmul.f32 %v4230, 0.2
    %v4239 = vmul.f32 %v4231, 0.2
    %v4240 = vmul.f32 %v4232, 0.2
    %v4241 = vmul.f32 %v4233, 0.2
    %v4242 = vmax.f32 %v4226, %v4234
    %v4243 = vmax.f32 %v4227, %v4235
    %v4244 = vmax.f32 %v4228, %v4236
    %v4245 = vmax.f32 %v4229, %v4237
    %v4246 = vmax.f32 %v4230, %v4238
    %v4247 = vmax.f32 %v4231, %v4239
    %v4248 = vmax.f32 %v4232, %v4240
    %v4249 = vmax.f32 %v4233, %v4241
    %v4250 = vpack.c.bf16 %v4242, %v4242
    %v4251 = vpack.c.bf16 %v4243, %v4243
    %v4252 = vpack.c.bf16 %v4244, %v4244
    %v4253 = vpack.c.bf16 %v4245, %v4245
    %v4254 = vpack.c.bf16 %v4246, %v4246
    %v4255 = vpack.c.bf16 %v4247, %v4247
    %v4256 = vpack.c.bf16 %v4248, %v4248
    %v4257 = vpack.c.bf16 %v4249, %v4249
    %v4258 = vld [vmem:[#allocation7] sm:$0xff]
    %v4259 = vld [vmem:[#allocation7 + $0x8] sm:$0xff]
    %v4260 = vld [vmem:[#allocation7 + $0x10] sm:$0xff]
    %v4261 = vld [vmem:[#allocation7 + $0x18] sm:$0xff]
    %v4262 = vld [vmem:[#allocation7 + $0x20] sm:$0xff]
    %v4263 = vld [vmem:[#allocation7 + $0x28] sm:$0xff]
    %v4264 = vld [vmem:[#allocation7 + $0x30] sm:$0xff]
    %v4265 = vld [vmem:[#allocation7 + $0x38] sm:$0xff]
    %v4266 = vld [vmem:[#allocation7 + $0x40] sm:$0xff]
    %v4267 = vld [vmem:[#allocation7 + $0x48] sm:$0xff]
    %v4268 = vld [vmem:[#allocation7 + $0x50] sm:$0xff]
    %v4269 = vld [vmem:[#allocation7 + $0x58] sm:$0xff]
    %v4270 = vld [vmem:[#allocation7 + $0x60] sm:$0xff]
    %v4271 = vld [vmem:[#allocation7 + $0x68] sm:$0xff]
    %v4272 = vld [vmem:[#allocation7 + $0x70] sm:$0xff]
    %v4273 = vld [vmem:[#allocation7 + $0x78] sm:$0xff]
    %v4274 = vld [vmem:[#allocation7 + $0x80] sm:$0xff]
    %v4275 = vld [vmem:[#allocation7 + $0x88] sm:$0xff]
    %v4276 = vld [vmem:[#allocation7 + $0x90] sm:$0xff]
    %v4277 = vld [vmem:[#allocation7 + $0x98] sm:$0xff]
    %v4278 = vld [vmem:[#allocation7 + $0xa0] sm:$0xff]
    %v4279 = vld [vmem:[#allocation7 + $0xa8] sm:$0xff]
    %v4280 = vld [vmem:[#allocation7 + $0xb0] sm:$0xff]
    %v4281 = vld [vmem:[#allocation7 + $0xb8] sm:$0xff]
    %v4282 = vld [vmem:[#allocation7 + $0xc0] sm:$0xff]
    %v4283 = vld [vmem:[#allocation7 + $0xc8] sm:$0xff]
    %v4284 = vld [vmem:[#allocation7 + $0xd0] sm:$0xff]
    %v4285 = vld [vmem:[#allocation7 + $0xd8] sm:$0xff]
    %v4286 = vld [vmem:[#allocation7 + $0xe0] sm:$0xff]
    %v4287 = vld [vmem:[#allocation7 + $0xe8] sm:$0xff]
    %v4288 = vld [vmem:[#allocation7 + $0xf0] sm:$0xff]
    %v4289 = vld [vmem:[#allocation7 + $0xf8] sm:$0xff]
    %v4290 = vld [vmem:[#allocation7 + $0x100] sm:$0xff]
    %v4291 = vld [vmem:[#allocation7 + $0x108] sm:$0xff]
    %v4292 = vld [vmem:[#allocation7 + $0x110] sm:$0xff]
    %v4293 = vld [vmem:[#allocation7 + $0x118] sm:$0xff]
    %v4294 = vld [vmem:[#allocation7 + $0x120] sm:$0xff]
    %v4295 = vld [vmem:[#allocation7 + $0x128] sm:$0xff]
    %v4296 = vld [vmem:[#allocation7 + $0x130] sm:$0xff]
    %v4297 = vld [vmem:[#allocation7 + $0x138] sm:$0xff]
    %v4298 = vld [vmem:[#allocation7 + $0x140] sm:$0xff]
    %v4299 = vld [vmem:[#allocation7 + $0x148] sm:$0xff]
    %v4300 = vld [vmem:[#allocation7 + $0x150] sm:$0xff]
    %v4301 = vld [vmem:[#allocation7 + $0x158] sm:$0xff]
    %v4302 = vld [vmem:[#allocation7 + $0x160] sm:$0xff]
    %v4303 = vld [vmem:[#allocation7 + $0x168] sm:$0xff]
    %v4304 = vld [vmem:[#allocation7 + $0x170] sm:$0xff]
    %v4305 = vld [vmem:[#allocation7 + $0x178] sm:$0xff]
    %v4306 = vld [vmem:[#allocation7 + $0x180] sm:$0xff]
    %v4307 = vld [vmem:[#allocation7 + $0x188] sm:$0xff]
    %v4308 = vld [vmem:[#allocation7 + $0x190] sm:$0xff]
    %v4309 = vld [vmem:[#allocation7 + $0x198] sm:$0xff]
    %v4310 = vld [vmem:[#allocation7 + $0x1a0] sm:$0xff]
    %v4311 = vld [vmem:[#allocation7 + $0x1a8] sm:$0xff]
    %v4312 = vld [vmem:[#allocation7 + $0x1b0] sm:$0xff]
    %v4313 = vld [vmem:[#allocation7 + $0x1b8] sm:$0xff]
    %v4314 = vld [vmem:[#allocation7 + $0x1c0] sm:$0xff]
    %v4315 = vld [vmem:[#allocation7 + $0x1c8] sm:$0xff]
    %v4316 = vld [vmem:[#allocation7 + $0x1d0] sm:$0xff]
    %v4317 = vld [vmem:[#allocation7 + $0x1d8] sm:$0xff]
    %v4318 = vld [vmem:[#allocation7 + $0x1e0] sm:$0xff]
    %v4319 = vld [vmem:[#allocation7 + $0x1e8] sm:$0xff]
    %v4320 = vld [vmem:[#allocation7 + $0x1f0] sm:$0xff]
    %v4321 = vld [vmem:[#allocation7 + $0x1f8] sm:$0xff]
    %v4322 = vld [vmem:[#allocation7 + $0x200] sm:$0xff]
    %v4323 = vld [vmem:[#allocation7 + $0x208] sm:$0xff]
    %v4324 = vld [vmem:[#allocation7 + $0x210] sm:$0xff]
    %v4325 = vld [vmem:[#allocation7 + $0x218] sm:$0xff]
    %v4326 = vld [vmem:[#allocation7 + $0x220] sm:$0xff]
    %v4327 = vld [vmem:[#allocation7 + $0x228] sm:$0xff]
    %v4328 = vld [vmem:[#allocation7 + $0x230] sm:$0xff]
    %v4329 = vld [vmem:[#allocation7 + $0x238] sm:$0xff]
    %v4330 = vld [vmem:[#allocation7 + $0x240] sm:$0xff]
    %v4331 = vld [vmem:[#allocation7 + $0x248] sm:$0xff]
    %v4332 = vld [vmem:[#allocation7 + $0x250] sm:$0xff]
    %v4333 = vld [vmem:[#allocation7 + $0x258] sm:$0xff]
    %v4334 = vld [vmem:[#allocation7 + $0x260] sm:$0xff]
    %v4335 = vld [vmem:[#allocation7 + $0x268] sm:$0xff]
    %v4336 = vld [vmem:[#allocation7 + $0x270] sm:$0xff]
    %v4337 = vld [vmem:[#allocation7 + $0x278] sm:$0xff]
    %v4338 = vld [vmem:[#allocation7 + $0x280] sm:$0xff]
    %v4339 = vld [vmem:[#allocation7 + $0x288] sm:$0xff]
    %v4340 = vld [vmem:[#allocation7 + $0x290] sm:$0xff]
    %v4341 = vld [vmem:[#allocation7 + $0x298] sm:$0xff]
    %v4342 = vld [vmem:[#allocation7 + $0x2a0] sm:$0xff]
    %v4343 = vld [vmem:[#allocation7 + $0x2a8] sm:$0xff]
    %v4344 = vld [vmem:[#allocation7 + $0x2b0] sm:$0xff]
    %v4345 = vld [vmem:[#allocation7 + $0x2b8] sm:$0xff]
    %v4346 = vld [vmem:[#allocation7 + $0x2c0] sm:$0xff]
    %v4347 = vld [vmem:[#allocation7 + $0x2c8] sm:$0xff]
    %v4348 = vld [vmem:[#allocation7 + $0x2d0] sm:$0xff]
    %v4349 = vld [vmem:[#allocation7 + $0x2d8] sm:$0xff]
    %v4350 = vld [vmem:[#allocation7 + $0x2e0] sm:$0xff]
    %v4351 = vld [vmem:[#allocation7 + $0x2e8] sm:$0xff]
    %v4352 = vld [vmem:[#allocation7 + $0x2f0] sm:$0xff]
    %v4353 = vld [vmem:[#allocation7 + $0x2f8] sm:$0xff]
    %v4354 = vld [vmem:[#allocation7 + $0x300] sm:$0xff]
    %v4355 = vld [vmem:[#allocation7 + $0x308] sm:$0xff]
    %v4356 = vld [vmem:[#allocation7 + $0x310] sm:$0xff]
    %v4357 = vld [vmem:[#allocation7 + $0x318] sm:$0xff]
    %v4358 = vld [vmem:[#allocation7 + $0x320] sm:$0xff]
    %v4359 = vld [vmem:[#allocation7 + $0x328] sm:$0xff]
    %v4360 = vld [vmem:[#allocation7 + $0x330] sm:$0xff]
    %v4361 = vld [vmem:[#allocation7 + $0x338] sm:$0xff]
    %v4362 = vld [vmem:[#allocation7 + $0x340] sm:$0xff]
    %v4363 = vld [vmem:[#allocation7 + $0x348] sm:$0xff]
    %v4364 = vld [vmem:[#allocation7 + $0x350] sm:$0xff]
    %v4365 = vld [vmem:[#allocation7 + $0x358] sm:$0xff]
    %v4366 = vld [vmem:[#allocation7 + $0x360] sm:$0xff]
    %v4367 = vld [vmem:[#allocation7 + $0x368] sm:$0xff]
    %v4368 = vld [vmem:[#allocation7 + $0x370] sm:$0xff]
    %v4369 = vld [vmem:[#allocation7 + $0x378] sm:$0xff]
    %v4370 = vld [vmem:[#allocation7 + $0x380] sm:$0xff]
    %v4371 = vld [vmem:[#allocation7 + $0x388] sm:$0xff]
    %v4372 = vld [vmem:[#allocation7 + $0x390] sm:$0xff]
    %v4373 = vld [vmem:[#allocation7 + $0x398] sm:$0xff]
    %v4374 = vld [vmem:[#allocation7 + $0x3a0] sm:$0xff]
    %v4375 = vld [vmem:[#allocation7 + $0x3a8] sm:$0xff]
    %v4376 = vld [vmem:[#allocation7 + $0x3b0] sm:$0xff]
    %v4377 = vld [vmem:[#allocation7 + $0x3b8] sm:$0xff]
    %v4378 = vld [vmem:[#allocation7 + $0x3c0] sm:$0xff]
    %v4379 = vld [vmem:[#allocation7 + $0x3c8] sm:$0xff]
    %v4380 = vld [vmem:[#allocation7 + $0x3d0] sm:$0xff]
    %v4381 = vld [vmem:[#allocation7 + $0x3d8] sm:$0xff]
    %v4382 = vld [vmem:[#allocation7 + $0x3e0] sm:$0xff]
    %v4383 = vld [vmem:[#allocation7 + $0x3e8] sm:$0xff]
    %v4384 = vld [vmem:[#allocation7 + $0x3f0] sm:$0xff]
    %v4385 = vld [vmem:[#allocation7 + $0x3f8] sm:$0xff]
    %v4386 = vld [vmem:[#allocation7 + $0x400] sm:$0xff]
    %v4387 = vld [vmem:[#allocation7 + $0x408] sm:$0xff]
    %v4388 = vld [vmem:[#allocation7 + $0x410] sm:$0xff]
    %v4389 = vld [vmem:[#allocation7 + $0x418] sm:$0xff]
    %v4390 = vld [vmem:[#allocation7 + $0x420] sm:$0xff]
    %v4391 = vld [vmem:[#allocation7 + $0x428] sm:$0xff]
    %v4392 = vld [vmem:[#allocation7 + $0x430] sm:$0xff]
    %v4393 = vld [vmem:[#allocation7 + $0x438] sm:$0xff]
    %v4394 = vld [vmem:[#allocation7 + $0x440] sm:$0xff]
    %v4395 = vld [vmem:[#allocation7 + $0x448] sm:$0xff]
    %v4396 = vld [vmem:[#allocation7 + $0x450] sm:$0xff]
    %v4397 = vld [vmem:[#allocation7 + $0x458] sm:$0xff]
    %v4398 = vld [vmem:[#allocation7 + $0x460] sm:$0xff]
    %v4399 = vld [vmem:[#allocation7 + $0x468] sm:$0xff]
    %v4400 = vld [vmem:[#allocation7 + $0x470] sm:$0xff]
    %v4401 = vld [vmem:[#allocation7 + $0x478] sm:$0xff]
    %v4402 = vld [vmem:[#allocation7 + $0x480] sm:$0xff]
    %v4403 = vld [vmem:[#allocation7 + $0x488] sm:$0xff]
    %v4404 = vld [vmem:[#allocation7 + $0x490] sm:$0xff]
    %v4405 = vld [vmem:[#allocation7 + $0x498] sm:$0xff]
    %v4406 = vld [vmem:[#allocation7 + $0x4a0] sm:$0xff]
    %v4407 = vld [vmem:[#allocation7 + $0x4a8] sm:$0xff]
    %v4408 = vld [vmem:[#allocation7 + $0x4b0] sm:$0xff]
    %v4409 = vld [vmem:[#allocation7 + $0x4b8] sm:$0xff]
    %v4410 = vld [vmem:[#allocation7 + $0x4c0] sm:$0xff]
    %v4411 = vld [vmem:[#allocation7 + $0x4c8] sm:$0xff]
    %v4412 = vld [vmem:[#allocation7 + $0x4d0] sm:$0xff]
    %v4413 = vld [vmem:[#allocation7 + $0x4d8] sm:$0xff]
    %v4414 = vld [vmem:[#allocation7 + $0x4e0] sm:$0xff]
    %v4415 = vld [vmem:[#allocation7 + $0x4e8] sm:$0xff]
    %v4416 = vld [vmem:[#allocation7 + $0x4f0] sm:$0xff]
    %v4417 = vld [vmem:[#allocation7 + $0x4f8] sm:$0xff]
    %v4418 = vld [vmem:[#allocation7 + $0x500] sm:$0xff]
    %v4419 = vld [vmem:[#allocation7 + $0x508] sm:$0xff]
    %v4420 = vld [vmem:[#allocation7 + $0x510] sm:$0xff]
    %v4421 = vld [vmem:[#allocation7 + $0x518] sm:$0xff]
    %v4422 = vld [vmem:[#allocation7 + $0x520] sm:$0xff]
    %v4423 = vld [vmem:[#allocation7 + $0x528] sm:$0xff]
    %v4424 = vld [vmem:[#allocation7 + $0x530] sm:$0xff]
    %v4425 = vld [vmem:[#allocation7 + $0x538] sm:$0xff]
    %v4426 = vld [vmem:[#allocation7 + $0x540] sm:$0xff]
    %v4427 = vld [vmem:[#allocation7 + $0x548] sm:$0xff]
    %v4428 = vld [vmem:[#allocation7 + $0x550] sm:$0xff]
    %v4429 = vld [vmem:[#allocation7 + $0x558] sm:$0xff]
    %v4430 = vld [vmem:[#allocation7 + $0x560] sm:$0xff]
    %v4431 = vld [vmem:[#allocation7 + $0x568] sm:$0xff]
    %v4432 = vld [vmem:[#allocation7 + $0x570] sm:$0xff]
    %v4433 = vld [vmem:[#allocation7 + $0x578] sm:$0xff]
    %v4434 = vld [vmem:[#allocation7 + $0x580] sm:$0xff]
    %v4435 = vld [vmem:[#allocation7 + $0x588] sm:$0xff]
    %v4436 = vld [vmem:[#allocation7 + $0x590] sm:$0xff]
    %v4437 = vld [vmem:[#allocation7 + $0x598] sm:$0xff]
    %v4438 = vld [vmem:[#allocation7 + $0x5a0] sm:$0xff]
    %v4439 = vld [vmem:[#allocation7 + $0x5a8] sm:$0xff]
    %v4440 = vld [vmem:[#allocation7 + $0x5b0] sm:$0xff]
    %v4441 = vld [vmem:[#allocation7 + $0x5b8] sm:$0xff]
    %v4442 = vld [vmem:[#allocation7 + $0x5c0] sm:$0xff]
    %v4443 = vld [vmem:[#allocation7 + $0x5c8] sm:$0xff]
    %v4444 = vld [vmem:[#allocation7 + $0x5d0] sm:$0xff]
    %v4445 = vld [vmem:[#allocation7 + $0x5d8] sm:$0xff]
    %v4446 = vld [vmem:[#allocation7 + $0x5e0] sm:$0xff]
    %v4447 = vld [vmem:[#allocation7 + $0x5e8] sm:$0xff]
    %v4448 = vld [vmem:[#allocation7 + $0x5f0] sm:$0xff]
    %v4449 = vld [vmem:[#allocation7 + $0x5f8] sm:$0xff]
    %v4450 = vld [vmem:[#allocation7 + $0x600] sm:$0xff]
    %v4451 = vld [vmem:[#allocation7 + $0x608] sm:$0xff]
    %v4452 = vld [vmem:[#allocation7 + $0x610] sm:$0xff]
    %v4453 = vld [vmem:[#allocation7 + $0x618] sm:$0xff]
    %v4454 = vld [vmem:[#allocation7 + $0x620] sm:$0xff]
    %v4455 = vld [vmem:[#allocation7 + $0x628] sm:$0xff]
    %v4456 = vld [vmem:[#allocation7 + $0x630] sm:$0xff]
    %v4457 = vld [vmem:[#allocation7 + $0x638] sm:$0xff]
    %v4458 = vld [vmem:[#allocation7 + $0x640] sm:$0xff]
    %v4459 = vld [vmem:[#allocation7 + $0x648] sm:$0xff]
    %v4460 = vld [vmem:[#allocation7 + $0x650] sm:$0xff]
    %v4461 = vld [vmem:[#allocation7 + $0x658] sm:$0xff]
    %v4462 = vld [vmem:[#allocation7 + $0x660] sm:$0xff]
    %v4463 = vld [vmem:[#allocation7 + $0x668] sm:$0xff]
    %v4464 = vld [vmem:[#allocation7 + $0x670] sm:$0xff]
    %v4465 = vld [vmem:[#allocation7 + $0x678] sm:$0xff]
    %v4466 = vld [vmem:[#allocation7 + $0x680] sm:$0xff]
    %v4467 = vld [vmem:[#allocation7 + $0x688] sm:$0xff]
    %v4468 = vld [vmem:[#allocation7 + $0x690] sm:$0xff]
    %v4469 = vld [vmem:[#allocation7 + $0x698] sm:$0xff]
    %v4470 = vld [vmem:[#allocation7 + $0x6a0] sm:$0xff]
    %v4471 = vld [vmem:[#allocation7 + $0x6a8] sm:$0xff]
    %v4472 = vld [vmem:[#allocation7 + $0x6b0] sm:$0xff]
    %v4473 = vld [vmem:[#allocation7 + $0x6b8] sm:$0xff]
    %v4474 = vld [vmem:[#allocation7 + $0x6c0] sm:$0xff]
    %v4475 = vld [vmem:[#allocation7 + $0x6c8] sm:$0xff]
    %v4476 = vld [vmem:[#allocation7 + $0x6d0] sm:$0xff]
    %v4477 = vld [vmem:[#allocation7 + $0x6d8] sm:$0xff]
    %v4478 = vld [vmem:[#allocation7 + $0x6e0] sm:$0xff]
    %v4479 = vld [vmem:[#allocation7 + $0x6e8] sm:$0xff]
    %v4480 = vld [vmem:[#allocation7 + $0x6f0] sm:$0xff]
    %v4481 = vld [vmem:[#allocation7 + $0x6f8] sm:$0xff]
    %v4482 = vld [vmem:[#allocation7 + $0x700] sm:$0xff]
    %v4483 = vld [vmem:[#allocation7 + $0x708] sm:$0xff]
    %v4484 = vld [vmem:[#allocation7 + $0x710] sm:$0xff]
    %v4485 = vld [vmem:[#allocation7 + $0x718] sm:$0xff]
    %v4486 = vld [vmem:[#allocation7 + $0x720] sm:$0xff]
    %v4487 = vld [vmem:[#allocation7 + $0x728] sm:$0xff]
    %v4488 = vld [vmem:[#allocation7 + $0x730] sm:$0xff]
    %v4489 = vld [vmem:[#allocation7 + $0x738] sm:$0xff]
    %v4490 = vld [vmem:[#allocation7 + $0x740] sm:$0xff]
    %v4491 = vld [vmem:[#allocation7 + $0x748] sm:$0xff]
    %v4492 = vld [vmem:[#allocation7 + $0x750] sm:$0xff]
    %v4493 = vld [vmem:[#allocation7 + $0x758] sm:$0xff]
    %v4494 = vld [vmem:[#allocation7 + $0x760] sm:$0xff]
    %v4495 = vld [vmem:[#allocation7 + $0x768] sm:$0xff]
    %v4496 = vld [vmem:[#allocation7 + $0x770] sm:$0xff]
    %v4497 = vld [vmem:[#allocation7 + $0x778] sm:$0xff]
    %v4498 = vld [vmem:[#allocation7 + $0x780] sm:$0xff]
    %v4499 = vld [vmem:[#allocation7 + $0x788] sm:$0xff]
    %v4500 = vld [vmem:[#allocation7 + $0x790] sm:$0xff]
    %v4501 = vld [vmem:[#allocation7 + $0x798] sm:$0xff]
    %v4502 = vld [vmem:[#allocation7 + $0x7a0] sm:$0xff]
    %v4503 = vld [vmem:[#allocation7 + $0x7a8] sm:$0xff]
    %v4504 = vld [vmem:[#allocation7 + $0x7b0] sm:$0xff]
    %v4505 = vld [vmem:[#allocation7 + $0x7b8] sm:$0xff]
    %v4506 = vld [vmem:[#allocation7 + $0x7c0] sm:$0xff]
    %v4507 = vld [vmem:[#allocation7 + $0x7c8] sm:$0xff]
    %v4508 = vld [vmem:[#allocation7 + $0x7d0] sm:$0xff]
    %v4509 = vld [vmem:[#allocation7 + $0x7d8] sm:$0xff]
    %v4510 = vld [vmem:[#allocation7 + $0x7e0] sm:$0xff]
    %v4511 = vld [vmem:[#allocation7 + $0x7e8] sm:$0xff]
    %v4512 = vld [vmem:[#allocation7 + $0x7f0] sm:$0xff]
    %v4513 = vld [vmem:[#allocation7 + $0x7f8] sm:$0xff]
    %v4770 = vunpack.c.l.b16 %v4258
    %v4771 = vunpack.c.h.b16 %v4258
    %v4772 = vunpack.c.l.b16 %v4259
    %v4773 = vunpack.c.h.b16 %v4259
    %v4774 = vunpack.c.l.b16 %v4260
    %v4775 = vunpack.c.h.b16 %v4260
    %v4776 = vunpack.c.l.b16 %v4261
    %v4777 = vunpack.c.h.b16 %v4261
    %v4778 = vunpack.c.l.b16 %v4262
    %v4779 = vunpack.c.h.b16 %v4262
    %v4780 = vunpack.c.l.b16 %v4263
    %v4781 = vunpack.c.h.b16 %v4263
    %v4782 = vunpack.c.l.b16 %v4264
    %v4783 = vunpack.c.h.b16 %v4264
    %v4784 = vunpack.c.l.b16 %v4265
    %v4785 = vunpack.c.h.b16 %v4265
    %v4786 = vunpack.c.l.b16 %v4266
    %v4787 = vunpack.c.h.b16 %v4266
    %v4788 = vunpack.c.l.b16 %v4267
    %v4789 = vunpack.c.h.b16 %v4267
    %v4790 = vunpack.c.l.b16 %v4268
    %v4791 = vunpack.c.h.b16 %v4268
    %v4792 = vunpack.c.l.b16 %v4269
    %v4793 = vunpack.c.h.b16 %v4269
    %v4794 = vunpack.c.l.b16 %v4270
    %v4795 = vunpack.c.h.b16 %v4270
    %v4796 = vunpack.c.l.b16 %v4271
    %v4797 = vunpack.c.h.b16 %v4271
    %v4798 = vunpack.c.l.b16 %v4272
    %v4799 = vunpack.c.h.b16 %v4272
    %v4800 = vunpack.c.l.b16 %v4273
    %v4801 = vunpack.c.h.b16 %v4273
    %v4802 = vunpack.c.l.b16 %v4274
    %v4803 = vunpack.c.h.b16 %v4274
    %v4804 = vunpack.c.l.b16 %v4275
    %v4805 = vunpack.c.h.b16 %v4275
    %v4806 = vunpack.c.l.b16 %v4276
    %v4807 = vunpack.c.h.b16 %v4276
    %v4808 = vunpack.c.l.b16 %v4277
    %v4809 = vunpack.c.h.b16 %v4277
    %v4810 = vunpack.c.l.b16 %v4278
    %v4811 = vunpack.c.h.b16 %v4278
    %v4812 = vunpack.c.l.b16 %v4279
    %v4813 = vunpack.c.h.b16 %v4279
    %v4814 = vunpack.c.l.b16 %v4280
    %v4815 = vunpack.c.h.b16 %v4280
    %v4816 = vunpack.c.l.b16 %v4281
    %v4817 = vunpack.c.h.b16 %v4281
    %v4818 = vunpack.c.l.b16 %v4282
    %v4819 = vunpack.c.h.b16 %v4282
    %v4820 = vunpack.c.l.b16 %v4283
    %v4821 = vunpack.c.h.b16 %v4283
    %v4822 = vunpack.c.l.b16 %v4284
    %v4823 = vunpack.c.h.b16 %v4284
    %v4824 = vunpack.c.l.b16 %v4285
    %v4825 = vunpack.c.h.b16 %v4285
    %v4826 = vunpack.c.l.b16 %v4286
    %v4827 = vunpack.c.h.b16 %v4286
    %v4828 = vunpack.c.l.b16 %v4287
    %v4829 = vunpack.c.h.b16 %v4287
    %v4830 = vunpack.c.l.b16 %v4288
    %v4831 = vunpack.c.h.b16 %v4288
    %v4832 = vunpack.c.l.b16 %v4289
    %v4833 = vunpack.c.h.b16 %v4289
    %v4834 = vunpack.c.l.b16 %v4290
    %v4835 = vunpack.c.h.b16 %v4290
    %v4836 = vunpack.c.l.b16 %v4291
    %v4837 = vunpack.c.h.b16 %v4291
    %v4838 = vunpack.c.l.b16 %v4292
    %v4839 = vunpack.c.h.b16 %v4292
    %v4840 = vunpack.c.l.b16 %v4293
    %v4841 = vunpack.c.h.b16 %v4293
    %v4842 = vunpack.c.l.b16 %v4294
    %v4843 = vunpack.c.h.b16 %v4294
    %v4844 = vunpack.c.l.b16 %v4295
    %v4845 = vunpack.c.h.b16 %v4295
    %v4846 = vunpack.c.l.b16 %v4296
    %v4847 = vunpack.c.h.b16 %v4296
    %v4848 = vunpack.c.l.b16 %v4297
    %v4849 = vunpack.c.h.b16 %v4297
    %v4850 = vunpack.c.l.b16 %v4298
    %v4851 = vunpack.c.h.b16 %v4298
    %v4852 = vunpack.c.l.b16 %v4299
    %v4853 = vunpack.c.h.b16 %v4299
    %v4854 = vunpack.c.l.b16 %v4300
    %v4855 = vunpack.c.h.b16 %v4300
    %v4856 = vunpack.c.l.b16 %v4301
    %v4857 = vunpack.c.h.b16 %v4301
    %v4858 = vunpack.c.l.b16 %v4302
    %v4859 = vunpack.c.h.b16 %v4302
    %v4860 = vunpack.c.l.b16 %v4303
    %v4861 = vunpack.c.h.b16 %v4303
    %v4862 = vunpack.c.l.b16 %v4304
    %v4863 = vunpack.c.h.b16 %v4304
    %v4864 = vunpack.c.l.b16 %v4305
    %v4865 = vunpack.c.h.b16 %v4305
    %v4866 = vunpack.c.l.b16 %v4306
    %v4867 = vunpack.c.h.b16 %v4306
    %v4868 = vunpack.c.l.b16 %v4307
    %v4869 = vunpack.c.h.b16 %v4307
    %v4870 = vunpack.c.l.b16 %v4308
    %v4871 = vunpack.c.h.b16 %v4308
    %v4872 = vunpack.c.l.b16 %v4309
    %v4873 = vunpack.c.h.b16 %v4309
    %v4874 = vunpack.c.l.b16 %v4310
    %v4875 = vunpack.c.h.b16 %v4310
    %v4876 = vunpack.c.l.b16 %v4311
    %v4877 = vunpack.c.h.b16 %v4311
    %v4878 = vunpack.c.l.b16 %v4312
    %v4879 = vunpack.c.h.b16 %v4312
    %v4880 = vunpack.c.l.b16 %v4313
    %v4881 = vunpack.c.h.b16 %v4313
    %v4882 = vunpack.c.l.b16 %v4314
    %v4883 = vunpack.c.h.b16 %v4314
    %v4884 = vunpack.c.l.b16 %v4315
    %v4885 = vunpack.c.h.b16 %v4315
    %v4886 = vunpack.c.l.b16 %v4316
    %v4887 = vunpack.c.h.b16 %v4316
    %v4888 = vunpack.c.l.b16 %v4317
    %v4889 = vunpack.c.h.b16 %v4317
    %v4890 = vunpack.c.l.b16 %v4318
    %v4891 = vunpack.c.h.b16 %v4318
    %v4892 = vunpack.c.l.b16 %v4319
    %v4893 = vunpack.c.h.b16 %v4319
    %v4894 = vunpack.c.l.b16 %v4320
    %v4895 = vunpack.c.h.b16 %v4320
    %v4896 = vunpack.c.l.b16 %v4321
    %v4897 = vunpack.c.h.b16 %v4321
    %v4898 = vunpack.c.l.b16 %v4322
    %v4899 = vunpack.c.h.b16 %v4322
    %v4900 = vunpack.c.l.b16 %v4323
    %v4901 = vunpack.c.h.b16 %v4323
    %v4902 = vunpack.c.l.b16 %v4324
    %v4903 = vunpack.c.h.b16 %v4324
    %v4904 = vunpack.c.l.b16 %v4325
    %v4905 = vunpack.c.h.b16 %v4325
    %v4906 = vunpack.c.l.b16 %v4326
    %v4907 = vunpack.c.h.b16 %v4326
    %v4908 = vunpack.c.l.b16 %v4327
    %v4909 = vunpack.c.h.b16 %v4327
    %v4910 = vunpack.c.l.b16 %v4328
    %v4911 = vunpack.c.h.b16 %v4328
    %v4912 = vunpack.c.l.b16 %v4329
    %v4913 = vunpack.c.h.b16 %v4329
    %v4914 = vunpack.c.l.b16 %v4330
    %v4915 = vunpack.c.h.b16 %v4330
    %v4916 = vunpack.c.l.b16 %v4331
    %v4917 = vunpack.c.h.b16 %v4331
    %v4918 = vunpack.c.l.b16 %v4332
    %v4919 = vunpack.c.h.b16 %v4332
    %v4920 = vunpack.c.l.b16 %v4333
    %v4921 = vunpack.c.h.b16 %v4333
    %v4922 = vunpack.c.l.b16 %v4334
    %v4923 = vunpack.c.h.b16 %v4334
    %v4924 = vunpack.c.l.b16 %v4335
    %v4925 = vunpack.c.h.b16 %v4335
    %v4926 = vunpack.c.l.b16 %v4336
    %v4927 = vunpack.c.h.b16 %v4336
    %v4928 = vunpack.c.l.b16 %v4337
    %v4929 = vunpack.c.h.b16 %v4337
    %v4930 = vunpack.c.l.b16 %v4338
    %v4931 = vunpack.c.h.b16 %v4338
    %v4932 = vunpack.c.l.b16 %v4339
    %v4933 = vunpack.c.h.b16 %v4339
    %v4934 = vunpack.c.l.b16 %v4340
    %v4935 = vunpack.c.h.b16 %v4340
    %v4936 = vunpack.c.l.b16 %v4341
    %v4937 = vunpack.c.h.b16 %v4341
    %v4938 = vunpack.c.l.b16 %v4342
    %v4939 = vunpack.c.h.b16 %v4342
    %v4940 = vunpack.c.l.b16 %v4343
    %v4941 = vunpack.c.h.b16 %v4343
    %v4942 = vunpack.c.l.b16 %v4344
    %v4943 = vunpack.c.h.b16 %v4344
    %v4944 = vunpack.c.l.b16 %v4345
    %v4945 = vunpack.c.h.b16 %v4345
    %v4946 = vunpack.c.l.b16 %v4346
    %v4947 = vunpack.c.h.b16 %v4346
    %v4948 = vunpack.c.l.b16 %v4347
    %v4949 = vunpack.c.h.b16 %v4347
    %v4950 = vunpack.c.l.b16 %v4348
    %v4951 = vunpack.c.h.b16 %v4348
    %v4952 = vunpack.c.l.b16 %v4349
    %v4953 = vunpack.c.h.b16 %v4349
    %v4954 = vunpack.c.l.b16 %v4350
    %v4955 = vunpack.c.h.b16 %v4350
    %v4956 = vunpack.c.l.b16 %v4351
    %v4957 = vunpack.c.h.b16 %v4351
    %v4958 = vunpack.c.l.b16 %v4352
    %v4959 = vunpack.c.h.b16 %v4352
    %v4960 = vunpack.c.l.b16 %v4353
    %v4961 = vunpack.c.h.b16 %v4353
    %v4962 = vunpack.c.l.b16 %v4354
    %v4963 = vunpack.c.h.b16 %v4354
    %v4964 = vunpack.c.l.b16 %v4355
    %v4965 = vunpack.c.h.b16 %v4355
    %v4966 = vunpack.c.l.b16 %v4356
    %v4967 = vunpack.c.h.b16 %v4356
    %v4968 = vunpack.c.l.b16 %v4357
    %v4969 = vunpack.c.h.b16 %v4357
    %v4970 = vunpack.c.l.b16 %v4358
    %v4971 = vunpack.c.h.b16 %v4358
    %v4972 = vunpack.c.l.b16 %v4359
    %v4973 = vunpack.c.h.b16 %v4359
    %v4974 = vunpack.c.l.b16 %v4360
    %v4975 = vunpack.c.h.b16 %v4360
    %v4976 = vunpack.c.l.b16 %v4361
    %v4977 = vunpack.c.h.b16 %v4361
    %v4978 = vunpack.c.l.b16 %v4362
    %v4979 = vunpack.c.h.b16 %v4362
    %v4980 = vunpack.c.l.b16 %v4363
    %v4981 = vunpack.c.h.b16 %v4363
    %v4982 = vunpack.c.l.b16 %v4364
    %v4983 = vunpack.c.h.b16 %v4364
    %v4984 = vunpack.c.l.b16 %v4365
    %v4985 = vunpack.c.h.b16 %v4365
    %v4986 = vunpack.c.l.b16 %v4366
    %v4987 = vunpack.c.h.b16 %v4366
    %v4988 = vunpack.c.l.b16 %v4367
    %v4989 = vunpack.c.h.b16 %v4367
    %v4990 = vunpack.c.l.b16 %v4368
    %v4991 = vunpack.c.h.b16 %v4368
    %v4992 = vunpack.c.l.b16 %v4369
    %v4993 = vunpack.c.h.b16 %v4369
    %v4994 = vunpack.c.l.b16 %v4370
    %v4995 = vunpack.c.h.b16 %v4370
    %v4996 = vunpack.c.l.b16 %v4371
    %v4997 = vunpack.c.h.b16 %v4371
    %v4998 = vunpack.c.l.b16 %v4372
    %v4999 = vunpack.c.h.b16 %v4372
    %v5000 = vunpack.c.l.b16 %v4373
    %v5001 = vunpack.c.h.b16 %v4373
    %v5002 = vunpack.c.l.b16 %v4374
    %v5003 = vunpack.c.h.b16 %v4374
    %v5004 = vunpack.c.l.b16 %v4375
    %v5005 = vunpack.c.h.b16 %v4375
    %v5006 = vunpack.c.l.b16 %v4376
    %v5007 = vunpack.c.h.b16 %v4376
    %v5008 = vunpack.c.l.b16 %v4377
    %v5009 = vunpack.c.h.b16 %v4377
    %v5010 = vunpack.c.l.b16 %v4378
    %v5011 = vunpack.c.h.b16 %v4378
    %v5012 = vunpack.c.l.b16 %v4379
    %v5013 = vunpack.c.h.b16 %v4379
    %v5014 = vunpack.c.l.b16 %v4380
    %v5015 = vunpack.c.h.b16 %v4380
    %v5016 = vunpack.c.l.b16 %v4381
    %v5017 = vunpack.c.h.b16 %v4381
    %v5018 = vunpack.c.l.b16 %v4382
    %v5019 = vunpack.c.h.b16 %v4382
    %v5020 = vunpack.c.l.b16 %v4383
    %v5021 = vunpack.c.h.b16 %v4383
    %v5022 = vunpack.c.l.b16 %v4384
    %v5023 = vunpack.c.h.b16 %v4384
    %v5024 = vunpack.c.l.b16 %v4385
    %v5025 = vunpack.c.h.b16 %v4385
    %v5026 = vunpack.c.l.b16 %v4386
    %v5027 = vunpack.c.h.b16 %v4386
    %v5028 = vunpack.c.l.b16 %v4387
    %v5029 = vunpack.c.h.b16 %v4387
    %v5030 = vunpack.c.l.b16 %v4388
    %v5031 = vunpack.c.h.b16 %v4388
    %v5032 = vunpack.c.l.b16 %v4389
    %v5033 = vunpack.c.h.b16 %v4389
    %v5034 = vunpack.c.l.b16 %v4390
    %v5035 = vunpack.c.h.b16 %v4390
    %v5036 = vunpack.c.l.b16 %v4391
    %v5037 = vunpack.c.h.b16 %v4391
    %v5038 = vunpack.c.l.b16 %v4392
    %v5039 = vunpack.c.h.b16 %v4392
    %v5040 = vunpack.c.l.b16 %v4393
    %v5041 = vunpack.c.h.b16 %v4393
    %v5042 = vunpack.c.l.b16 %v4394
    %v5043 = vunpack.c.h.b16 %v4394
    %v5044 = vunpack.c.l.b16 %v4395
    %v5045 = vunpack.c.h.b16 %v4395
    %v5046 = vunpack.c.l.b16 %v4396
    %v5047 = vunpack.c.h.b16 %v4396
    %v5048 = vunpack.c.l.b16 %v4397
    %v5049 = vunpack.c.h.b16 %v4397
    %v5050 = vunpack.c.l.b16 %v4398
    %v5051 = vunpack.c.h.b16 %v4398
    %v5052 = vunpack.c.l.b16 %v4399
    %v5053 = vunpack.c.h.b16 %v4399
    %v5054 = vunpack.c.l.b16 %v4400
    %v5055 = vunpack.c.h.b16 %v4400
    %v5056 = vunpack.c.l.b16 %v4401
    %v5057 = vunpack.c.h.b16 %v4401
    %v5058 = vunpack.c.l.b16 %v4402
    %v5059 = vunpack.c.h.b16 %v4402
    %v5060 = vunpack.c.l.b16 %v4403
    %v5061 = vunpack.c.h.b16 %v4403
    %v5062 = vunpack.c.l.b16 %v4404
    %v5063 = vunpack.c.h.b16 %v4404
    %v5064 = vunpack.c.l.b16 %v4405
    %v5065 = vunpack.c.h.b16 %v4405
    %v5066 = vunpack.c.l.b16 %v4406
    %v5067 = vunpack.c.h.b16 %v4406
    %v5068 = vunpack.c.l.b16 %v4407
    %v5069 = vunpack.c.h.b16 %v4407
    %v5070 = vunpack.c.l.b16 %v4408
    %v5071 = vunpack.c.h.b16 %v4408
    %v5072 = vunpack.c.l.b16 %v4409
    %v5073 = vunpack.c.h.b16 %v4409
    %v5074 = vunpack.c.l.b16 %v4410
    %v5075 = vunpack.c.h.b16 %v4410
    %v5076 = vunpack.c.l.b16 %v4411
    %v5077 = vunpack.c.h.b16 %v4411
    %v5078 = vunpack.c.l.b16 %v4412
    %v5079 = vunpack.c.h.b16 %v4412
    %v5080 = vunpack.c.l.b16 %v4413
    %v5081 = vunpack.c.h.b16 %v4413
    %v5082 = vunpack.c.l.b16 %v4414
    %v5083 = vunpack.c.h.b16 %v4414
    %v5084 = vunpack.c.l.b16 %v4415
    %v5085 = vunpack.c.h.b16 %v4415
    %v5086 = vunpack.c.l.b16 %v4416
    %v5087 = vunpack.c.h.b16 %v4416
    %v5088 = vunpack.c.l.b16 %v4417
    %v5089 = vunpack.c.h.b16 %v4417
    %v5090 = vunpack.c.l.b16 %v4418
    %v5091 = vunpack.c.h.b16 %v4418
    %v5092 = vunpack.c.l.b16 %v4419
    %v5093 = vunpack.c.h.b16 %v4419
    %v5094 = vunpack.c.l.b16 %v4420
    %v5095 = vunpack.c.h.b16 %v4420
    %v5096 = vunpack.c.l.b16 %v4421
    %v5097 = vunpack.c.h.b16 %v4421
    %v5098 = vunpack.c.l.b16 %v4422
    %v5099 = vunpack.c.h.b16 %v4422
    %v5100 = vunpack.c.l.b16 %v4423
    %v5101 = vunpack.c.h.b16 %v4423
    %v5102 = vunpack.c.l.b16 %v4424
    %v5103 = vunpack.c.h.b16 %v4424
    %v5104 = vunpack.c.l.b16 %v4425
    %v5105 = vunpack.c.h.b16 %v4425
    %v5106 = vunpack.c.l.b16 %v4426
    %v5107 = vunpack.c.h.b16 %v4426
    %v5108 = vunpack.c.l.b16 %v4427
    %v5109 = vunpack.c.h.b16 %v4427
    %v5110 = vunpack.c.l.b16 %v4428
    %v5111 = vunpack.c.h.b16 %v4428
    %v5112 = vunpack.c.l.b16 %v4429
    %v5113 = vunpack.c.h.b16 %v4429
    %v5114 = vunpack.c.l.b16 %v4430
    %v5115 = vunpack.c.h.b16 %v4430
    %v5116 = vunpack.c.l.b16 %v4431
    %v5117 = vunpack.c.h.b16 %v4431
    %v5118 = vunpack.c.l.b16 %v4432
    %v5119 = vunpack.c.h.b16 %v4432
    %v5120 = vunpack.c.l.b16 %v4433
    %v5121 = vunpack.c.h.b16 %v4433
    %v5122 = vunpack.c.l.b16 %v4434
    %v5123 = vunpack.c.h.b16 %v4434
    %v5124 = vunpack.c.l.b16 %v4435
    %v5125 = vunpack.c.h.b16 %v4435
    %v5126 = vunpack.c.l.b16 %v4436
    %v5127 = vunpack.c.h.b16 %v4436
    %v5128 = vunpack.c.l.b16 %v4437
    %v5129 = vunpack.c.h.b16 %v4437
    %v5130 = vunpack.c.l.b16 %v4438
    %v5131 = vunpack.c.h.b16 %v4438
    %v5132 = vunpack.c.l.b16 %v4439
    %v5133 = vunpack.c.h.b16 %v4439
    %v5134 = vunpack.c.l.b16 %v4440
    %v5135 = vunpack.c.h.b16 %v4440
    %v5136 = vunpack.c.l.b16 %v4441
    %v5137 = vunpack.c.h.b16 %v4441
    %v5138 = vunpack.c.l.b16 %v4442
    %v5139 = vunpack.c.h.b16 %v4442
    %v5140 = vunpack.c.l.b16 %v4443
    %v5141 = vunpack.c.h.b16 %v4443
    %v5142 = vunpack.c.l.b16 %v4444
    %v5143 = vunpack.c.h.b16 %v4444
    %v5144 = vunpack.c.l.b16 %v4445
    %v5145 = vunpack.c.h.b16 %v4445
    %v5146 = vunpack.c.l.b16 %v4446
    %v5147 = vunpack.c.h.b16 %v4446
    %v5148 = vunpack.c.l.b16 %v4447
    %v5149 = vunpack.c.h.b16 %v4447
    %v5150 = vunpack.c.l.b16 %v4448
    %v5151 = vunpack.c.h.b16 %v4448
    %v5152 = vunpack.c.l.b16 %v4449
    %v5153 = vunpack.c.h.b16 %v4449
    %v5154 = vunpack.c.l.b16 %v4450
    %v5155 = vunpack.c.h.b16 %v4450
    %v5156 = vunpack.c.l.b16 %v4451
    %v5157 = vunpack.c.h.b16 %v4451
    %v5158 = vunpack.c.l.b16 %v4452
    %v5159 = vunpack.c.h.b16 %v4452
    %v5160 = vunpack.c.l.b16 %v4453
    %v5161 = vunpack.c.h.b16 %v4453
    %v5162 = vunpack.c.l.b16 %v4454
    %v5163 = vunpack.c.h.b16 %v4454
    %v5164 = vunpack.c.l.b16 %v4455
    %v5165 = vunpack.c.h.b16 %v4455
    %v5166 = vunpack.c.l.b16 %v4456
    %v5167 = vunpack.c.h.b16 %v4456
    %v5168 = vunpack.c.l.b16 %v4457
    %v5169 = vunpack.c.h.b16 %v4457
    %v5170 = vunpack.c.l.b16 %v4458
    %v5171 = vunpack.c.h.b16 %v4458
    %v5172 = vunpack.c.l.b16 %v4459
    %v5173 = vunpack.c.h.b16 %v4459
    %v5174 = vunpack.c.l.b16 %v4460
    %v5175 = vunpack.c.h.b16 %v4460
    %v5176 = vunpack.c.l.b16 %v4461
    %v5177 = vunpack.c.h.b16 %v4461
    %v5178 = vunpack.c.l.b16 %v4462
    %v5179 = vunpack.c.h.b16 %v4462
    %v5180 = vunpack.c.l.b16 %v4463
    %v5181 = vunpack.c.h.b16 %v4463
    %v5182 = vunpack.c.l.b16 %v4464
    %v5183 = vunpack.c.h.b16 %v4464
    %v5184 = vunpack.c.l.b16 %v4465
    %v5185 = vunpack.c.h.b16 %v4465
    %v5186 = vunpack.c.l.b16 %v4466
    %v5187 = vunpack.c.h.b16 %v4466
    %v5188 = vunpack.c.l.b16 %v4467
    %v5189 = vunpack.c.h.b16 %v4467
    %v5190 = vunpack.c.l.b16 %v4468
    %v5191 = vunpack.c.h.b16 %v4468
    %v5192 = vunpack.c.l.b16 %v4469
    %v5193 = vunpack.c.h.b16 %v4469
    %v5194 = vunpack.c.l.b16 %v4470
    %v5195 = vunpack.c.h.b16 %v4470
    %v5196 = vunpack.c.l.b16 %v4471
    %v5197 = vunpack.c.h.b16 %v4471
    %v5198 = vunpack.c.l.b16 %v4472
    %v5199 = vunpack.c.h.b16 %v4472
    %v5200 = vunpack.c.l.b16 %v4473
    %v5201 = vunpack.c.h.b16 %v4473
    %v5202 = vunpack.c.l.b16 %v4474
    %v5203 = vunpack.c.h.b16 %v4474
    %v5204 = vunpack.c.l.b16 %v4475
    %v5205 = vunpack.c.h.b16 %v4475
    %v5206 = vunpack.c.l.b16 %v4476
    %v5207 = vunpack.c.h.b16 %v4476
    %v5208 = vunpack.c.l.b16 %v4477
    %v5209 = vunpack.c.h.b16 %v4477
    %v5210 = vunpack.c.l.b16 %v4478
    %v5211 = vunpack.c.h.b16 %v4478
    %v5212 = vunpack.c.l.b16 %v4479
    %v5213 = vunpack.c.h.b16 %v4479
    %v5214 = vunpack.c.l.b16 %v4480
    %v5215 = vunpack.c.h.b16 %v4480
    %v5216 = vunpack.c.l.b16 %v4481
    %v5217 = vunpack.c.h.b16 %v4481
    %v5218 = vunpack.c.l.b16 %v4482
    %v5219 = vunpack.c.h.b16 %v4482
    %v5220 = vunpack.c.l.b16 %v4483
    %v5221 = vunpack.c.h.b16 %v4483
    %v5222 = vunpack.c.l.b16 %v4484
    %v5223 = vunpack.c.h.b16 %v4484
    %v5224 = vunpack.c.l.b16 %v4485
    %v5225 = vunpack.c.h.b16 %v4485
    %v5226 = vunpack.c.l.b16 %v4486
    %v5227 = vunpack.c.h.b16 %v4486
    %v5228 = vunpack.c.l.b16 %v4487
    %v5229 = vunpack.c.h.b16 %v4487
    %v5230 = vunpack.c.l.b16 %v4488
    %v5231 = vunpack.c.h.b16 %v4488
    %v5232 = vunpack.c.l.b16 %v4489
    %v5233 = vunpack.c.h.b16 %v4489
    %v5234 = vunpack.c.l.b16 %v4490
    %v5235 = vunpack.c.h.b16 %v4490
    %v5236 = vunpack.c.l.b16 %v4491
    %v5237 = vunpack.c.h.b16 %v4491
    %v5238 = vunpack.c.l.b16 %v4492
    %v5239 = vunpack.c.h.b16 %v4492
    %v5240 = vunpack.c.l.b16 %v4493
    %v5241 = vunpack.c.h.b16 %v4493
    %v5242 = vunpack.c.l.b16 %v4494
    %v5243 = vunpack.c.h.b16 %v4494
    %v5244 = vunpack.c.l.b16 %v4495
    %v5245 = vunpack.c.h.b16 %v4495
    %v5246 = vunpack.c.l.b16 %v4496
    %v5247 = vunpack.c.h.b16 %v4496
    %v5248 = vunpack.c.l.b16 %v4497
    %v5249 = vunpack.c.h.b16 %v4497
    %v5250 = vunpack.c.l.b16 %v4498
    %v5251 = vunpack.c.h.b16 %v4498
    %v5252 = vunpack.c.l.b16 %v4499
    %v5253 = vunpack.c.h.b16 %v4499
    %v5254 = vunpack.c.l.b16 %v4500
    %v5255 = vunpack.c.h.b16 %v4500
    %v5256 = vunpack.c.l.b16 %v4501
    %v5257 = vunpack.c.h.b16 %v4501
    %v5258 = vunpack.c.l.b16 %v4502
    %v5259 = vunpack.c.h.b16 %v4502
    %v5260 = vunpack.c.l.b16 %v4503
    %v5261 = vunpack.c.h.b16 %v4503
    %v5262 = vunpack.c.l.b16 %v4504
    %v5263 = vunpack.c.h.b16 %v4504
    %v5264 = vunpack.c.l.b16 %v4505
    %v5265 = vunpack.c.h.b16 %v4505
    %v5266 = vunpack.c.l.b16 %v4506
    %v5267 = vunpack.c.h.b16 %v4506
    %v5268 = vunpack.c.l.b16 %v4507
    %v5269 = vunpack.c.h.b16 %v4507
    %v5270 = vunpack.c.l.b16 %v4508
    %v5271 = vunpack.c.h.b16 %v4508
    %v5272 = vunpack.c.l.b16 %v4509
    %v5273 = vunpack.c.h.b16 %v4509
    %v5274 = vunpack.c.l.b16 %v4510
    %v5275 = vunpack.c.h.b16 %v4510
    %v5276 = vunpack.c.l.b16 %v4511
    %v5277 = vunpack.c.h.b16 %v4511
    %v5278 = vunpack.c.l.b16 %v4512
    %v5279 = vunpack.c.h.b16 %v4512
    %v5280 = vunpack.c.l.b16 %v4513
    %v5281 = vunpack.c.h.b16 %v4513
    %v5282 = vpack.c.b16 %v4774, %v4770
    %v5283 = vpack.c.b16 %v4775, %v4771
    %v5284 = vpack.c.b16 %v4776, %v4772
    %v5285 = vpack.c.b16 %v4777, %v4773
    %v5286 = vpack.c.b16 %v4782, %v4778
    %v5287 = vpack.c.b16 %v4783, %v4779
    %v5288 = vpack.c.b16 %v4784, %v4780
    %v5289 = vpack.c.b16 %v4785, %v4781
    %v5290 = vpack.c.b16 %v4790, %v4786
    %v5291 = vpack.c.b16 %v4791, %v4787
    %v5292 = vpack.c.b16 %v4792, %v4788
    %v5293 = vpack.c.b16 %v4793, %v4789
    %v5294 = vpack.c.b16 %v4798, %v4794
    %v5295 = vpack.c.b16 %v4799, %v4795
    %v5296 = vpack.c.b16 %v4800, %v4796
    %v5297 = vpack.c.b16 %v4801, %v4797
    %v5298 = vpack.c.b16 %v4806, %v4802
    %v5299 = vpack.c.b16 %v4807, %v4803
    %v5300 = vpack.c.b16 %v4808, %v4804
    %v5301 = vpack.c.b16 %v4809, %v4805
    %v5302 = vpack.c.b16 %v4814, %v4810
    %v5303 = vpack.c.b16 %v4815, %v4811
    %v5304 = vpack.c.b16 %v4816, %v4812
    %v5305 = vpack.c.b16 %v4817, %v4813
    %v5306 = vpack.c.b16 %v4822, %v4818
    %v5307 = vpack.c.b16 %v4823, %v4819
    %v5308 = vpack.c.b16 %v4824, %v4820
    %v5309 = vpack.c.b16 %v4825, %v4821
    %v5310 = vpack.c.b16 %v4830, %v4826
    %v5311 = vpack.c.b16 %v4831, %v4827
    %v5312 = vpack.c.b16 %v4832, %v4828
    %v5313 = vpack.c.b16 %v4833, %v4829
    %v5314 = vpack.c.b16 %v4838, %v4834
    %v5315 = vpack.c.b16 %v4839, %v4835
    %v5316 = vpack.c.b16 %v4840, %v4836
    %v5317 = vpack.c.b16 %v4841, %v4837
    %v5318 = vpack.c.b16 %v4846, %v4842
    %v5319 = vpack.c.b16 %v4847, %v4843
    %v5320 = vpack.c.b16 %v4848, %v4844
    %v5321 = vpack.c.b16 %v4849, %v4845
    %v5322 = vpack.c.b16 %v4854, %v4850
    %v5323 = vpack.c.b16 %v4855, %v4851
    %v5324 = vpack.c.b16 %v4856, %v4852
    %v5325 = vpack.c.b16 %v4857, %v4853
    %v5326 = vpack.c.b16 %v4862, %v4858
    %v5327 = vpack.c.b16 %v4863, %v4859
    %v5328 = vpack.c.b16 %v4864, %v4860
    %v5329 = vpack.c.b16 %v4865, %v4861
    %v5330 = vpack.c.b16 %v4870, %v4866
    %v5331 = vpack.c.b16 %v4871, %v4867
    %v5332 = vpack.c.b16 %v4872, %v4868
    %v5333 = vpack.c.b16 %v4873, %v4869
    %v5334 = vpack.c.b16 %v4878, %v4874
    %v5335 = vpack.c.b16 %v4879, %v4875
    %v5336 = vpack.c.b16 %v4880, %v4876
    %v5337 = vpack.c.b16 %v4881, %v4877
    %v5338 = vpack.c.b16 %v4886, %v4882
    %v5339 = vpack.c.b16 %v4887, %v4883
    %v5340 = vpack.c.b16 %v4888, %v4884
    %v5341 = vpack.c.b16 %v4889, %v4885
    %v5342 = vpack.c.b16 %v4894, %v4890
    %v5343 = vpack.c.b16 %v4895, %v4891
    %v5344 = vpack.c.b16 %v4896, %v4892
    %v5345 = vpack.c.b16 %v4897, %v4893
    %v5346 = vpack.c.b16 %v4902, %v4898
    %v5347 = vpack.c.b16 %v4903, %v4899
    %v5348 = vpack.c.b16 %v4904, %v4900
    %v5349 = vpack.c.b16 %v4905, %v4901
    %v5350 = vpack.c.b16 %v4910, %v4906
    %v5351 = vpack.c.b16 %v4911, %v4907
    %v5352 = vpack.c.b16 %v4912, %v4908
    %v5353 = vpack.c.b16 %v4913, %v4909
    %v5354 = vpack.c.b16 %v4918, %v4914
    %v5355 = vpack.c.b16 %v4919, %v4915
    %v5356 = vpack.c.b16 %v4920, %v4916
    %v5357 = vpack.c.b16 %v4921, %v4917
    %v5358 = vpack.c.b16 %v4926, %v4922
    %v5359 = vpack.c.b16 %v4927, %v4923
    %v5360 = vpack.c.b16 %v4928, %v4924
    %v5361 = vpack.c.b16 %v4929, %v4925
    %v5362 = vpack.c.b16 %v4934, %v4930
    %v5363 = vpack.c.b16 %v4935, %v4931
    %v5364 = vpack.c.b16 %v4936, %v4932
    %v5365 = vpack.c.b16 %v4937, %v4933
    %v5366 = vpack.c.b16 %v4942, %v4938
    %v5367 = vpack.c.b16 %v4943, %v4939
    %v5368 = vpack.c.b16 %v4944, %v4940
    %v5369 = vpack.c.b16 %v4945, %v4941
    %v5370 = vpack.c.b16 %v4950, %v4946
    %v5371 = vpack.c.b16 %v4951, %v4947
    %v5372 = vpack.c.b16 %v4952, %v4948
    %v5373 = vpack.c.b16 %v4953, %v4949
    %v5374 = vpack.c.b16 %v4958, %v4954
    %v5375 = vpack.c.b16 %v4959, %v4955
    %v5376 = vpack.c.b16 %v4960, %v4956
    %v5377 = vpack.c.b16 %v4961, %v4957
    %v5378 = vpack.c.b16 %v4966, %v4962
    %v5379 = vpack.c.b16 %v4967, %v4963
    %v5380 = vpack.c.b16 %v4968, %v4964
    %v5381 = vpack.c.b16 %v4969, %v4965
    %v5382 = vpack.c.b16 %v4974, %v4970
    %v5383 = vpack.c.b16 %v4975, %v4971
    %v5384 = vpack.c.b16 %v4976, %v4972
    %v5385 = vpack.c.b16 %v4977, %v4973
    %v5386 = vpack.c.b16 %v4982, %v4978
    %v5387 = vpack.c.b16 %v4983, %v4979
    %v5388 = vpack.c.b16 %v4984, %v4980
    %v5389 = vpack.c.b16 %v4985, %v4981
    %v5390 = vpack.c.b16 %v4990, %v4986
    %v5391 = vpack.c.b16 %v4991, %v4987
    %v5392 = vpack.c.b16 %v4992, %v4988
    %v5393 = vpack.c.b16 %v4993, %v4989
    %v5394 = vpack.c.b16 %v4998, %v4994
    %v5395 = vpack.c.b16 %v4999, %v4995
    %v5396 = vpack.c.b16 %v5000, %v4996
    %v5397 = vpack.c.b16 %v5001, %v4997
    %v5398 = vpack.c.b16 %v5006, %v5002
    %v5399 = vpack.c.b16 %v5007, %v5003
    %v5400 = vpack.c.b16 %v5008, %v5004
    %v5401 = vpack.c.b16 %v5009, %v5005
    %v5402 = vpack.c.b16 %v5014, %v5010
    %v5403 = vpack.c.b16 %v5015, %v5011
    %v5404 = vpack.c.b16 %v5016, %v5012
    %v5405 = vpack.c.b16 %v5017, %v5013
    %v5406 = vpack.c.b16 %v5022, %v5018
    %v5407 = vpack.c.b16 %v5023, %v5019
    %v5408 = vpack.c.b16 %v5024, %v5020
    %v5409 = vpack.c.b16 %v5025, %v5021
    %v5410 = vpack.c.b16 %v5030, %v5026
    %v5411 = vpack.c.b16 %v5031, %v5027
    %v5412 = vpack.c.b16 %v5032, %v5028
    %v5413 = vpack.c.b16 %v5033, %v5029
    %v5414 = vpack.c.b16 %v5038, %v5034
    %v5415 = vpack.c.b16 %v5039, %v5035
    %v5416 = vpack.c.b16 %v5040, %v5036
    %v5417 = vpack.c.b16 %v5041, %v5037
    %v5418 = vpack.c.b16 %v5046, %v5042
    %v5419 = vpack.c.b16 %v5047, %v5043
    %v5420 = vpack.c.b16 %v5048, %v5044
    %v5421 = vpack.c.b16 %v5049, %v5045
    %v5422 = vpack.c.b16 %v5054, %v5050
    %v5423 = vpack.c.b16 %v5055, %v5051
    %v5424 = vpack.c.b16 %v5056, %v5052
    %v5425 = vpack.c.b16 %v5057, %v5053
    %v5426 = vpack.c.b16 %v5062, %v5058
    %v5427 = vpack.c.b16 %v5063, %v5059
    %v5428 = vpack.c.b16 %v5064, %v5060
    %v5429 = vpack.c.b16 %v5065, %v5061
    %v5430 = vpack.c.b16 %v5070, %v5066
    %v5431 = vpack.c.b16 %v5071, %v5067
    %v5432 = vpack.c.b16 %v5072, %v5068
    %v5433 = vpack.c.b16 %v5073, %v5069
    %v5434 = vpack.c.b16 %v5078, %v5074
    %v5435 = vpack.c.b16 %v5079, %v5075
    %v5436 = vpack.c.b16 %v5080, %v5076
    %v5437 = vpack.c.b16 %v5081, %v5077
    %v5438 = vpack.c.b16 %v5086, %v5082
    %v5439 = vpack.c.b16 %v5087, %v5083
    %v5440 = vpack.c.b16 %v5088, %v5084
    %v5441 = vpack.c.b16 %v5089, %v5085
    %v5442 = vpack.c.b16 %v5094, %v5090
    %v5443 = vpack.c.b16 %v5095, %v5091
    %v5444 = vpack.c.b16 %v5096, %v5092
    %v5445 = vpack.c.b16 %v5097, %v5093
    %v5446 = vpack.c.b16 %v5102, %v5098
    %v5447 = vpack.c.b16 %v5103, %v5099
    %v5448 = vpack.c.b16 %v5104, %v5100
    %v5449 = vpack.c.b16 %v5105, %v5101
    %v5450 = vpack.c.b16 %v5110, %v5106
    %v5451 = vpack.c.b16 %v5111, %v5107
    %v5452 = vpack.c.b16 %v5112, %v5108
    %v5453 = vpack.c.b16 %v5113, %v5109
    %v5454 = vpack.c.b16 %v5118, %v5114
    %v5455 = vpack.c.b16 %v5119, %v5115
    %v5456 = vpack.c.b16 %v5120, %v5116
    %v5457 = vpack.c.b16 %v5121, %v5117
    %v5458 = vpack.c.b16 %v5126, %v5122
    %v5459 = vpack.c.b16 %v5127, %v5123
    %v5460 = vpack.c.b16 %v5128, %v5124
    %v5461 = vpack.c.b16 %v5129, %v5125
    %v5462 = vpack.c.b16 %v5134, %v5130
    %v5463 = vpack.c.b16 %v5135, %v5131
    %v5464 = vpack.c.b16 %v5136, %v5132
    %v5465 = vpack.c.b16 %v5137, %v5133
    %v5466 = vpack.c.b16 %v5142, %v5138
    %v5467 = vpack.c.b16 %v5143, %v5139
    %v5468 = vpack.c.b16 %v5144, %v5140
    %v5469 = vpack.c.b16 %v5145, %v5141
    %v5470 = vpack.c.b16 %v5150, %v5146
    %v5471 = vpack.c.b16 %v5151, %v5147
    %v5472 = vpack.c.b16 %v5152, %v5148
    %v5473 = vpack.c.b16 %v5153, %v5149
    %v5474 = vpack.c.b16 %v5158, %v5154
    %v5475 = vpack.c.b16 %v5159, %v5155
    %v5476 = vpack.c.b16 %v5160, %v5156
    %v5477 = vpack.c.b16 %v5161, %v5157
    %v5478 = vpack.c.b16 %v5166, %v5162
    %v5479 = vpack.c.b16 %v5167, %v5163
    %v5480 = vpack.c.b16 %v5168, %v5164
    %v5481 = vpack.c.b16 %v5169, %v5165
    %v5482 = vpack.c.b16 %v5174, %v5170
    %v5483 = vpack.c.b16 %v5175, %v5171
    %v5484 = vpack.c.b16 %v5176, %v5172
    %v5485 = vpack.c.b16 %v5177, %v5173
    %v5486 = vpack.c.b16 %v5182, %v5178
    %v5487 = vpack.c.b16 %v5183, %v5179
    %v5488 = vpack.c.b16 %v5184, %v5180
    %v5489 = vpack.c.b16 %v5185, %v5181
    %v5490 = vpack.c.b16 %v5190, %v5186
    %v5491 = vpack.c.b16 %v5191, %v5187
    %v5492 = vpack.c.b16 %v5192, %v5188
    %v5493 = vpack.c.b16 %v5193, %v5189
    %v5494 = vpack.c.b16 %v5198, %v5194
    %v5495 = vpack.c.b16 %v5199, %v5195
    %v5496 = vpack.c.b16 %v5200, %v5196
    %v5497 = vpack.c.b16 %v5201, %v5197
    %v5498 = vpack.c.b16 %v5206, %v5202
    %v5499 = vpack.c.b16 %v5207, %v5203
    %v5500 = vpack.c.b16 %v5208, %v5204
    %v5501 = vpack.c.b16 %v5209, %v5205
    %v5502 = vpack.c.b16 %v5214, %v5210
    %v5503 = vpack.c.b16 %v5215, %v5211
    %v5504 = vpack.c.b16 %v5216, %v5212
    %v5505 = vpack.c.b16 %v5217, %v5213
    %v5506 = vpack.c.b16 %v5222, %v5218
    %v5507 = vpack.c.b16 %v5223, %v5219
    %v5508 = vpack.c.b16 %v5224, %v5220
    %v5509 = vpack.c.b16 %v5225, %v5221
    %v5510 = vpack.c.b16 %v5230, %v5226
    %v5511 = vpack.c.b16 %v5231, %v5227
    %v5512 = vpack.c.b16 %v5232, %v5228
    %v5513 = vpack.c.b16 %v5233, %v5229
    %v5514 = vpack.c.b16 %v5238, %v5234
    %v5515 = vpack.c.b16 %v5239, %v5235
    %v5516 = vpack.c.b16 %v5240, %v5236
    %v5517 = vpack.c.b16 %v5241, %v5237
    %v5518 = vpack.c.b16 %v5246, %v5242
    %v5519 = vpack.c.b16 %v5247, %v5243
    %v5520 = vpack.c.b16 %v5248, %v5244
    %v5521 = vpack.c.b16 %v5249, %v5245
    %v5522 = vpack.c.b16 %v5254, %v5250
    %v5523 = vpack.c.b16 %v5255, %v5251
    %v5524 = vpack.c.b16 %v5256, %v5252
    %v5525 = vpack.c.b16 %v5257, %v5253
    %v5526 = vpack.c.b16 %v5262, %v5258
    %v5527 = vpack.c.b16 %v5263, %v5259
    %v5528 = vpack.c.b16 %v5264, %v5260
    %v5529 = vpack.c.b16 %v5265, %v5261
    %v5530 = vpack.c.b16 %v5270, %v5266
    %v5531 = vpack.c.b16 %v5271, %v5267
    %v5532 = vpack.c.b16 %v5272, %v5268
    %v5533 = vpack.c.b16 %v5273, %v5269
    %v5534 = vpack.c.b16 %v5278, %v5274
    %v5535 = vpack.c.b16 %v5279, %v5275
    %v5536 = vpack.c.b16 %v5280, %v5276
    %v5537 = vpack.c.b16 %v5281, %v5277
    %5794 = vmatprep.subr.bf16.mxu0 %v5311
    %5795 = vmatpush1.bf16.msra.mxu0 %v5310
    %5796 = vmatprep.subr.bf16.mxu0 %v5307
    %5797 = vmatpush1.bf16.msra.mxu0 %v5306
    %5798 = vmatprep.subr.bf16.mxu0 %v5303
    %5799 = vmatpush1.bf16.msra.mxu0 %v5302
    %5800 = vmatprep.subr.bf16.mxu0 %v5299
    %5801 = vmatpush1.bf16.msra.mxu0 %v5298
    %5802 = vmatprep.subr.bf16.mxu0 %v5295
    %5803 = vmatpush1.bf16.msra.mxu0 %v5294
    %5804 = vmatprep.subr.bf16.mxu0 %v5291
    %5805 = vmatpush1.bf16.msra.mxu0 %v5290
    %5806 = vmatprep.subr.bf16.mxu0 %v5287
    %5807 = vmatpush1.bf16.msra.mxu0 %v5286
    %5808 = vmatprep.subr.bf16.mxu0 %v5283
    %5809 = vmatpush1.bf16.msra.mxu0 %v5282
    %5810 = vmatprep.subr.bf16.mxu0 %v5343
    %5811 = vmatpush2.bf16.msra.mxu0 %v5342
    %5812 = vmatprep.subr.bf16.mxu0 %v5339
    %5813 = vmatpush2.bf16.msra.mxu0 %v5338
    %5814 = vmatprep.subr.bf16.mxu0 %v5335
    %5815 = vmatpush2.bf16.msra.mxu0 %v5334
    %5816 = vmatprep.subr.bf16.mxu0 %v5331
    %5817 = vmatpush2.bf16.msra.mxu0 %v5330
    %5818 = vmatprep.subr.bf16.mxu0 %v5327
    %5819 = vmatpush2.bf16.msra.mxu0 %v5326
    %5820 = vmatprep.subr.bf16.mxu0 %v5323
    %5821 = vmatpush2.bf16.msra.mxu0 %v5322
    %5822 = vmatprep.subr.bf16.mxu0 %v5319
    %5823 = vmatpush2.bf16.msra.mxu0 %v5318
    %5824 = vmatprep.subr.bf16.mxu0 %v5315
    %5825 = vmatpush2.bf16.msra.mxu0 %v5314
    %5826 = vmatprep.mubr.bf16.mxu0 %v4251
    %5827 = vmatmul.mubr.bf16.gmra.mxu0 %v4250
    %v5828 = vpop.f32.mrf.mxu0
    %v5829 = vadd.f32 0.0, %v5828
    %v5830 = vpop.f32.mrf.mxu0
    %v5831 = vadd.f32 0.0, %v5830
    %v5832 = vpop.f32.mrf.mxu0
    %v5833 = vpop.f32.mrf.mxu0
    %5834 = vdwg.mxu0
    %5835 = vmatprep.subr.bf16.mxu0 %v5375
    %5836 = vmatpush1.bf16.msra.mxu0 %v5374
    %5837 = vmatprep.subr.bf16.mxu0 %v5371
    %5838 = vmatpush1.bf16.msra.mxu0 %v5370
    %5839 = vmatprep.subr.bf16.mxu0 %v5367
    %5840 = vmatpush1.bf16.msra.mxu0 %v5366
    %5841 = vmatprep.subr.bf16.mxu0 %v5363
    %5842 = vmatpush1.bf16.msra.mxu0 %v5362
    %5843 = vmatprep.subr.bf16.mxu0 %v5359
    %5844 = vmatpush1.bf16.msra.mxu0 %v5358
    %5845 = vmatprep.subr.bf16.mxu0 %v5355
    %5846 = vmatpush1.bf16.msra.mxu0 %v5354
    %5847 = vmatprep.subr.bf16.mxu0 %v5351
    %5848 = vmatpush1.bf16.msra.mxu0 %v5350
    %5849 = vmatprep.subr.bf16.mxu0 %v5347
    %5850 = vmatpush1.bf16.msra.mxu0 %v5346
    %5851 = vmatprep.subr.bf16.mxu0 %v5407
    %5852 = vmatpush2.bf16.msra.mxu0 %v5406
    %5853 = vmatprep.subr.bf16.mxu0 %v5403
    %5854 = vmatpush2.bf16.msra.mxu0 %v5402
    %5855 = vmatprep.subr.bf16.mxu0 %v5399
    %5856 = vmatpush2.bf16.msra.mxu0 %v5398
    %5857 = vmatprep.subr.bf16.mxu0 %v5395
    %5858 = vmatpush2.bf16.msra.mxu0 %v5394
    %5859 = vmatprep.subr.bf16.mxu0 %v5391
    %5860 = vmatpush2.bf16.msra.mxu0 %v5390
    %5861 = vmatprep.subr.bf16.mxu0 %v5387
    %5862 = vmatpush2.bf16.msra.mxu0 %v5386
    %5863 = vmatprep.subr.bf16.mxu0 %v5383
    %5864 = vmatpush2.bf16.msra.mxu0 %v5382
    %5865 = vmatprep.subr.bf16.mxu0 %v5379
    %5866 = vmatpush2.bf16.msra.mxu0 %v5378
    %5867 = vmatprep.mubr.bf16.mxu0 %v4253
    %5868 = vmatmul.mubr.bf16.gmra.mxu0 %v4252
    %v5869 = vpop.f32.mrf.mxu0
    %v5870 = vadd.f32 %v5829, %v5869
    %v5871 = vpop.f32.mrf.mxu0
    %v5872 = vadd.f32 %v5831, %v5871
    %v5873 = vpop.f32.mrf.mxu0
    %v5874 = vpop.f32.mrf.mxu0
    %5875 = vdwg.mxu0
    %5876 = vmatprep.subr.bf16.mxu0 %v5439
    %5877 = vmatpush1.bf16.msra.mxu0 %v5438
    %5878 = vmatprep.subr.bf16.mxu0 %v5435
    %5879 = vmatpush1.bf16.msra.mxu0 %v5434
    %5880 = vmatprep.subr.bf16.mxu0 %v5431
    %5881 = vmatpush1.bf16.msra.mxu0 %v5430
    %5882 = vmatprep.subr.bf16.mxu0 %v5427
    %5883 = vmatpush1.bf16.msra.mxu0 %v5426
    %5884 = vmatprep.subr.bf16.mxu0 %v5423
    %5885 = vmatpush1.bf16.msra.mxu0 %v5422
    %5886 = vmatprep.subr.bf16.mxu0 %v5419
    %5887 = vmatpush1.bf16.msra.mxu0 %v5418
    %5888 = vmatprep.subr.bf16.mxu0 %v5415
    %5889 = vmatpush1.bf16.msra.mxu0 %v5414
    %5890 = vmatprep.subr.bf16.mxu0 %v5411
    %5891 = vmatpush1.bf16.msra.mxu0 %v5410
    %5892 = vmatprep.subr.bf16.mxu0 %v5471
    %5893 = vmatpush2.bf16.msra.mxu0 %v5470
    %5894 = vmatprep.subr.bf16.mxu0 %v5467
    %5895 = vmatpush2.bf16.msra.mxu0 %v5466
    %5896 = vmatprep.subr.bf16.mxu0 %v5463
    %5897 = vmatpush2.bf16.msra.mxu0 %v5462
    %5898 = vmatprep.subr.bf16.mxu0 %v5459
    %5899 = vmatpush2.bf16.msra.mxu0 %v5458
    %5900 = vmatprep.subr.bf16.mxu0 %v5455
    %5901 = vmatpush2.bf16.msra.mxu0 %v5454
    %5902 = vmatprep.subr.bf16.mxu0 %v5451
    %5903 = vmatpush2.bf16.msra.mxu0 %v5450
    %5904 = vmatprep.subr.bf16.mxu0 %v5447
    %5905 = vmatpush2.bf16.msra.mxu0 %v5446
    %5906 = vmatprep.subr.bf16.mxu0 %v5443
    %5907 = vmatpush2.bf16.msra.mxu0 %v5442
    %5908 = vmatprep.mubr.bf16.mxu0 %v4255
    %5909 = vmatmul.mubr.bf16.gmra.mxu0 %v4254
    %v5910 = vpop.f32.mrf.mxu0
    %v5911 = vadd.f32 %v5870, %v5910
    %v5912 = vpop.f32.mrf.mxu0
    %v5913 = vadd.f32 %v5872, %v5912
    %v5914 = vpop.f32.mrf.mxu0
    %v5915 = vpop.f32.mrf.mxu0
    %5916 = vdwg.mxu0
    %5917 = vmatprep.subr.bf16.mxu0 %v5503
    %5918 = vmatpush1.bf16.msra.mxu0 %v5502
    %5919 = vmatprep.subr.bf16.mxu0 %v5499
    %5920 = vmatpush1.bf16.msra.mxu0 %v5498
    %5921 = vmatprep.subr.bf16.mxu0 %v5495
    %5922 = vmatpush1.bf16.msra.mxu0 %v5494
    %5923 = vmatprep.subr.bf16.mxu0 %v5491
    %5924 = vmatpush1.bf16.msra.mxu0 %v5490
    %5925 = vmatprep.subr.bf16.mxu0 %v5487
    %5926 = vmatpush1.bf16.msra.mxu0 %v5486
    %5927 = vmatprep.subr.bf16.mxu0 %v5483
    %5928 = vmatpush1.bf16.msra.mxu0 %v5482
    %5929 = vmatprep.subr.bf16.mxu0 %v5479
    %5930 = vmatpush1.bf16.msra.mxu0 %v5478
    %5931 = vmatprep.subr.bf16.mxu0 %v5475
    %5932 = vmatpush1.bf16.msra.mxu0 %v5474
    %5933 = vmatprep.subr.bf16.mxu0 %v5535
    %5934 = vmatpush2.bf16.msra.mxu0 %v5534
    %5935 = vmatprep.subr.bf16.mxu0 %v5531
    %5936 = vmatpush2.bf16.msra.mxu0 %v5530
    %5937 = vmatprep.subr.bf16.mxu0 %v5527
    %5938 = vmatpush2.bf16.msra.mxu0 %v5526
    %5939 = vmatprep.subr.bf16.mxu0 %v5523
    %5940 = vmatpush2.bf16.msra.mxu0 %v5522
    %5941 = vmatprep.subr.bf16.mxu0 %v5519
    %5942 = vmatpush2.bf16.msra.mxu0 %v5518
    %5943 = vmatprep.subr.bf16.mxu0 %v5515
    %5944 = vmatpush2.bf16.msra.mxu0 %v5514
    %5945 = vmatprep.subr.bf16.mxu0 %v5511
    %5946 = vmatpush2.bf16.msra.mxu0 %v5510
    %5947 = vmatprep.subr.bf16.mxu0 %v5507
    %5948 = vmatpush2.bf16.msra.mxu0 %v5506
    %5949 = vmatprep.mubr.bf16.mxu0 %v4257
    %5950 = vmatmul.mubr.bf16.gmra.mxu0 %v4256
    %v5951 = vpop.f32.mrf.mxu0
    %v5952 = vadd.f32 %v5911, %v5951
    %v5953 = vpop.f32.mrf.mxu0
    %v5954 = vadd.f32 %v5913, %v5953
    %v5955 = vpop.f32.mrf.mxu0
    %v5956 = vpop.f32.mrf.mxu0
    %5957 = vdwg.mxu0
    %5958 = vmatprep.subr.bf16.mxu0 %v5313
    %5959 = vmatpush1.bf16.msra.mxu0 %v5312
    %5960 = vmatprep.subr.bf16.mxu0 %v5309
    %5961 = vmatpush1.bf16.msra.mxu0 %v5308
    %5962 = vmatprep.subr.bf16.mxu0 %v5305
    %5963 = vmatpush1.bf16.msra.mxu0 %v5304
    %5964 = vmatprep.subr.bf16.mxu0 %v5301
    %5965 = vmatpush1.bf16.msra.mxu0 %v5300
    %5966 = vmatprep.subr.bf16.mxu0 %v5297
    %5967 = vmatpush1.bf16.msra.mxu0 %v5296
    %5968 = vmatprep.subr.bf16.mxu0 %v5293
    %5969 = vmatpush1.bf16.msra.mxu0 %v5292
    %5970 = vmatprep.subr.bf16.mxu0 %v5289
    %5971 = vmatpush1.bf16.msra.mxu0 %v5288
    %5972 = vmatprep.subr.bf16.mxu0 %v5285
    %5973 = vmatpush1.bf16.msra.mxu0 %v5284
    %5974 = vmatprep.subr.bf16.mxu0 %v5345
    %5975 = vmatpush2.bf16.msra.mxu0 %v5344
    %5976 = vmatprep.subr.bf16.mxu0 %v5341
    %5977 = vmatpush2.bf16.msra.mxu0 %v5340
    %5978 = vmatprep.subr.bf16.mxu0 %v5337
    %5979 = vmatpush2.bf16.msra.mxu0 %v5336
    %5980 = vmatprep.subr.bf16.mxu0 %v5333
    %5981 = vmatpush2.bf16.msra.mxu0 %v5332
    %5982 = vmatprep.subr.bf16.mxu0 %v5329
    %5983 = vmatpush2.bf16.msra.mxu0 %v5328
    %5984 = vmatprep.subr.bf16.mxu0 %v5325
    %5985 = vmatpush2.bf16.msra.mxu0 %v5324
    %5986 = vmatprep.subr.bf16.mxu0 %v5321
    %5987 = vmatpush2.bf16.msra.mxu0 %v5320
    %5988 = vmatprep.subr.bf16.mxu0 %v5317
    %5989 = vmatpush2.bf16.msra.mxu0 %v5316
    %5990 = vmatprep.mubr.bf16.mxu0 %v4251
    %5991 = vmatmul.mubr.bf16.gmra.mxu0 %v4250
    %v5992 = vpop.f32.mrf.mxu0
    %v5993 = vadd.f32 0.0, %v5992
    %v5994 = vpop.f32.mrf.mxu0
    %v5995 = vadd.f32 0.0, %v5994
    %v5996 = vpop.f32.mrf.mxu0
    %v5997 = vpop.f32.mrf.mxu0
    %5998 = vdwg.mxu0
    %5999 = vmatprep.subr.bf16.mxu0 %v5377
    %6000 = vmatpush1.bf16.msra.mxu0 %v5376
    %6001 = vmatprep.subr.bf16.mxu0 %v5373
    %6002 = vmatpush1.bf16.msra.mxu0 %v5372
    %6003 = vmatprep.subr.bf16.mxu0 %v5369
    %6004 = vmatpush1.bf16.msra.mxu0 %v5368
    %6005 = vmatprep.subr.bf16.mxu0 %v5365
    %6006 = vmatpush1.bf16.msra.mxu0 %v5364
    %6007 = vmatprep.subr.bf16.mxu0 %v5361
    %6008 = vmatpush1.bf16.msra.mxu0 %v5360
    %6009 = vmatprep.subr.bf16.mxu0 %v5357
    %6010 = vmatpush1.bf16.msra.mxu0 %v5356
    %6011 = vmatprep.subr.bf16.mxu0 %v5353
    %6012 = vmatpush1.bf16.msra.mxu0 %v5352
    %6013 = vmatprep.subr.bf16.mxu0 %v5349
    %6014 = vmatpush1.bf16.msra.mxu0 %v5348
    %6015 = vmatprep.subr.bf16.mxu0 %v5409
    %6016 = vmatpush2.bf16.msra.mxu0 %v5408
    %6017 = vmatprep.subr.bf16.mxu0 %v5405
    %6018 = vmatpush2.bf16.msra.mxu0 %v5404
    %6019 = vmatprep.subr.bf16.mxu0 %v5401
    %6020 = vmatpush2.bf16.msra.mxu0 %v5400
    %6021 = vmatprep.subr.bf16.mxu0 %v5397
    %6022 = vmatpush2.bf16.msra.mxu0 %v5396
    %6023 = vmatprep.subr.bf16.mxu0 %v5393
    %6024 = vmatpush2.bf16.msra.mxu0 %v5392
    %6025 = vmatprep.subr.bf16.mxu0 %v5389
    %6026 = vmatpush2.bf16.msra.mxu0 %v5388
    %6027 = vmatprep.subr.bf16.mxu0 %v5385
    %6028 = vmatpush2.bf16.msra.mxu0 %v5384
    %6029 = vmatprep.subr.bf16.mxu0 %v5381
    %6030 = vmatpush2.bf16.msra.mxu0 %v5380
    %6031 = vmatprep.mubr.bf16.mxu0 %v4253
    %6032 = vmatmul.mubr.bf16.gmra.mxu0 %v4252
    %v6033 = vpop.f32.mrf.mxu0
    %v6034 = vadd.f32 %v5993, %v6033
    %v6035 = vpop.f32.mrf.mxu0
    %v6036 = vadd.f32 %v5995, %v6035
    %v6037 = vpop.f32.mrf.mxu0
    %v6038 = vpop.f32.mrf.mxu0
    %6039 = vdwg.mxu0
    %6040 = vmatprep.subr.bf16.mxu0 %v5441
    %6041 = vmatpush1.bf16.msra.mxu0 %v5440
    %6042 = vmatprep.subr.bf16.mxu0 %v5437
    %6043 = vmatpush1.bf16.msra.mxu0 %v5436
    %6044 = vmatprep.subr.bf16.mxu0 %v5433
    %6045 = vmatpush1.bf16.msra.mxu0 %v5432
    %6046 = vmatprep.subr.bf16.mxu0 %v5429
    %6047 = vmatpush1.bf16.msra.mxu0 %v5428
    %6048 = vmatprep.subr.bf16.mxu0 %v5425
    %6049 = vmatpush1.bf16.msra.mxu0 %v5424
    %6050 = vmatprep.subr.bf16.mxu0 %v5421
    %6051 = vmatpush1.bf16.msra.mxu0 %v5420
    %6052 = vmatprep.subr.bf16.mxu0 %v5417
    %6053 = vmatpush1.bf16.msra.mxu0 %v5416
    %6054 = vmatprep.subr.bf16.mxu0 %v5413
    %6055 = vmatpush1.bf16.msra.mxu0 %v5412
    %6056 = vmatprep.subr.bf16.mxu0 %v5473
    %6057 = vmatpush2.bf16.msra.mxu0 %v5472
    %6058 = vmatprep.subr.bf16.mxu0 %v5469
    %6059 = vmatpush2.bf16.msra.mxu0 %v5468
    %6060 = vmatprep.subr.bf16.mxu0 %v5465
    %6061 = vmatpush2.bf16.msra.mxu0 %v5464
    %6062 = vmatprep.subr.bf16.mxu0 %v5461
    %6063 = vmatpush2.bf16.msra.mxu0 %v5460
    %6064 = vmatprep.subr.bf16.mxu0 %v5457
    %6065 = vmatpush2.bf16.msra.mxu0 %v5456
    %6066 = vmatprep.subr.bf16.mxu0 %v5453
    %6067 = vmatpush2.bf16.msra.mxu0 %v5452
    %6068 = vmatprep.subr.bf16.mxu0 %v5449
    %6069 = vmatpush2.bf16.msra.mxu0 %v5448
    %6070 = vmatprep.subr.bf16.mxu0 %v5445
    %6071 = vmatpush2.bf16.msra.mxu0 %v5444
    %6072 = vmatprep.mubr.bf16.mxu0 %v4255
    %6073 = vmatmul.mubr.bf16.gmra.mxu0 %v4254
    %v6074 = vpop.f32.mrf.mxu0
    %v6075 = vadd.f32 %v6034, %v6074
    %v6076 = vpop.f32.mrf.mxu0
    %v6077 = vadd.f32 %v6036, %v6076
    %v6078 = vpop.f32.mrf.mxu0
    %v6079 = vpop.f32.mrf.mxu0
    %6080 = vdwg.mxu0
    %6081 = vmatprep.subr.bf16.mxu0 %v5505
    %6082 = vmatpush1.bf16.msra.mxu0 %v5504
    %6083 = vmatprep.subr.bf16.mxu0 %v5501
    %6084 = vmatpush1.bf16.msra.mxu0 %v5500
    %6085 = vmatprep.subr.bf16.mxu0 %v5497
    %6086 = vmatpush1.bf16.msra.mxu0 %v5496
    %6087 = vmatprep.subr.bf16.mxu0 %v5493
    %6088 = vmatpush1.bf16.msra.mxu0 %v5492
    %6089 = vmatprep.subr.bf16.mxu0 %v5489
    %6090 = vmatpush1.bf16.msra.mxu0 %v5488
    %6091 = vmatprep.subr.bf16.mxu0 %v5485
    %6092 = vmatpush1.bf16.msra.mxu0 %v5484
    %6093 = vmatprep.subr.bf16.mxu0 %v5481
    %6094 = vmatpush1.bf16.msra.mxu0 %v5480
    %6095 = vmatprep.subr.bf16.mxu0 %v5477
    %6096 = vmatpush1.bf16.msra.mxu0 %v5476
    %6097 = vmatprep.subr.bf16.mxu0 %v5537
    %6098 = vmatpush2.bf16.msra.mxu0 %v5536
    %6099 = vmatprep.subr.bf16.mxu0 %v5533
    %6100 = vmatpush2.bf16.msra.mxu0 %v5532
    %6101 = vmatprep.subr.bf16.mxu0 %v5529
    %6102 = vmatpush2.bf16.msra.mxu0 %v5528
    %6103 = vmatprep.subr.bf16.mxu0 %v5525
    %6104 = vmatpush2.bf16.msra.mxu0 %v5524
    %6105 = vmatprep.subr.bf16.mxu0 %v5521
    %6106 = vmatpush2.bf16.msra.mxu0 %v5520
    %6107 = vmatprep.subr.bf16.mxu0 %v5517
    %6108 = vmatpush2.bf16.msra.mxu0 %v5516
    %6109 = vmatprep.subr.bf16.mxu0 %v5513
    %6110 = vmatpush2.bf16.msra.mxu0 %v5512
    %6111 = vmatprep.subr.bf16.mxu0 %v5509
    %6112 = vmatpush2.bf16.msra.mxu0 %v5508
    %6113 = vmatprep.mubr.bf16.mxu0 %v4257
    %6114 = vmatmul.mubr.bf16.gmra.mxu0 %v4256
    %v6115 = vpop.f32.mrf.mxu0
    %v6116 = vadd.f32 %v6075, %v6115
    %v6117 = vpop.f32.mrf.mxu0
    %v6118 = vadd.f32 %v6077, %v6117
    %v6119 = vpop.f32.mrf.mxu0
    %v6120 = vpop.f32.mrf.mxu0
    %6121 = vdwg.mxu0
    %v6122 = vld [vmem:[#allocation13 + $0x8] sm:$0xf]
    %v6123 = vld [vmem:[#allocation13 + $0x17] sm:$0xf]
    %v6124 = vrot.slane %v5952, 4
    %v6125 = vadd.f32 %v5952, %v6124
    %v6126 = vrot.slane %v6125, 2
    %v6127 = vadd.f32 %v6125, %v6126
    %v6128 = vrot.slane %v6127, 1
    %v6129 = vadd.f32 %v6127, %v6128
    %v6130 = vrot.slane %v5954, 4
    %v6131 = vadd.f32 %v5954, %v6130
    %v6132 = vrot.slane %v6131, 2
    %v6133 = vadd.f32 %v6131, %v6132
    %v6134 = vrot.slane %v6133, 1
    %v6135 = vadd.f32 %v6133, %v6134
    %v6136 = vrot.slane %v6116, 4
    %v6137 = vadd.f32 %v6116, %v6136
    %v6138 = vrot.slane %v6137, 2
    %v6139 = vadd.f32 %v6137, %v6138
    %v6140 = vrot.slane %v6139, 1
    %v6141 = vadd.f32 %v6139, %v6140
    %v6142 = vrot.slane %v6118, 4
    %v6143 = vadd.f32 %v6118, %v6142
    %v6144 = vrot.slane %v6143, 2
    %v6145 = vadd.f32 %v6143, %v6144
    %v6146 = vrot.slane %v6145, 1
    %v6147 = vadd.f32 %v6145, %v6146
    %v6148 = vmul.f32 %v6129, %v3913
    %v6149 = vmul.f32 %v6135, %v3913
    %v6150 = vmul.f32 %v6141, %v3913
    %v6151 = vmul.f32 %v6147, %v3913
    %v6152 = vsub.f32 %v5952, %v6148
    %v6153 = vsub.f32 %v5954, %v6149
    %v6154 = vsub.f32 %v6116, %v6150
    %v6155 = vsub.f32 %v6118, %v6151
    %v6156 = vmul.f32 %v6152, %v6152
    %v6157 = vmul.f32 %v6153, %v6153
    %v6158 = vmul.f32 %v6154, %v6154
    %v6159 = vmul.f32 %v6155, %v6155
    %v6160 = vrot.slane %v6156, 4
    %v6161 = vadd.f32 %v6156, %v6160
    %v6162 = vrot.slane %v6161, 2
    %v6163 = vadd.f32 %v6161, %v6162
    %v6164 = vrot.slane %v6163, 1
    %v6165 = vadd.f32 %v6163, %v6164
    %v6166 = vrot.slane %v6157, 4
    %v6167 = vadd.f32 %v6157, %v6166
    %v6168 = vrot.slane %v6167, 2
    %v6169 = vadd.f32 %v6167, %v6168
    %v6170 = vrot.slane %v6169, 1
    %v6171 = vadd.f32 %v6169, %v6170
    %v6172 = vrot.slane %v6158, 4
    %v6173 = vadd.f32 %v6158, %v6172
    %v6174 = vrot.slane %v6173, 2
    %v6175 = vadd.f32 %v6173, %v6174
    %v6176 = vrot.slane %v6175, 1
    %v6177 = vadd.f32 %v6175, %v6176
    %v6178 = vrot.slane %v6159, 4
    %v6179 = vadd.f32 %v6159, %v6178
    %v6180 = vrot.slane %v6179, 2
    %v6181 = vadd.f32 %v6179, %v6180
    %v6182 = vrot.slane %v6181, 1
    %v6183 = vadd.f32 %v6181, %v6182
    %v6184 = vmul.f32 %v6165, %v3913
    %v6185 = vmul.f32 %v6171, %v3913
    %v6186 = vmul.f32 %v6177, %v3913
    %v6187 = vmul.f32 %v6183, %v3913
    %v6188 = vadd.f32 %v6184, 1e-05
    %v6189 = vadd.f32 %v6185, 1e-05
    %v6190 = vadd.f32 %v6186, 1e-05
    %v6191 = vadd.f32 %v6187, 1e-05
    %v6192 = vrsqrt.pop %v6188
    %v6193 = vrsqrt.pop %v6189
    %v6194 = vrsqrt.pop %v6190
    %v6195 = vrsqrt.pop %v6191
    %v6200 = vcombine.low %v6192, %v6193
    %v6201 = vcombine.low %v6194, %v6195
    %v6203 = vunpack.c.l.s4 1966171168
    %v6204 = vunpack.c.0.s8 %v6203
    %v6205 = vlaneseq
    %v6206 = vshrl.u32 %v6205, 7
    %v6207 = vsub.s32 %v6204, %v6206
    %v6208 = vrot.slane %v6200, %v6207
    %v6210 = vunpack.c.l.s4 1966171168
    %v6211 = vunpack.c.0.s8 %v6210
    %v6212 = vlaneseq
    %v6213 = vshrl.u32 %v6212, 7
    %v6214 = vsub.s32 %v6211, %v6213
    %v6215 = vrot.slane %v6201, %v6214
    %v6216 = vcombine.low %v6208, %v6215
    %v6218 = vunpack.c.l.s4 1966171168
    %v6219 = vunpack.c.0.s8 %v6218
    %v6220 = vlaneseq
    %v6221 = vshrl.u32 %v6220, 7
    %v6222 = vsub.s32 %v6219, %v6221
    %v6223 = vrot.slane %v6216, %v6222
    %v6225 = vmul.f32 %v6122, %v6223
    %v6227 = vlaneseq
    %v6228 = vshrl.u32 %v6227, 7
    %v6229 = vsub.s32 0, %v6228
    %v6230 = vrot.slane %v6225, %v6229
    %v6231 = vlaneseq
    %v6232 = vshrl.u32 %v6231, 7
    %v6233 = vsub.s32 1, %v6232
    %v6234 = vrot.slane %v6225, %v6233
    %v6235 = vlaneseq
    %v6236 = vshrl.u32 %v6235, 7
    %v6237 = vsub.s32 2, %v6236
    %v6238 = vrot.slane %v6225, %v6237
    %v6239 = vlaneseq
    %v6240 = vshrl.u32 %v6239, 7
    %v6241 = vsub.s32 3, %v6240
    %v6242 = vrot.slane %v6225, %v6241
    %v6247 = vmul.f32 %v6148, %v6230
    %v6248 = vmul.f32 %v6149, %v6234
    %v6249 = vmul.f32 %v6150, %v6238
    %v6250 = vmul.f32 %v6151, %v6242
    %v6255 = vcombine.low %v6247, %v6248
    %v6256 = vcombine.low %v6249, %v6250
    %v6258 = vunpack.c.l.s4 1966171168
    %v6259 = vunpack.c.0.s8 %v6258
    %v6260 = vlaneseq
    %v6261 = vshrl.u32 %v6260, 7
    %v6262 = vsub.s32 %v6259, %v6261
    %v6263 = vrot.slane %v6255, %v6262
    %v6265 = vunpack.c.l.s4 1966171168
    %v6266 = vunpack.c.0.s8 %v6265
    %v6267 = vlaneseq
    %v6268 = vshrl.u32 %v6267, 7
    %v6269 = vsub.s32 %v6266, %v6268
    %v6270 = vrot.slane %v6256, %v6269
    %v6271 = vcombine.low %v6263, %v6270
    %v6273 = vunpack.c.l.s4 1966171168
    %v6274 = vunpack.c.0.s8 %v6273
    %v6275 = vlaneseq
    %v6276 = vshrl.u32 %v6275, 7
    %v6277 = vsub.s32 %v6274, %v6276
    %v6278 = vrot.slane %v6271, %v6277
    %v6280 = vsub.f32 %v6123, %v6278
    %v6281 = vmul.f32 %v5952, %v6230
    %v6282 = vmul.f32 %v5954, %v6234
    %v6283 = vmul.f32 %v6116, %v6238
    %v6284 = vmul.f32 %v6118, %v6242
    %v6286 = vlaneseq
    %v6287 = vshrl.u32 %v6286, 7
    %v6288 = vsub.s32 0, %v6287
    %v6289 = vrot.slane %v6280, %v6288
    %v6290 = vlaneseq
    %v6291 = vshrl.u32 %v6290, 7
    %v6292 = vsub.s32 1, %v6291
    %v6293 = vrot.slane %v6280, %v6292
    %v6294 = vlaneseq
    %v6295 = vshrl.u32 %v6294, 7
    %v6296 = vsub.s32 2, %v6295
    %v6297 = vrot.slane %v6280, %v6296
    %v6298 = vlaneseq
    %v6299 = vshrl.u32 %v6298, 7
    %v6300 = vsub.s32 3, %v6299
    %v6301 = vrot.slane %v6280, %v6300
    %v6306 = vadd.f32 %v6281, %v6289
    %v6307 = vadd.f32 %v6282, %v6293
    %v6308 = vadd.f32 %v6283, %v6297
    %v6309 = vadd.f32 %v6284, %v6301
    %v6310 = vmul.f32 %v6306, 0.2
    %v6311 = vmul.f32 %v6307, 0.2
    %v6312 = vmul.f32 %v6308, 0.2
    %v6313 = vmul.f32 %v6309, 0.2
    %v6314 = vmax.f32 %v6306, %v6310
    %v6315 = vmax.f32 %v6307, %v6311
    %v6316 = vmax.f32 %v6308, %v6312
    %v6317 = vmax.f32 %v6309, %v6313
    %v6318 = vpack.c.bf16 %v6314, %v6314
    %v6319 = vpack.c.bf16 %v6315, %v6315
    %v6320 = vpack.c.bf16 %v6316, %v6316
    %v6321 = vpack.c.bf16 %v6317, %v6317
    %v6322 = vld [vmem:[#allocation8] sm:$0xff]
    %v6323 = vld [vmem:[#allocation8 + $0x8] sm:$0xff]
    %v6324 = vld [vmem:[#allocation8 + $0x10] sm:$0xff]
    %v6325 = vld [vmem:[#allocation8 + $0x18] sm:$0xff]
    %v6326 = vld [vmem:[#allocation8 + $0x20] sm:$0xff]
    %v6327 = vld [vmem:[#allocation8 + $0x28] sm:$0xff]
    %v6328 = vld [vmem:[#allocation8 + $0x30] sm:$0xff]
    %v6329 = vld [vmem:[#allocation8 + $0x38] sm:$0xff]
    %v6330 = vld [vmem:[#allocation8 + $0x40] sm:$0xff]
    %v6331 = vld [vmem:[#allocation8 + $0x48] sm:$0xff]
    %v6332 = vld [vmem:[#allocation8 + $0x50] sm:$0xff]
    %v6333 = vld [vmem:[#allocation8 + $0x58] sm:$0xff]
    %v6334 = vld [vmem:[#allocation8 + $0x60] sm:$0xff]
    %v6335 = vld [vmem:[#allocation8 + $0x68] sm:$0xff]
    %v6336 = vld [vmem:[#allocation8 + $0x70] sm:$0xff]
    %v6337 = vld [vmem:[#allocation8 + $0x78] sm:$0xff]
    %v6338 = vld [vmem:[#allocation8 + $0x80] sm:$0xff]
    %v6339 = vld [vmem:[#allocation8 + $0x88] sm:$0xff]
    %v6340 = vld [vmem:[#allocation8 + $0x90] sm:$0xff]
    %v6341 = vld [vmem:[#allocation8 + $0x98] sm:$0xff]
    %v6342 = vld [vmem:[#allocation8 + $0xa0] sm:$0xff]
    %v6343 = vld [vmem:[#allocation8 + $0xa8] sm:$0xff]
    %v6344 = vld [vmem:[#allocation8 + $0xb0] sm:$0xff]
    %v6345 = vld [vmem:[#allocation8 + $0xb8] sm:$0xff]
    %v6346 = vld [vmem:[#allocation8 + $0xc0] sm:$0xff]
    %v6347 = vld [vmem:[#allocation8 + $0xc8] sm:$0xff]
    %v6348 = vld [vmem:[#allocation8 + $0xd0] sm:$0xff]
    %v6349 = vld [vmem:[#allocation8 + $0xd8] sm:$0xff]
    %v6350 = vld [vmem:[#allocation8 + $0xe0] sm:$0xff]
    %v6351 = vld [vmem:[#allocation8 + $0xe8] sm:$0xff]
    %v6352 = vld [vmem:[#allocation8 + $0xf0] sm:$0xff]
    %v6353 = vld [vmem:[#allocation8 + $0xf8] sm:$0xff]
    %v6354 = vld [vmem:[#allocation8 + $0x100] sm:$0xff]
    %v6355 = vld [vmem:[#allocation8 + $0x108] sm:$0xff]
    %v6356 = vld [vmem:[#allocation8 + $0x110] sm:$0xff]
    %v6357 = vld [vmem:[#allocation8 + $0x118] sm:$0xff]
    %v6358 = vld [vmem:[#allocation8 + $0x120] sm:$0xff]
    %v6359 = vld [vmem:[#allocation8 + $0x128] sm:$0xff]
    %v6360 = vld [vmem:[#allocation8 + $0x130] sm:$0xff]
    %v6361 = vld [vmem:[#allocation8 + $0x138] sm:$0xff]
    %v6362 = vld [vmem:[#allocation8 + $0x140] sm:$0xff]
    %v6363 = vld [vmem:[#allocation8 + $0x148] sm:$0xff]
    %v6364 = vld [vmem:[#allocation8 + $0x150] sm:$0xff]
    %v6365 = vld [vmem:[#allocation8 + $0x158] sm:$0xff]
    %v6366 = vld [vmem:[#allocation8 + $0x160] sm:$0xff]
    %v6367 = vld [vmem:[#allocation8 + $0x168] sm:$0xff]
    %v6368 = vld [vmem:[#allocation8 + $0x170] sm:$0xff]
    %v6369 = vld [vmem:[#allocation8 + $0x178] sm:$0xff]
    %v6370 = vld [vmem:[#allocation8 + $0x180] sm:$0xff]
    %v6371 = vld [vmem:[#allocation8 + $0x188] sm:$0xff]
    %v6372 = vld [vmem:[#allocation8 + $0x190] sm:$0xff]
    %v6373 = vld [vmem:[#allocation8 + $0x198] sm:$0xff]
    %v6374 = vld [vmem:[#allocation8 + $0x1a0] sm:$0xff]
    %v6375 = vld [vmem:[#allocation8 + $0x1a8] sm:$0xff]
    %v6376 = vld [vmem:[#allocation8 + $0x1b0] sm:$0xff]
    %v6377 = vld [vmem:[#allocation8 + $0x1b8] sm:$0xff]
    %v6378 = vld [vmem:[#allocation8 + $0x1c0] sm:$0xff]
    %v6379 = vld [vmem:[#allocation8 + $0x1c8] sm:$0xff]
    %v6380 = vld [vmem:[#allocation8 + $0x1d0] sm:$0xff]
    %v6381 = vld [vmem:[#allocation8 + $0x1d8] sm:$0xff]
    %v6382 = vld [vmem:[#allocation8 + $0x1e0] sm:$0xff]
    %v6383 = vld [vmem:[#allocation8 + $0x1e8] sm:$0xff]
    %v6384 = vld [vmem:[#allocation8 + $0x1f0] sm:$0xff]
    %v6385 = vld [vmem:[#allocation8 + $0x1f8] sm:$0xff]
    %v6450 = vunpack.c.l.b16 %v6322
    %v6451 = vunpack.c.h.b16 %v6322
    %v6452 = vunpack.c.l.b16 %v6323
    %v6453 = vunpack.c.h.b16 %v6323
    %v6454 = vunpack.c.l.b16 %v6324
    %v6455 = vunpack.c.h.b16 %v6324
    %v6456 = vunpack.c.l.b16 %v6325
    %v6457 = vunpack.c.h.b16 %v6325
    %v6458 = vunpack.c.l.b16 %v6326
    %v6459 = vunpack.c.h.b16 %v6326
    %v6460 = vunpack.c.l.b16 %v6327
    %v6461 = vunpack.c.h.b16 %v6327
    %v6462 = vunpack.c.l.b16 %v6328
    %v6463 = vunpack.c.h.b16 %v6328
    %v6464 = vunpack.c.l.b16 %v6329
    %v6465 = vunpack.c.h.b16 %v6329
    %v6466 = vunpack.c.l.b16 %v6330
    %v6467 = vunpack.c.h.b16 %v6330
    %v6468 = vunpack.c.l.b16 %v6331
    %v6469 = vunpack.c.h.b16 %v6331
    %v6470 = vunpack.c.l.b16 %v6332
    %v6471 = vunpack.c.h.b16 %v6332
    %v6472 = vunpack.c.l.b16 %v6333
    %v6473 = vunpack.c.h.b16 %v6333
    %v6474 = vunpack.c.l.b16 %v6334
    %v6475 = vunpack.c.h.b16 %v6334
    %v6476 = vunpack.c.l.b16 %v6335
    %v6477 = vunpack.c.h.b16 %v6335
    %v6478 = vunpack.c.l.b16 %v6336
    %v6479 = vunpack.c.h.b16 %v6336
    %v6480 = vunpack.c.l.b16 %v6337
    %v6481 = vunpack.c.h.b16 %v6337
    %v6482 = vunpack.c.l.b16 %v6338
    %v6483 = vunpack.c.h.b16 %v6338
    %v6484 = vunpack.c.l.b16 %v6339
    %v6485 = vunpack.c.h.b16 %v6339
    %v6486 = vunpack.c.l.b16 %v6340
    %v6487 = vunpack.c.h.b16 %v6340
    %v6488 = vunpack.c.l.b16 %v6341
    %v6489 = vunpack.c.h.b16 %v6341
    %v6490 = vunpack.c.l.b16 %v6342
    %v6491 = vunpack.c.h.b16 %v6342
    %v6492 = vunpack.c.l.b16 %v6343
    %v6493 = vunpack.c.h.b16 %v6343
    %v6494 = vunpack.c.l.b16 %v6344
    %v6495 = vunpack.c.h.b16 %v6344
    %v6496 = vunpack.c.l.b16 %v6345
    %v6497 = vunpack.c.h.b16 %v6345
    %v6498 = vunpack.c.l.b16 %v6346
    %v6499 = vunpack.c.h.b16 %v6346
    %v6500 = vunpack.c.l.b16 %v6347
    %v6501 = vunpack.c.h.b16 %v6347
    %v6502 = vunpack.c.l.b16 %v6348
    %v6503 = vunpack.c.h.b16 %v6348
    %v6504 = vunpack.c.l.b16 %v6349
    %v6505 = vunpack.c.h.b16 %v6349
    %v6506 = vunpack.c.l.b16 %v6350
    %v6507 = vunpack.c.h.b16 %v6350
    %v6508 = vunpack.c.l.b16 %v6351
    %v6509 = vunpack.c.h.b16 %v6351
    %v6510 = vunpack.c.l.b16 %v6352
    %v6511 = vunpack.c.h.b16 %v6352
    %v6512 = vunpack.c.l.b16 %v6353
    %v6513 = vunpack.c.h.b16 %v6353
    %v6514 = vunpack.c.l.b16 %v6354
    %v6515 = vunpack.c.h.b16 %v6354
    %v6516 = vunpack.c.l.b16 %v6355
    %v6517 = vunpack.c.h.b16 %v6355
    %v6518 = vunpack.c.l.b16 %v6356
    %v6519 = vunpack.c.h.b16 %v6356
    %v6520 = vunpack.c.l.b16 %v6357
    %v6521 = vunpack.c.h.b16 %v6357
    %v6522 = vunpack.c.l.b16 %v6358
    %v6523 = vunpack.c.h.b16 %v6358
    %v6524 = vunpack.c.l.b16 %v6359
    %v6525 = vunpack.c.h.b16 %v6359
    %v6526 = vunpack.c.l.b16 %v6360
    %v6527 = vunpack.c.h.b16 %v6360
    %v6528 = vunpack.c.l.b16 %v6361
    %v6529 = vunpack.c.h.b16 %v6361
    %v6530 = vunpack.c.l.b16 %v6362
    %v6531 = vunpack.c.h.b16 %v6362
    %v6532 = vunpack.c.l.b16 %v6363
    %v6533 = vunpack.c.h.b16 %v6363
    %v6534 = vunpack.c.l.b16 %v6364
    %v6535 = vunpack.c.h.b16 %v6364
    %v6536 = vunpack.c.l.b16 %v6365
    %v6537 = vunpack.c.h.b16 %v6365
    %v6538 = vunpack.c.l.b16 %v6366
    %v6539 = vunpack.c.h.b16 %v6366
    %v6540 = vunpack.c.l.b16 %v6367
    %v6541 = vunpack.c.h.b16 %v6367
    %v6542 = vunpack.c.l.b16 %v6368
    %v6543 = vunpack.c.h.b16 %v6368
    %v6544 = vunpack.c.l.b16 %v6369
    %v6545 = vunpack.c.h.b16 %v6369
    %v6546 = vunpack.c.l.b16 %v6370
    %v6547 = vunpack.c.h.b16 %v6370
    %v6548 = vunpack.c.l.b16 %v6371
    %v6549 = vunpack.c.h.b16 %v6371
    %v6550 = vunpack.c.l.b16 %v6372
    %v6551 = vunpack.c.h.b16 %v6372
    %v6552 = vunpack.c.l.b16 %v6373
    %v6553 = vunpack.c.h.b16 %v6373
    %v6554 = vunpack.c.l.b16 %v6374
    %v6555 = vunpack.c.h.b16 %v6374
    %v6556 = vunpack.c.l.b16 %v6375
    %v6557 = vunpack.c.h.b16 %v6375
    %v6558 = vunpack.c.l.b16 %v6376
    %v6559 = vunpack.c.h.b16 %v6376
    %v6560 = vunpack.c.l.b16 %v6377
    %v6561 = vunpack.c.h.b16 %v6377
    %v6562 = vunpack.c.l.b16 %v6378
    %v6563 = vunpack.c.h.b16 %v6378
    %v6564 = vunpack.c.l.b16 %v6379
    %v6565 = vunpack.c.h.b16 %v6379
    %v6566 = vunpack.c.l.b16 %v6380
    %v6567 = vunpack.c.h.b16 %v6380
    %v6568 = vunpack.c.l.b16 %v6381
    %v6569 = vunpack.c.h.b16 %v6381
    %v6570 = vunpack.c.l.b16 %v6382
    %v6571 = vunpack.c.h.b16 %v6382
    %v6572 = vunpack.c.l.b16 %v6383
    %v6573 = vunpack.c.h.b16 %v6383
    %v6574 = vunpack.c.l.b16 %v6384
    %v6575 = vunpack.c.h.b16 %v6384
    %v6576 = vunpack.c.l.b16 %v6385
    %v6577 = vunpack.c.h.b16 %v6385
    %v6578 = vpack.c.b16 %v6452, %v6450
    %v6579 = vpack.c.b16 %v6453, %v6451
    %v6580 = vpack.c.b16 %v6456, %v6454
    %v6581 = vpack.c.b16 %v6457, %v6455
    %v6582 = vpack.c.b16 %v6460, %v6458
    %v6583 = vpack.c.b16 %v6461, %v6459
    %v6584 = vpack.c.b16 %v6464, %v6462
    %v6585 = vpack.c.b16 %v6465, %v6463
    %v6586 = vpack.c.b16 %v6468, %v6466
    %v6587 = vpack.c.b16 %v6469, %v6467
    %v6588 = vpack.c.b16 %v6472, %v6470
    %v6589 = vpack.c.b16 %v6473, %v6471
    %v6590 = vpack.c.b16 %v6476, %v6474
    %v6591 = vpack.c.b16 %v6477, %v6475
    %v6592 = vpack.c.b16 %v6480, %v6478
    %v6593 = vpack.c.b16 %v6481, %v6479
    %v6594 = vpack.c.b16 %v6484, %v6482
    %v6595 = vpack.c.b16 %v6485, %v6483
    %v6596 = vpack.c.b16 %v6488, %v6486
    %v6597 = vpack.c.b16 %v6489, %v6487
    %v6598 = vpack.c.b16 %v6492, %v6490
    %v6599 = vpack.c.b16 %v6493, %v6491
    %v6600 = vpack.c.b16 %v6496, %v6494
    %v6601 = vpack.c.b16 %v6497, %v6495
    %v6602 = vpack.c.b16 %v6500, %v6498
    %v6603 = vpack.c.b16 %v6501, %v6499
    %v6604 = vpack.c.b16 %v6504, %v6502
    %v6605 = vpack.c.b16 %v6505, %v6503
    %v6606 = vpack.c.b16 %v6508, %v6506
    %v6607 = vpack.c.b16 %v6509, %v6507
    %v6608 = vpack.c.b16 %v6512, %v6510
    %v6609 = vpack.c.b16 %v6513, %v6511
    %v6610 = vpack.c.b16 %v6516, %v6514
    %v6611 = vpack.c.b16 %v6517, %v6515
    %v6612 = vpack.c.b16 %v6520, %v6518
    %v6613 = vpack.c.b16 %v6521, %v6519
    %v6614 = vpack.c.b16 %v6524, %v6522
    %v6615 = vpack.c.b16 %v6525, %v6523
    %v6616 = vpack.c.b16 %v6528, %v6526
    %v6617 = vpack.c.b16 %v6529, %v6527
    %v6618 = vpack.c.b16 %v6532, %v6530
    %v6619 = vpack.c.b16 %v6533, %v6531
    %v6620 = vpack.c.b16 %v6536, %v6534
    %v6621 = vpack.c.b16 %v6537, %v6535
    %v6622 = vpack.c.b16 %v6540, %v6538
    %v6623 = vpack.c.b16 %v6541, %v6539
    %v6624 = vpack.c.b16 %v6544, %v6542
    %v6625 = vpack.c.b16 %v6545, %v6543
    %v6626 = vpack.c.b16 %v6548, %v6546
    %v6627 = vpack.c.b16 %v6549, %v6547
    %v6628 = vpack.c.b16 %v6552, %v6550
    %v6629 = vpack.c.b16 %v6553, %v6551
    %v6630 = vpack.c.b16 %v6556, %v6554
    %v6631 = vpack.c.b16 %v6557, %v6555
    %v6632 = vpack.c.b16 %v6560, %v6558
    %v6633 = vpack.c.b16 %v6561, %v6559
    %v6634 = vpack.c.b16 %v6564, %v6562
    %v6635 = vpack.c.b16 %v6565, %v6563
    %v6636 = vpack.c.b16 %v6568, %v6566
    %v6637 = vpack.c.b16 %v6569, %v6567
    %v6638 = vpack.c.b16 %v6572, %v6570
    %v6639 = vpack.c.b16 %v6573, %v6571
    %v6640 = vpack.c.b16 %v6576, %v6574
    %v6641 = vpack.c.b16 %v6577, %v6575
    %6706 = vmatprep.subr.bf16.mxu0 %v6593
    %6707 = vmatpush1.bf16.msra.mxu0 %v6592
    %6708 = vmatprep.subr.bf16.mxu0 %v6591
    %6709 = vmatpush1.bf16.msra.mxu0 %v6590
    %6710 = vmatprep.subr.bf16.mxu0 %v6589
    %6711 = vmatpush1.bf16.msra.mxu0 %v6588
    %6712 = vmatprep.subr.bf16.mxu0 %v6587
    %6713 = vmatpush1.bf16.msra.mxu0 %v6586
    %6714 = vmatprep.subr.bf16.mxu0 %v6585
    %6715 = vmatpush1.bf16.msra.mxu0 %v6584
    %6716 = vmatprep.subr.bf16.mxu0 %v6583
    %6717 = vmatpush1.bf16.msra.mxu0 %v6582
    %6718 = vmatprep.subr.bf16.mxu0 %v6581
    %6719 = vmatpush1.bf16.msra.mxu0 %v6580
    %6720 = vmatprep.subr.bf16.mxu0 %v6579
    %6721 = vmatpush1.bf16.msra.mxu0 %v6578
    %6722 = vmatprep.subr.bf16.mxu0 %v6609
    %6723 = vmatpush2.bf16.msra.mxu0 %v6608
    %6724 = vmatprep.subr.bf16.mxu0 %v6607
    %6725 = vmatpush2.bf16.msra.mxu0 %v6606
    %6726 = vmatprep.subr.bf16.mxu0 %v6605
    %6727 = vmatpush2.bf16.msra.mxu0 %v6604
    %6728 = vmatprep.subr.bf16.mxu0 %v6603
    %6729 = vmatpush2.bf16.msra.mxu0 %v6602
    %6730 = vmatprep.subr.bf16.mxu0 %v6601
    %6731 = vmatpush2.bf16.msra.mxu0 %v6600
    %6732 = vmatprep.subr.bf16.mxu0 %v6599
    %6733 = vmatpush2.bf16.msra.mxu0 %v6598
    %6734 = vmatprep.subr.bf16.mxu0 %v6597
    %6735 = vmatpush2.bf16.msra.mxu0 %v6596
    %6736 = vmatprep.subr.bf16.mxu0 %v6595
    %6737 = vmatpush2.bf16.msra.mxu0 %v6594
    %6738 = vmatprep.mubr.bf16.mxu0 %v6319
    %6739 = vmatmul.mubr.bf16.gmra.mxu0 %v6318
    %v6740 = vpop.f32.mrf.mxu0
    %v6741 = vadd.f32 0.0, %v6740
    %v6742 = vpop.f32.mrf.mxu0
    %v6743 = vadd.f32 0.0, %v6742
    %v6744 = vpop.f32.mrf.mxu0
    %v6745 = vpop.f32.mrf.mxu0
    %6746 = vdwg.mxu0
    %6747 = vmatprep.subr.bf16.mxu0 %v6625
    %6748 = vmatpush1.bf16.msra.mxu0 %v6624
    %6749 = vmatprep.subr.bf16.mxu0 %v6623
    %6750 = vmatpush1.bf16.msra.mxu0 %v6622
    %6751 = vmatprep.subr.bf16.mxu0 %v6621
    %6752 = vmatpush1.bf16.msra.mxu0 %v6620
    %6753 = vmatprep.subr.bf16.mxu0 %v6619
    %6754 = vmatpush1.bf16.msra.mxu0 %v6618
    %6755 = vmatprep.subr.bf16.mxu0 %v6617
    %6756 = vmatpush1.bf16.msra.mxu0 %v6616
    %6757 = vmatprep.subr.bf16.mxu0 %v6615
    %6758 = vmatpush1.bf16.msra.mxu0 %v6614
    %6759 = vmatprep.subr.bf16.mxu0 %v6613
    %6760 = vmatpush1.bf16.msra.mxu0 %v6612
    %6761 = vmatprep.subr.bf16.mxu0 %v6611
    %6762 = vmatpush1.bf16.msra.mxu0 %v6610
    %6763 = vmatprep.subr.bf16.mxu0 %v6641
    %6764 = vmatpush2.bf16.msra.mxu0 %v6640
    %6765 = vmatprep.subr.bf16.mxu0 %v6639
    %6766 = vmatpush2.bf16.msra.mxu0 %v6638
    %6767 = vmatprep.subr.bf16.mxu0 %v6637
    %6768 = vmatpush2.bf16.msra.mxu0 %v6636
    %6769 = vmatprep.subr.bf16.mxu0 %v6635
    %6770 = vmatpush2.bf16.msra.mxu0 %v6634
    %6771 = vmatprep.subr.bf16.mxu0 %v6633
    %6772 = vmatpush2.bf16.msra.mxu0 %v6632
    %6773 = vmatprep.subr.bf16.mxu0 %v6631
    %6774 = vmatpush2.bf16.msra.mxu0 %v6630
    %6775 = vmatprep.subr.bf16.mxu0 %v6629
    %6776 = vmatpush2.bf16.msra.mxu0 %v6628
    %6777 = vmatprep.subr.bf16.mxu0 %v6627
    %6778 = vmatpush2.bf16.msra.mxu0 %v6626
    %6779 = vmatprep.mubr.bf16.mxu0 %v6321
    %6780 = vmatmul.mubr.bf16.gmra.mxu0 %v6320
    %v6781 = vpop.f32.mrf.mxu0
    %v6782 = vadd.f32 %v6741, %v6781
    %v6783 = vpop.f32.mrf.mxu0
    %v6784 = vadd.f32 %v6743, %v6783
    %v6785 = vpop.f32.mrf.mxu0
    %v6786 = vpop.f32.mrf.mxu0
    %6787 = vdwg.mxu0
    %v6788 = vld [vmem:[#allocation13 + $0xc] sm:$0x3]
    %v6789 = vld [vmem:[#allocation13 + $0x1b] sm:$0x3]
    %v6790 = vrot.slane %v6782, 4
    %v6791 = vadd.f32 %v6782, %v6790
    %v6792 = vrot.slane %v6791, 2
    %v6793 = vadd.f32 %v6791, %v6792
    %v6794 = vrot.slane %v6793, 1
    %v6795 = vadd.f32 %v6793, %v6794
    %v6796 = vrot.slane %v6784, 4
    %v6797 = vadd.f32 %v6784, %v6796
    %v6798 = vrot.slane %v6797, 2
    %v6799 = vadd.f32 %v6797, %v6798
    %v6800 = vrot.slane %v6799, 1
    %v6801 = vadd.f32 %v6799, %v6800
    %v6802 = vmul.f32 %v6795, %v3913
    %v6803 = vmul.f32 %v6801, %v3913
    %v6804 = vsub.f32 %v6782, %v6802
    %v6805 = vsub.f32 %v6784, %v6803
    %v6806 = vmul.f32 %v6804, %v6804
    %v6807 = vmul.f32 %v6805, %v6805
    %v6808 = vrot.slane %v6806, 4
    %v6809 = vadd.f32 %v6806, %v6808
    %v6810 = vrot.slane %v6809, 2
    %v6811 = vadd.f32 %v6809, %v6810
    %v6812 = vrot.slane %v6811, 1
    %v6813 = vadd.f32 %v6811, %v6812
    %v6814 = vrot.slane %v6807, 4
    %v6815 = vadd.f32 %v6807, %v6814
    %v6816 = vrot.slane %v6815, 2
    %v6817 = vadd.f32 %v6815, %v6816
    %v6818 = vrot.slane %v6817, 1
    %v6819 = vadd.f32 %v6817, %v6818
    %v6820 = vmul.f32 %v6813, %v3913
    %v6821 = vmul.f32 %v6819, %v3913
    %v6822 = vadd.f32 %v6820, 1e-05
    %v6823 = vadd.f32 %v6821, 1e-05
    %v6824 = vrsqrt.pop %v6822
    %v6825 = vrsqrt.pop %v6823
    %v6828 = vcombine.low %v6824, %v6825
    %v6830 = vunpack.c.l.s4 1966171168
    %v6831 = vunpack.c.0.s8 %v6830
    %v6832 = vlaneseq
    %v6833 = vshrl.u32 %v6832, 7
    %v6834 = vsub.s32 %v6831, %v6833
    %v6835 = vrot.slane %v6828, %v6834
    %v6837 = vunpack.c.l.s4 1966171168
    %v6838 = vunpack.c.0.s8 %v6837
    %v6839 = vlaneseq
    %v6840 = vshrl.u32 %v6839, 7
    %v6841 = vsub.s32 %v6838, %v6840
    %v6842 = vrot.slane %v6835, %v6841
    %v6844 = vmul.f32 %v6788, %v6842
    %v6846 = vlaneseq
    %v6847 = vshrl.u32 %v6846, 7
    %v6848 = vsub.s32 0, %v6847
    %v6849 = vrot.slane %v6844, %v6848
    %v6850 = vlaneseq
    %v6851 = vshrl.u32 %v6850, 7
    %v6852 = vsub.s32 1, %v6851
    %v6853 = vrot.slane %v6844, %v6852
    %v6856 = vmul.f32 %v6802, %v6849
    %v6857 = vmul.f32 %v6803, %v6853
    %v6860 = vcombine.low %v6856, %v6857
    %v6862 = vunpack.c.l.s4 1966171168
    %v6863 = vunpack.c.0.s8 %v6862
    %v6864 = vlaneseq
    %v6865 = vshrl.u32 %v6864, 7
    %v6866 = vsub.s32 %v6863, %v6865
    %v6867 = vrot.slane %v6860, %v6866
    %v6869 = vunpack.c.l.s4 1966171168
    %v6870 = vunpack.c.0.s8 %v6869
    %v6871 = vlaneseq
    %v6872 = vshrl.u32 %v6871, 7
    %v6873 = vsub.s32 %v6870, %v6872
    %v6874 = vrot.slane %v6867, %v6873
    %v6876 = vsub.f32 %v6789, %v6874
    %v6877 = vmul.f32 %v6782, %v6849
    %v6878 = vmul.f32 %v6784, %v6853
    %v6880 = vlaneseq
    %v6881 = vshrl.u32 %v6880, 7
    %v6882 = vsub.s32 0, %v6881
    %v6883 = vrot.slane %v6876, %v6882
    %v6884 = vlaneseq
    %v6885 = vshrl.u32 %v6884, 7
    %v6886 = vsub.s32 1, %v6885
    %v6887 = vrot.slane %v6876, %v6886
    %v6890 = vadd.f32 %v6877, %v6883
    %v6891 = vadd.f32 %v6878, %v6887
    %v6892 = vmul.f32 %v6890, 0.2
    %v6893 = vmul.f32 %v6891, 0.2
    %v6894 = vmax.f32 %v6890, %v6892
    %v6895 = vmax.f32 %v6891, %v6893
    %v6896 = vpack.c.bf16 %v6894, %v6894
    %v6897 = vpack.c.bf16 %v6895, %v6895
    %v6898 = vld [vmem:[#allocation10] sm:$0xf]
    %v6899 = vld [vmem:[#allocation10 + $0x4] sm:$0xf]
    %v6900 = vld [vmem:[#allocation10 + $0x8] sm:$0xf]
    %v6901 = vld [vmem:[#allocation10 + $0xc] sm:$0xf]
    %v6902 = vld [vmem:[#allocation10 + $0x10] sm:$0xf]
    %v6903 = vld [vmem:[#allocation10 + $0x14] sm:$0xf]
    %v6904 = vld [vmem:[#allocation10 + $0x18] sm:$0xf]
    %v6905 = vld [vmem:[#allocation10 + $0x1c] sm:$0xf]
    %v6906 = vld [vmem:[#allocation10 + $0x20] sm:$0xf]
    %v6907 = vld [vmem:[#allocation10 + $0x24] sm:$0xf]
    %v6908 = vld [vmem:[#allocation10 + $0x28] sm:$0xf]
    %v6909 = vld [vmem:[#allocation10 + $0x2c] sm:$0xf]
    %v6910 = vld [vmem:[#allocation10 + $0x30] sm:$0xf]
    %v6911 = vld [vmem:[#allocation10 + $0x34] sm:$0xf]
    %v6912 = vld [vmem:[#allocation10 + $0x38] sm:$0xf]
    %v6913 = vld [vmem:[#allocation10 + $0x3c] sm:$0xf]
    %v6914 = vld [vmem:[#allocation10 + $0x40] sm:$0xf]
    %v6915 = vld [vmem:[#allocation10 + $0x44] sm:$0xf]
    %v6916 = vld [vmem:[#allocation10 + $0x48] sm:$0xf]
    %v6917 = vld [vmem:[#allocation10 + $0x4c] sm:$0xf]
    %v6918 = vld [vmem:[#allocation10 + $0x50] sm:$0xf]
    %v6919 = vld [vmem:[#allocation10 + $0x54] sm:$0xf]
    %v6920 = vld [vmem:[#allocation10 + $0x58] sm:$0xf]
    %v6921 = vld [vmem:[#allocation10 + $0x5c] sm:$0xf]
    %v6922 = vld [vmem:[#allocation10 + $0x60] sm:$0xf]
    %v6923 = vld [vmem:[#allocation10 + $0x64] sm:$0xf]
    %v6924 = vld [vmem:[#allocation10 + $0x68] sm:$0xf]
    %v6925 = vld [vmem:[#allocation10 + $0x6c] sm:$0xf]
    %v6926 = vld [vmem:[#allocation10 + $0x70] sm:$0xf]
    %v6927 = vld [vmem:[#allocation10 + $0x74] sm:$0xf]
    %v6928 = vld [vmem:[#allocation10 + $0x78] sm:$0xf]
    %v6929 = vld [vmem:[#allocation10 + $0x7c] sm:$0xf]
    %v6962 = vunpack.c.l.b16 %v6898
    %v6963 = vunpack.c.l.b16 %v6899
    %v6964 = vunpack.c.l.b16 %v6900
    %v6965 = vunpack.c.l.b16 %v6901
    %v6966 = vunpack.c.l.b16 %v6902
    %v6967 = vunpack.c.l.b16 %v6903
    %v6968 = vunpack.c.l.b16 %v6904
    %v6969 = vunpack.c.l.b16 %v6905
    %v6970 = vunpack.c.l.b16 %v6906
    %v6971 = vunpack.c.l.b16 %v6907
    %v6972 = vunpack.c.l.b16 %v6908
    %v6973 = vunpack.c.l.b16 %v6909
    %v6974 = vunpack.c.l.b16 %v6910
    %v6975 = vunpack.c.l.b16 %v6911
    %v6976 = vunpack.c.l.b16 %v6912
    %v6977 = vunpack.c.l.b16 %v6913
    %v6978 = vunpack.c.l.b16 %v6914
    %v6979 = vunpack.c.l.b16 %v6915
    %v6980 = vunpack.c.l.b16 %v6916
    %v6981 = vunpack.c.l.b16 %v6917
    %v6982 = vunpack.c.l.b16 %v6918
    %v6983 = vunpack.c.l.b16 %v6919
    %v6984 = vunpack.c.l.b16 %v6920
    %v6985 = vunpack.c.l.b16 %v6921
    %v6986 = vunpack.c.l.b16 %v6922
    %v6987 = vunpack.c.l.b16 %v6923
    %v6988 = vunpack.c.l.b16 %v6924
    %v6989 = vunpack.c.l.b16 %v6925
    %v6990 = vunpack.c.l.b16 %v6926
    %v6991 = vunpack.c.l.b16 %v6927
    %v6992 = vunpack.c.l.b16 %v6928
    %v6993 = vunpack.c.l.b16 %v6929
    %v6994 = vpack.c.b16 %v6963, %v6962
    %v6995 = vpack.c.b16 %v6965, %v6964
    %v6996 = vpack.c.b16 %v6967, %v6966
    %v6997 = vpack.c.b16 %v6969, %v6968
    %v6998 = vpack.c.b16 %v6971, %v6970
    %v6999 = vpack.c.b16 %v6973, %v6972
    %v7000 = vpack.c.b16 %v6975, %v6974
    %v7001 = vpack.c.b16 %v6977, %v6976
    %v7002 = vpack.c.b16 %v6979, %v6978
    %v7003 = vpack.c.b16 %v6981, %v6980
    %v7004 = vpack.c.b16 %v6983, %v6982
    %v7005 = vpack.c.b16 %v6985, %v6984
    %v7006 = vpack.c.b16 %v6987, %v6986
    %v7007 = vpack.c.b16 %v6989, %v6988
    %v7008 = vpack.c.b16 %v6991, %v6990
    %v7009 = vpack.c.b16 %v6993, %v6992
    %7026 = vmatprep.subr.bf16.mxu0 0
    %7027 = vmatpush1.bf16.msra.mxu0 %v7001
    %7028 = vmatprep.subr.bf16.mxu0 0
    %7029 = vmatpush1.bf16.msra.mxu0 %v7000
    %7030 = vmatprep.subr.bf16.mxu0 0
    %7031 = vmatpush1.bf16.msra.mxu0 %v6999
    %7032 = vmatprep.subr.bf16.mxu0 0
    %7033 = vmatpush1.bf16.msra.mxu0 %v6998
    %7034 = vmatprep.subr.bf16.mxu0 0
    %7035 = vmatpush1.bf16.msra.mxu0 %v6997
    %7036 = vmatprep.subr.bf16.mxu0 0
    %7037 = vmatpush1.bf16.msra.mxu0 %v6996
    %7038 = vmatprep.subr.bf16.mxu0 0
    %7039 = vmatpush1.bf16.msra.mxu0 %v6995
    %7040 = vmatprep.subr.bf16.mxu0 0
    %7041 = vmatpush1.bf16.msra.mxu0 %v6994
    %7042 = vmatprep.subr.bf16.mxu0 0
    %7043 = vmatpush2.bf16.msra.mxu0 %v7009
    %7044 = vmatprep.subr.bf16.mxu0 0
    %7045 = vmatpush2.bf16.msra.mxu0 %v7008
    %7046 = vmatprep.subr.bf16.mxu0 0
    %7047 = vmatpush2.bf16.msra.mxu0 %v7007
    %7048 = vmatprep.subr.bf16.mxu0 0
    %7049 = vmatpush2.bf16.msra.mxu0 %v7006
    %7050 = vmatprep.subr.bf16.mxu0 0
    %7051 = vmatpush2.bf16.msra.mxu0 %v7005
    %7052 = vmatprep.subr.bf16.mxu0 0
    %7053 = vmatpush2.bf16.msra.mxu0 %v7004
    %7054 = vmatprep.subr.bf16.mxu0 0
    %7055 = vmatpush2.bf16.msra.mxu0 %v7003
    %7056 = vmatprep.subr.bf16.mxu0 0
    %7057 = vmatpush2.bf16.msra.mxu0 %v7002
    %7058 = vmatprep.mubr.bf16.mxu0 %v6897
    %7059 = vmatmul.mubr.bf16.gmra.mxu0 %v6896
    %v7060 = vpop.f32.mrf.mxu0
    %v7061 = vadd.f32 0.0, %v7060
    %v7062 = vpop.f32.mrf.mxu0
    %v7063 = vpop.f32.mrf.mxu0
    %v7064 = vpop.f32.mrf.mxu0
    %7065 = vdwg.mxu0
    %v7066 = vld [vmem:[#allocation13 + $0xe] sm:$0x1]
    %v7067 = vld [vmem:[#allocation13 + $0x1d] sm:$0x1]
    %v7068 = vrot.slane %v7061, 4
    %v7069 = vadd.f32 %v7061, %v7068
    %v7070 = vrot.slane %v7069, 2
    %v7071 = vadd.f32 %v7069, %v7070
    %v7072 = vrot.slane %v7071, 1
    %v7073 = vadd.f32 %v7071, %v7072
    %v7074 = vmul.f32 %v7073, %v3913
    %v7075 = vsub.f32 %v7061, %v7074
    %v7076 = vmul.f32 %v7075, %v7075
    %v7077 = vrot.slane %v7076, 4
    %v7078 = vadd.f32 %v7076, %v7077
    %v7079 = vrot.slane %v7078, 2
    %v7080 = vadd.f32 %v7078, %v7079
    %v7081 = vrot.slane %v7080, 1
    %v7082 = vadd.f32 %v7080, %v7081
    %v7083 = vmul.f32 %v7082, %v3913
    %v7084 = vadd.f32 %v7083, 1e-05
    %v7085 = vrsqrt.pop %v7084
    %v7086 = vmul.f32 %v7066, %v7085
    %v7087 = vmul.f32 %v7074, %v7086
    %v7088 = vsub.f32 %v7067, %v7087
    %v7090 = vlaneseq
    %v7091 = vshrl.u32 %v7090, 7
    %v7092 = vsub.s32 0, %v7091
    %v7093 = vrot.slane %v7086, %v7092
    %v7095 = vmul.f32 %v7061, %v7093
    %v7097 = vlaneseq
    %v7098 = vshrl.u32 %v7097, 7
    %v7099 = vsub.s32 0, %v7098
    %v7100 = vrot.slane %v7088, %v7099
    %v7102 = vadd.f32 %v7095, %v7100
    %v7103 = vmul.f32 %v7102, 0.2
    %v7104 = vmax.f32 %v7102, %v7103
    %v7105 = vld [vmem:[#allocation13 + $0x1e] sm:$0x1]
    %v7106 = vpack.c.bf16 %v7104, %v7104
    %v7107 = vld [vmem:[#allocation11] sm:$0xf]
    %v7108 = vld [vmem:[#allocation11 + $0x4] sm:$0xf]
    %v7109 = vld [vmem:[#allocation11 + $0x8] sm:$0xf]
    %v7110 = vld [vmem:[#allocation11 + $0xc] sm:$0xf]
    %v7111 = vld [vmem:[#allocation11 + $0x10] sm:$0xf]
    %v7112 = vld [vmem:[#allocation11 + $0x14] sm:$0xf]
    %v7113 = vld [vmem:[#allocation11 + $0x18] sm:$0xf]
    %v7114 = vld [vmem:[#allocation11 + $0x1c] sm:$0xf]
    %v7115 = vld [vmem:[#allocation11 + $0x20] sm:$0xf]
    %v7116 = vld [vmem:[#allocation11 + $0x24] sm:$0xf]
    %v7117 = vld [vmem:[#allocation11 + $0x28] sm:$0xf]
    %v7118 = vld [vmem:[#allocation11 + $0x2c] sm:$0xf]
    %v7119 = vld [vmem:[#allocation11 + $0x30] sm:$0xf]
    %v7120 = vld [vmem:[#allocation11 + $0x34] sm:$0xf]
    %v7121 = vld [vmem:[#allocation11 + $0x38] sm:$0xf]
    %v7122 = vld [vmem:[#allocation11 + $0x3c] sm:$0xf]
    %v7124 = vlaneseq
    %v7125 = vshrl.u32 %v7124, 7
    %v7126 = vsub.s32 0, %v7125
    %v7127 = vrot.slane %v7105, %v7126
    %v7145 = vunpack.c.l.b16 %v7107
    %v7146 = vunpack.c.l.b16 %v7108
    %v7147 = vunpack.c.l.b16 %v7109
    %v7148 = vunpack.c.l.b16 %v7110
    %v7149 = vunpack.c.l.b16 %v7111
    %v7150 = vunpack.c.l.b16 %v7112
    %v7151 = vunpack.c.l.b16 %v7113
    %v7152 = vunpack.c.l.b16 %v7114
    %v7153 = vunpack.c.l.b16 %v7115
    %v7154 = vunpack.c.l.b16 %v7116
    %v7155 = vunpack.c.l.b16 %v7117
    %v7156 = vunpack.c.l.b16 %v7118
    %v7157 = vunpack.c.l.b16 %v7119
    %v7158 = vunpack.c.l.b16 %v7120
    %v7159 = vunpack.c.l.b16 %v7121
    %v7160 = vunpack.c.l.b16 %v7122
    %v7161 = vpack.c.b16 %v7146, %v7145
    %v7162 = vpack.c.b16 %v7148, %v7147
    %v7163 = vpack.c.b16 %v7150, %v7149
    %v7164 = vpack.c.b16 %v7152, %v7151
    %v7165 = vpack.c.b16 %v7154, %v7153
    %v7166 = vpack.c.b16 %v7156, %v7155
    %v7167 = vpack.c.b16 %v7158, %v7157
    %v7168 = vpack.c.b16 %v7160, %v7159
    %7177 = vmatprep.subr.bf16.mxu0 0
    %7178 = vmatpush1.bf16.msra.mxu0 %v7168
    %7179 = vmatprep.subr.bf16.mxu0 0
    %7180 = vmatpush1.bf16.msra.mxu0 %v7167
    %7181 = vmatprep.subr.bf16.mxu0 0
    %7182 = vmatpush1.bf16.msra.mxu0 %v7166
    %7183 = vmatprep.subr.bf16.mxu0 0
    %7184 = vmatpush1.bf16.msra.mxu0 %v7165
    %7185 = vmatprep.subr.bf16.mxu0 0
    %7186 = vmatpush1.bf16.msra.mxu0 %v7164
    %7187 = vmatprep.subr.bf16.mxu0 0
    %7188 = vmatpush1.bf16.msra.mxu0 %v7163
    %7189 = vmatprep.subr.bf16.mxu0 0
    %7190 = vmatpush1.bf16.msra.mxu0 %v7162
    %7191 = vmatprep.subr.bf16.mxu0 0
    %7192 = vmatpush1.bf16.msra.mxu0 %v7161
    %7193 = vmatprep.subr.bf16.mxu0 0
    %7194 = vmatpush2.bf16.msra.mxu0 0
    %7195 = vmatprep.subr.bf16.mxu0 0
    %7196 = vmatpush2.bf16.msra.mxu0 0
    %7197 = vmatprep.subr.bf16.mxu0 0
    %7198 = vmatpush2.bf16.msra.mxu0 0
    %7199 = vmatprep.subr.bf16.mxu0 0
    %7200 = vmatpush2.bf16.msra.mxu0 0
    %7201 = vmatprep.subr.bf16.mxu0 0
    %7202 = vmatpush2.bf16.msra.mxu0 0
    %7203 = vmatprep.subr.bf16.mxu0 0
    %7204 = vmatpush2.bf16.msra.mxu0 0
    %7205 = vmatprep.subr.bf16.mxu0 0
    %7206 = vmatpush2.bf16.msra.mxu0 0
    %7207 = vmatprep.subr.bf16.mxu0 0
    %7208 = vmatpush2.bf16.msra.mxu0 0
    %7209 = vmatprep.mubr.bf16.mxu0 0
    %7210 = vmatmul.mubr.bf16.gmra.mxu0 %v7106
    %v7211 = vpop.f32.mrf.mxu0
    %v7212 = vadd.f32 %v7127, %v7211
    %v7213 = vpop.f32.mrf.mxu0
    %v7214 = vpop.f32.mrf.mxu0
    %v7215 = vpop.f32.mrf.mxu0
    %7216 = vdwg.mxu0
    %7217 = vst [vmem:[#allocation14] sm:$0xff] %v7212
    // Predicated region
    $region58: #{tpu_custom_call.1} parent=1 // pred_check
      _
    $region59: #{tpu_custom_call.1} parent=1 // pred_check_branch
      %7219 = sbr.rel (0) target = $region61
    $region60: #{tpu_custom_call.1} parent=1 // pred_region
      %s7221 = ssub.s32 128, 128
      %7222 = vsyncadd [#allocation4], %s7221
      %s7224 = sshll.u32 [#allocation14], 4
      %s7225 = int_to_ptr.vmem [resolvable:$true] %s7224
      %7227 = dma.vmem_to_hbm [thread:$0]  %s7225, 128, %s7, [#allocation4]
    $region61: #{tpu_custom_call.1} parent=1 // pred_fallthru
      _
    // Predicated region
    $region62: #{tpu_custom_call.1} parent=1 // pred_check
      _
    $region63: #{tpu_custom_call.1} parent=1 // pred_check_branch
      %7229 = sbr.rel (0) target = $region65
    $region64: #{tpu_custom_call.1} parent=1 // pred_region
      %7230 = dma.done [#allocation4], 128
    $region65: #{tpu_custom_call.1} parent=1 // pred_fallthru
      _
    %7231 = vsyncpa [#allocation3], 1
    %7232 = vsyncpa [#allocation6], 1
    %7233 = vsyncpa [#allocation9], 1
    %7234 = vsyncpa [#allocation12], 1
    %7235 = vsyncpa [#allocation4], 1

</llo_original>
